<compile_context>
chip_gen: v7x
topology: tpu7x:2x2x1
jax: 0.10.0
libtpu: 0.0.40
codegen_flags: <defaults>
</compile_context>

<pallas_src>
import functools

import jax
import jax.numpy as jnp
from jax.experimental import pallas as pl
from jax.experimental.pallas import tpu as pltpu

C_FIXED = 64   # module hard-codes reshape to [-1, 64, 128, 128]
L_FIXED = 128

_MiB = 1024 * 1024
_ROW_IN_BYTES = L_FIXED * 4                 # 512 B per input row
_RESIDENT_INPUT_MAX_BYTES = 8 * _MiB        # keep whole input in VMEM up to B~256


def _chip_config():
    """Per-generation row-block cap and scoped-VMEM limit.

    v7x : 64 MiB VMEM/TC -> cap double-buffered output at ~16 MiB (R <= 128),
          keep the grid even so 'parallel' shards across both TensorCores.
    v6e : 128 MiB physical -> raise scoped limit to 64 MiB, allow R up to 256.
    v5e : lower HBM BW makes per-step overhead relatively small; R = 64 (4 MiB
          block, 8 MiB double-buffered) is already near roofline.
    """
    try:
        kind = jax.devices()[0].device_kind.lower()
    except Exception:
        kind = ""
    if "v7" in kind:
        return dict(r_cap=128, vmem_limit=40 * _MiB, prefer_even_grid=True)
    if "v6" in kind:
        return dict(r_cap=256, vmem_limit=64 * _MiB, prefer_even_grid=False)
    if "v5 lite" in kind or "v5e" in kind or "v5lite" in kind:
        return dict(r_cap=64, vmem_limit=32 * _MiB, prefer_even_grid=False)
    # Unknown generation: conservative defaults that fit every TPU.
    return dict(r_cap=64, vmem_limit=32 * _MiB, prefer_even_grid=False)


def _pick_rows_per_block(total_rows: int, r_cap: int, prefer_even_grid: bool) -> int:
    """Largest divisor R of total_rows with R <= r_cap (maximize output block
    to amortize the ~0.35 us per-grid-step overhead on an HBM-writeback-bound
    kernel).  On v7x prefer an even grid length (with >= 2 MiB blocks) so the
    'parallel' axis shards evenly across the 2 TensorCores."""
    cap = min(total_rows, r_cap)
    divisors = [r for r in range(1, cap + 1) if total_rows % r == 0]
    best = max(divisors)
    if prefer_even_grid:
        even = [r for r in divisors if r >= 32 and (total_rows // r) % 2 == 0]
        if even:
            return max(even)
    return best


def _kernel_streamed(x_ref, o_ref):
    # x_ref: (R, L) block of rows; o_ref: (R, L, L).
    xh = 0.5 * x_ref[...]
    o_ref[...] = xh[:, :, None] + xh[:, None, :]


def _kernel_resident(x_ref, o_ref, *, rows_per_block):
    # x_ref: full (total_rows, L) input, resident in VMEM across all steps.
    # o_ref: (R, L, L) output block for this grid step.
    n = pl.program_id(0)
    start = pl.multiple_of(n * rows_per_block, rows_per_block)
    xh = 0.5 * x_ref[pl.ds(start, rows_per_block), :]
    o_ref[...] = xh[:, :, None] + xh[:, None, :]


def one_to_two(oned: jax.Array) -> jax.Array:
    """oned: [B, 64, 128] float32 -> [B, 64, 128, 128] float32."""
    B, C, L = oned.shape
    assert C == C_FIXED and L == L_FIXED, "module semantics fix C=64, L=128"

    total_rows = B * C
    cfg = _chip_config()
    R = _pick_rows_per_block(total_rows, cfg["r_cap"], cfg["prefer_even_grid"])
    x_flat = oned.reshape(total_rows, L)

    in_bytes_total = total_rows * _ROW_IN_BYTES
    resident_input = in_bytes_total <= _RESIDENT_INPUT_MAX_BYTES

    if resident_input:
        kernel = functools.partial(_kernel_resident, rows_per_block=R)
        in_spec = pl.BlockSpec((total_rows, L), lambda n: (0, 0))
    else:
        kernel = _kernel_streamed
        in_spec = pl.BlockSpec((R, L), lambda n: (n, 0))

    cost = pl.CostEstimate(
        flops=total_rows * L * L,           # one add per output element
        transcendentals=0,
        bytes_accessed=total_rows * L * L * 4 + in_bytes_total,
    )

    out_flat = pl.pallas_call(
        kernel,
        out_shape=jax.ShapeDtypeStruct((total_rows, L, L), oned.dtype),
        grid_spec=pltpu.PrefetchScalarGridSpec(
            num_scalar_prefetch=0,
            grid=(total_rows // R,),
            in_specs=[in_spec],
            out_specs=pl.BlockSpec((R, L, L), lambda n: (n, 0, 0)),
        ),
        compiler_params=pltpu.CompilerParams(
            dimension_semantics=("parallel",),
            vmem_limit_bytes=cfg["vmem_limit"],
        ),
        cost_estimate=cost,
    )(x_flat)

    return out_flat.reshape(B, C, L, L)


if __name__ == "__main__":
    key = jax.random.PRNGKey(0)
    B = 2
    # Input consistent with the module's reshape: [B, 64, 128]
    oned = jax.random.normal(key, (B, C_FIXED, L_FIXED), dtype=jnp.float32)

    out = one_to_two(oned)
    out = jax.block_until_ready(out)

    # Reference check (pure JAX, same math as the PyTorch module).
    ref = 0.5 * (oned[:, :, :, None] + oned[:, :, None, :])
    assert out.shape == (B, C_FIXED, L_FIXED, L_FIXED)
    assert jnp.allclose(out, ref, atol=1e-6), "mismatch vs reference"

    print("KERNEL_OK")
</pallas_src>

<mosaic_0001>
module attributes {stable_mosaic.version = 11 : i64} {
  func.func @_kernel_resident(%arg0: i32, %arg1: memref<128x128xf32, #tpu.memory_space<vmem>>, %arg2: memref<64x128x128xf32, #tpu.memory_space<vmem>>) attributes {dimension_semantics = [#tpu.dimension_semantics<parallel>], iteration_bounds = array<i64: 2>, scalar_prefetch = 0 : i64, scratch_operands = 0 : i64, tpu.core_type = #tpu.core_type<tc>, window_params = [{pipeline_mode = #tpu.pipeline_mode<synchronous>, transform_indices = @transform_0, window_bounds = array<i64: 128, 128>}, {transform_indices = @transform_1, window_bounds = array<i64: 64, 128, 128>}]} {
    %c64_i32 = arith.constant 64 : i32
    %0 = arith.muli %arg0, %c64_i32 : i32
    %1 = tpu.assume_multiple %0, 64 : i32
    %2 = arith.index_cast %1 : i32 to index
    %c0 = arith.constant 0 : index
    %3 = vector.load %arg1[%2, %c0] : memref<128x128xf32, #tpu.memory_space<vmem>>, vector<64x128xf32>
    %cst = arith.constant 5.000000e-01 : f32
    %4 = vector.broadcast %cst : f32 to vector<64x128xf32>
    %5 = arith.mulf %4, %3 : vector<64x128xf32>
    %6 = vector.shape_cast %5 : vector<64x128xf32> to vector<64x128x1xf32>
    %7 = vector.shape_cast %5 : vector<64x128xf32> to vector<64x1x128xf32>
    %8 = vector.broadcast %6 : vector<64x128x1xf32> to vector<64x128x128xf32>
    %9 = vector.broadcast %7 : vector<64x1x128xf32> to vector<64x128x128xf32>
    %10 = arith.addf %8, %9 : vector<64x128x128xf32>
    %c0_0 = arith.constant 0 : index
    %c0_1 = arith.constant 0 : index
    %c0_2 = arith.constant 0 : index
    %11 = vector.load %arg2[%c0_0, %c0_1, %c0_2] : memref<64x128x128xf32, #tpu.memory_space<vmem>>, vector<64x128x128xf32>
    tpu.vector_store %arg2[%c0_0, %c0_1, %c0_2], %10 {strides = array<i32>} : memref<64x128x128xf32, #tpu.memory_space<vmem>>, vector<64x128x128xf32>,
    return
  }
  func.func @transform_0(%arg0: i32) -> (i32, i32) {
    %c0_i32 = arith.constant 0 : i32
    %c0_i32_0 = arith.constant 0 : i32
    %c0_i32_1 = arith.constant 0 : i32
    return %c0_i32, %c0_i32_0 : i32, i32
  }
  func.func @transform_1(%arg0: i32) -> (i32, i32, i32) {
    %c0_i32 = arith.constant 0 : i32
    %c0_i32_0 = arith.constant 0 : i32
    %c0_i32_1 = arith.constant 0 : i32
    return %arg0, %c0_i32, %c0_i32_0 : i32, i32, i32
  }
}

</mosaic_0001>

<llo_original>
// kernel: tpu_custom_call.1
$region0: #{tpu_custom_call.1}
  #allocation0 [shape = 'u32[]', space=smem, size = 0x4, offset = 0x4, fixed_abs, tag = 'smem constant byte address 0x4 - core index']
  #allocation1 [shape = 'u32[144,128]{1,0:T(1,128)}', space=vmem, size = 0x12000, scoped, tag = 'internal scratch']
  %s0 = inlined_call_operand.hbm [shape: f32[128,128], index: 0, kind: input, shape index: {}]
  %s1 = inlined_call_operand.hbm [shape: f32[128,128,128], index: 1, kind: output, shape index: {}]
  %s2 = sld [smem:[#allocation0]]
  $region41: #{tpu_custom_call.1} parent=0
    _
  %s4 = ssub.s32 1, %s2
  %s5 = scalar_select 0, %s4, %s2
  $region1: #{tpu_custom_call.1} parent=0
    #allocation2 [shape = 'u8[65536]{0}', space=vmem, size = 0x10000, scoped, tag = 'input window, operand 0, single buffered']
    #allocation3 [shape = 's32[2]{0}', space=sflag, size = 0x8, scoped, tag = 'scoped memory for tpu_custom_call.1']
    #allocation4 [shape = 's32[2]{0}', space=sflag, size = 0x8, scoped, tag = 'scoped memory for tpu_custom_call.1']
    #allocation5 [shape = 'u8[8388608]{0}', space=vmem, size = 0x800000, scoped, tag = 'output window, operand 0']
    %6 = vsyncpa [#allocation3], 0
    %7 = vsyncpa [#allocation4], 0
    %s8 = scalar_lea.sflag [#allocation4], 1
    %9 = vsyncpa %s8, 0
    loop: start=0, step=1, limit=4
    $region2: #{tpu_custom_call.1} parent=1 // loop_pre_header
      _
    $region3: #{tpu_custom_call.1} parent=1 // loop_header
      %s11 = sphi 0, %s15
      %p12 = scmp.ge.s32.totalorder %s11, 4
      %s19 = sphi 0, %s19
      %s21 = sphi 0, %s19
      %s22 = sphi 0, %s21
      %s36 = sphi 0, %s22
      %s42 = sphi 0, %s44
      %s45 = sphi 0, %s42
      %s46 = sphi 0, %s45
      %s62 = sphi 0, %s46
    $region4: #{tpu_custom_call.1} parent=1 // loop_header_branch
      %14 = sbr.rel (%p12) target = $region8
    $region5: #{tpu_custom_call.1} parent=1 // loop_body
      %s16 = ssub.s32 %s11, 1
      %s17 = ssub.s32 %s11, 2
      %s18 = sadd.s32 %s11, 1
      %s20 = sadd.s32 %s19, 1
      %p23 = scmp.eq.s32.totalorder %s11, 1
      %p24 = scmp.ne.s32.totalorder %s19, %s21
      %p25 = scmp.eq.s32.totalorder %s11, 0
      %p26 = por %p24, %p25
      %p27 = scmp.ne.s32.totalorder %s19, %s21
      %p28 = scmp.eq.s32.totalorder %s16, 1
      %p29 = por %p27, %p28
      %p30 = scmp.ne.s32.totalorder %s21, %s22
      %p31 = scmp.eq.s32.totalorder %s16, 0
      %p32 = por %p30, %p31
      %p33 = scmp.ne.s32.totalorder %s21, %s22
      %p34 = scmp.eq.s32.totalorder %s17, 1
      %p35 = por %p33, %p34
      %p37 = scmp.ne.s32.totalorder %s22, %s36
      %p38 = scmp.eq.s32.totalorder %s17, 0
      %p39 = por %p37, %p38
      %s40 = ssub.s32 %s11, %s18
      %p41 = scmp.eq.s32.totalorder %s40, 0
      %s43 = sadd.s32 %s42, 1
      %s44 = scalar_select %p41, %s42, %s43
      %p47 = pneg %p41
      %p48 = scmp.eq.s32.totalorder %s11, 1
      %p49 = por %p47, %p48
      %p50 = scmp.ne.s32.totalorder %s42, %s45
      %p51 = scmp.eq.s32.totalorder %s11, 0
      %p52 = por %p50, %p51
      %p53 = scmp.ne.s32.totalorder %s42, %s45
      %p54 = scmp.eq.s32.totalorder %s16, 1
      %p55 = por %p53, %p54
      %p56 = scmp.ne.s32.totalorder %s45, %s46
      %p57 = scmp.eq.s32.totalorder %s16, 0
      %p58 = por %p56, %p57
      %p59 = scmp.ne.s32.totalorder %s45, %s46
      %p60 = scmp.eq.s32.totalorder %s17, 1
      %p61 = por %p59, %p60
      %p63 = scmp.ne.s32.totalorder %s46, %s62
      %p64 = scmp.eq.s32.totalorder %s17, 0
      %p65 = por %p63, %p64
      %p66 = scmp.le.s32.totalorder 1, %s11
      %p67 = scmp.lt.s32.totalorder %s11, 3
      %p68 = pnand %p66, %p67
      %p69 = pneg %p68
      // Predicated region
      $region9: #{tpu_custom_call.1} parent=5 // pred_check
        _
      $region10: #{tpu_custom_call.1} parent=5 // pred_check_branch
        %71 = sbr.rel (%p68) target = $region12
      $region11: #{tpu_custom_call.1} parent=5 // pred_region
        %s72 = ssub.s32 %s11, 1
        // Predicated region
        $region13: #{tpu_custom_call.1} parent=11 // pred_check
          %p73 = pneg %p32
        $region14: #{tpu_custom_call.1} parent=11 // pred_check_branch
          %75 = sbr.rel (%p73) target = $region16
        $region15: #{tpu_custom_call.1} parent=11 // pred_region
          %s77 = ssub.s32 2048, 2048
          %78 = vsyncadd [#allocation3], %s77
          %s79 = sshll.u32 [#allocation2], 4
          %s80 = int_to_ptr.vmem [resolvable:$true] %s79
          %85 = dma.hbm_to_vmem [thread:$0]  %s0, 2048, %s80, [#allocation3], 128, 128, 8
        $region16: #{tpu_custom_call.1} parent=11 // pred_fallthru
          _
      $region12: #{tpu_custom_call.1} parent=5 // pred_fallthru
        _
      %p86 = scmp.lt.s32.totalorder %s11, 2
      // Predicated region
      $region17: #{tpu_custom_call.1} parent=5 // pred_check
        %p87 = pneg %p86
      $region18: #{tpu_custom_call.1} parent=5 // pred_check_branch
        %89 = sbr.rel (%p87) target = $region20
      $region19: #{tpu_custom_call.1} parent=5 // pred_region
        _
      $region20: #{tpu_custom_call.1} parent=5 // pred_fallthru
        _
      %p90 = scmp.le.s32.totalorder 1, %s11
      %p91 = scmp.lt.s32.totalorder %s11, 3
      %p92 = pnand %p90, %p91
      %p93 = pneg %p92
      // Predicated region
      $region21: #{tpu_custom_call.1} parent=5 // pred_check
        _
      $region22: #{tpu_custom_call.1} parent=5 // pred_check_branch
        %95 = sbr.rel (%p92) target = $region24
      $region23: #{tpu_custom_call.1} parent=5 // pred_region
        %s96 = ssub.s32 %s11, 1
        // Predicated region
        $region25: #{tpu_custom_call.1} parent=23 // pred_check
          %p97 = pneg %p32
        $region26: #{tpu_custom_call.1} parent=23 // pred_check_branch
          %99 = sbr.rel (%p97) target = $region28
        $region27: #{tpu_custom_call.1} parent=23 // pred_region
          %100 = dma.done [#allocation3], 2048
        $region28: #{tpu_custom_call.1} parent=23 // pred_fallthru
          _
        %p101 = pneg %p32
        %p102 = pneg %p29
        %p103 = pneg %p58
        %p104 = pneg %p55
        %s105 = sand.u32 %s45, 1
        %s106 = scalar_lea.sflag [#allocation4], %s105
        %s107 = sand.u32 %s45, 1
        %s108 = smul.addr %s107, 8192
        %s109 = scalar_lea.vmem [#allocation5], %s108
        %s110 = smul.u32 64, %s16
        %s111 = smul.u32 %s16, 64
        %s112 = scalar_lea.vmem [#allocation2], %s111
        %v113 = vld [vmem:[%s112] sm:$0xff]
        %v114 = vld [vmem:[%s112 + $0x8] sm:$0xff]
        %v115 = vld [vmem:[%s112 + $0x10] sm:$0xff]
        %v116 = vld [vmem:[%s112 + $0x18] sm:$0xff]
        %v117 = vld [vmem:[%s112 + $0x20] sm:$0xff]
        %v118 = vld [vmem:[%s112 + $0x28] sm:$0xff]
        %v119 = vld [vmem:[%s112 + $0x30] sm:$0xff]
        %v120 = vld [vmem:[%s112 + $0x38] sm:$0xff]
        %v121 = vmul.f32 %v113, 0.5
        %v122 = vmul.f32 %v114, 0.5
        %v123 = vmul.f32 %v115, 0.5
        %v124 = vmul.f32 %v116, 0.5
        %v125 = vmul.f32 %v117, 0.5
        %v126 = vmul.f32 %v118, 0.5
        %v127 = vmul.f32 %v119, 0.5
        %v128 = vmul.f32 %v120, 0.5
        %v129 = vlaneseq
        %v130 = vshrl.u32 %v129, 7
        %v131 = vsub.s32 0, %v130
        %v132 = vrot.slane %v121, %v131
        %134 = vbcast.lane.b32.xlu0 %v132, 256
        %v135 = vpop.permute.xlu0 %134
        %s137 = sor.u32 256, 8
        %138 = vbcast.lane.b32.xlu0 %v132, %s137
        %v139 = vpop.permute.xlu0 %138
        %s141 = sor.u32 256, 16
        %142 = vbcast.lane.b32.xlu0 %v132, %s141
        %v143 = vpop.permute.xlu0 %142
        %s145 = sor.u32 256, 24
        %146 = vbcast.lane.b32.xlu0 %v132, %s145
        %v147 = vpop.permute.xlu0 %146
        %s149 = sor.u32 256, 32
        %150 = vbcast.lane.b32.xlu0 %v132, %s149
        %v151 = vpop.permute.xlu0 %150
        %s153 = sor.u32 256, 40
        %154 = vbcast.lane.b32.xlu0 %v132, %s153
        %v155 = vpop.permute.xlu0 %154
        %s157 = sor.u32 256, 48
        %158 = vbcast.lane.b32.xlu0 %v132, %s157
        %v159 = vpop.permute.xlu0 %158
        %s161 = sor.u32 256, 56
        %162 = vbcast.lane.b32.xlu0 %v132, %s161
        %v163 = vpop.permute.xlu0 %162
        %s165 = sor.u32 256, 64
        %166 = vbcast.lane.b32.xlu0 %v132, %s165
        %v167 = vpop.permute.xlu0 %166
        %s169 = sor.u32 256, 72
        %170 = vbcast.lane.b32.xlu0 %v132, %s169
        %v171 = vpop.permute.xlu0 %170
        %s173 = sor.u32 256, 80
        %174 = vbcast.lane.b32.xlu0 %v132, %s173
        %v175 = vpop.permute.xlu0 %174
        %s177 = sor.u32 256, 88
        %178 = vbcast.lane.b32.xlu0 %v132, %s177
        %v179 = vpop.permute.xlu0 %178
        %s181 = sor.u32 256, 96
        %182 = vbcast.lane.b32.xlu0 %v132, %s181
        %v183 = vpop.permute.xlu0 %182
        %s185 = sor.u32 256, 104
        %186 = vbcast.lane.b32.xlu0 %v132, %s185
        %v187 = vpop.permute.xlu0 %186
        %s189 = sor.u32 256, 112
        %190 = vbcast.lane.b32.xlu0 %v132, %s189
        %v191 = vpop.permute.xlu0 %190
        %s193 = sor.u32 256, 120
        %194 = vbcast.lane.b32.xlu0 %v132, %s193
        %v195 = vpop.permute.xlu0 %194
        %v196 = vlaneseq
        %v197 = vshrl.u32 %v196, 7
        %v198 = vsub.s32 1, %v197
        %v199 = vrot.slane %v121, %v198
        %201 = vbcast.lane.b32.xlu0 %v199, 256
        %v202 = vpop.permute.xlu0 %201
        %s204 = sor.u32 256, 8
        %205 = vbcast.lane.b32.xlu0 %v199, %s204
        %v206 = vpop.permute.xlu0 %205
        %s208 = sor.u32 256, 16
        %209 = vbcast.lane.b32.xlu0 %v199, %s208
        %v210 = vpop.permute.xlu0 %209
        %s212 = sor.u32 256, 24
        %213 = vbcast.lane.b32.xlu0 %v199, %s212
        %v214 = vpop.permute.xlu0 %213
        %s216 = sor.u32 256, 32
        %217 = vbcast.lane.b32.xlu0 %v199, %s216
        %v218 = vpop.permute.xlu0 %217
        %s220 = sor.u32 256, 40
        %221 = vbcast.lane.b32.xlu0 %v199, %s220
        %v222 = vpop.permute.xlu0 %221
        %s224 = sor.u32 256, 48
        %225 = vbcast.lane.b32.xlu0 %v199, %s224
        %v226 = vpop.permute.xlu0 %225
        %s228 = sor.u32 256, 56
        %229 = vbcast.lane.b32.xlu0 %v199, %s228
        %v230 = vpop.permute.xlu0 %229
        %s232 = sor.u32 256, 64
        %233 = vbcast.lane.b32.xlu0 %v199, %s232
        %v234 = vpop.permute.xlu0 %233
        %s236 = sor.u32 256, 72
        %237 = vbcast.lane.b32.xlu0 %v199, %s236
        %v238 = vpop.permute.xlu0 %237
        %s240 = sor.u32 256, 80
        %241 = vbcast.lane.b32.xlu0 %v199, %s240
        %v242 = vpop.permute.xlu0 %241
        %s244 = sor.u32 256, 88
        %245 = vbcast.lane.b32.xlu0 %v199, %s244
        %v246 = vpop.permute.xlu0 %245
        %s248 = sor.u32 256, 96
        %249 = vbcast.lane.b32.xlu0 %v199, %s248
        %v250 = vpop.permute.xlu0 %249
        %s252 = sor.u32 256, 104
        %253 = vbcast.lane.b32.xlu0 %v199, %s252
        %v254 = vpop.permute.xlu0 %253
        %s256 = sor.u32 256, 112
        %257 = vbcast.lane.b32.xlu0 %v199, %s256
        %v258 = vpop.permute.xlu0 %257
        %s260 = sor.u32 256, 120
        %261 = vbcast.lane.b32.xlu0 %v199, %s260
        %v262 = vpop.permute.xlu0 %261
        %v263 = vlaneseq
        %v264 = vshrl.u32 %v263, 7
        %v265 = vsub.s32 2, %v264
        %v266 = vrot.slane %v121, %v265
        %268 = vbcast.lane.b32.xlu0 %v266, 256
        %v269 = vpop.permute.xlu0 %268
        %s271 = sor.u32 256, 8
        %272 = vbcast.lane.b32.xlu0 %v266, %s271
        %v273 = vpop.permute.xlu0 %272
        %s275 = sor.u32 256, 16
        %276 = vbcast.lane.b32.xlu0 %v266, %s275
        %v277 = vpop.permute.xlu0 %276
        %s279 = sor.u32 256, 24
        %280 = vbcast.lane.b32.xlu0 %v266, %s279
        %v281 = vpop.permute.xlu0 %280
        %s283 = sor.u32 256, 32
        %284 = vbcast.lane.b32.xlu0 %v266, %s283
        %v285 = vpop.permute.xlu0 %284
        %s287 = sor.u32 256, 40
        %288 = vbcast.lane.b32.xlu0 %v266, %s287
        %v289 = vpop.permute.xlu0 %288
        %s291 = sor.u32 256, 48
        %292 = vbcast.lane.b32.xlu0 %v266, %s291
        %v293 = vpop.permute.xlu0 %292
        %s295 = sor.u32 256, 56
        %296 = vbcast.lane.b32.xlu0 %v266, %s295
        %v297 = vpop.permute.xlu0 %296
        %s299 = sor.u32 256, 64
        %300 = vbcast.lane.b32.xlu0 %v266, %s299
        %v301 = vpop.permute.xlu0 %300
        %s303 = sor.u32 256, 72
        %304 = vbcast.lane.b32.xlu0 %v266, %s303
        %v305 = vpop.permute.xlu0 %304
        %s307 = sor.u32 256, 80
        %308 = vbcast.lane.b32.xlu0 %v266, %s307
        %v309 = vpop.permute.xlu0 %308
        %s311 = sor.u32 256, 88
        %312 = vbcast.lane.b32.xlu0 %v266, %s311
        %v313 = vpop.permute.xlu0 %312
        %s315 = sor.u32 256, 96
        %316 = vbcast.lane.b32.xlu0 %v266, %s315
        %v317 = vpop.permute.xlu0 %316
        %s319 = sor.u32 256, 104
        %320 = vbcast.lane.b32.xlu0 %v266, %s319
        %v321 = vpop.permute.xlu0 %320
        %s323 = sor.u32 256, 112
        %324 = vbcast.lane.b32.xlu0 %v266, %s323
        %v325 = vpop.permute.xlu0 %324
        %s327 = sor.u32 256, 120
        %328 = vbcast.lane.b32.xlu0 %v266, %s327
        %v329 = vpop.permute.xlu0 %328
        %v330 = vlaneseq
        %v331 = vshrl.u32 %v330, 7
        %v332 = vsub.s32 3, %v331
        %v333 = vrot.slane %v121, %v332
        %335 = vbcast.lane.b32.xlu0 %v333, 256
        %v336 = vpop.permute.xlu0 %335
        %s338 = sor.u32 256, 8
        %339 = vbcast.lane.b32.xlu0 %v333, %s338
        %v340 = vpop.permute.xlu0 %339
        %s342 = sor.u32 256, 16
        %343 = vbcast.lane.b32.xlu0 %v333, %s342
        %v344 = vpop.permute.xlu0 %343
        %s346 = sor.u32 256, 24
        %347 = vbcast.lane.b32.xlu0 %v333, %s346
        %v348 = vpop.permute.xlu0 %347
        %s350 = sor.u32 256, 32
        %351 = vbcast.lane.b32.xlu0 %v333, %s350
        %v352 = vpop.permute.xlu0 %351
        %s354 = sor.u32 256, 40
        %355 = vbcast.lane.b32.xlu0 %v333, %s354
        %v356 = vpop.permute.xlu0 %355
        %s358 = sor.u32 256, 48
        %359 = vbcast.lane.b32.xlu0 %v333, %s358
        %v360 = vpop.permute.xlu0 %359
        %s362 = sor.u32 256, 56
        %363 = vbcast.lane.b32.xlu0 %v333, %s362
        %v364 = vpop.permute.xlu0 %363
        %s366 = sor.u32 256, 64
        %367 = vbcast.lane.b32.xlu0 %v333, %s366
        %v368 = vpop.permute.xlu0 %367
        %s370 = sor.u32 256, 72
        %371 = vbcast.lane.b32.xlu0 %v333, %s370
        %v372 = vpop.permute.xlu0 %371
        %s374 = sor.u32 256, 80
        %375 = vbcast.lane.b32.xlu0 %v333, %s374
        %v376 = vpop.permute.xlu0 %375
        %s378 = sor.u32 256, 88
        %379 = vbcast.lane.b32.xlu0 %v333, %s378
        %v380 = vpop.permute.xlu0 %379
        %s382 = sor.u32 256, 96
        %383 = vbcast.lane.b32.xlu0 %v333, %s382
        %v384 = vpop.permute.xlu0 %383
        %s386 = sor.u32 256, 104
        %387 = vbcast.lane.b32.xlu0 %v333, %s386
        %v388 = vpop.permute.xlu0 %387
        %s390 = sor.u32 256, 112
        %391 = vbcast.lane.b32.xlu0 %v333, %s390
        %v392 = vpop.permute.xlu0 %391
        %s394 = sor.u32 256, 120
        %395 = vbcast.lane.b32.xlu0 %v333, %s394
        %v396 = vpop.permute.xlu0 %395
        %v397 = vlaneseq
        %v398 = vshrl.u32 %v397, 7
        %v399 = vsub.s32 4, %v398
        %v400 = vrot.slane %v121, %v399
        %402 = vbcast.lane.b32.xlu0 %v400, 256
        %v403 = vpop.permute.xlu0 %402
        %s405 = sor.u32 256, 8
        %406 = vbcast.lane.b32.xlu0 %v400, %s405
        %v407 = vpop.permute.xlu0 %406
        %s409 = sor.u32 256, 16
        %410 = vbcast.lane.b32.xlu0 %v400, %s409
        %v411 = vpop.permute.xlu0 %410
        %s413 = sor.u32 256, 24
        %414 = vbcast.lane.b32.xlu0 %v400, %s413
        %v415 = vpop.permute.xlu0 %414
        %s417 = sor.u32 256, 32
        %418 = vbcast.lane.b32.xlu0 %v400, %s417
        %v419 = vpop.permute.xlu0 %418
        %s421 = sor.u32 256, 40
        %422 = vbcast.lane.b32.xlu0 %v400, %s421
        %v423 = vpop.permute.xlu0 %422
        %s425 = sor.u32 256, 48
        %426 = vbcast.lane.b32.xlu0 %v400, %s425
        %v427 = vpop.permute.xlu0 %426
        %s429 = sor.u32 256, 56
        %430 = vbcast.lane.b32.xlu0 %v400, %s429
        %v431 = vpop.permute.xlu0 %430
        %s433 = sor.u32 256, 64
        %434 = vbcast.lane.b32.xlu0 %v400, %s433
        %v435 = vpop.permute.xlu0 %434
        %s437 = sor.u32 256, 72
        %438 = vbcast.lane.b32.xlu0 %v400, %s437
        %v439 = vpop.permute.xlu0 %438
        %s441 = sor.u32 256, 80
        %442 = vbcast.lane.b32.xlu0 %v400, %s441
        %v443 = vpop.permute.xlu0 %442
        %s445 = sor.u32 256, 88
        %446 = vbcast.lane.b32.xlu0 %v400, %s445
        %v447 = vpop.permute.xlu0 %446
        %s449 = sor.u32 256, 96
        %450 = vbcast.lane.b32.xlu0 %v400, %s449
        %v451 = vpop.permute.xlu0 %450
        %s453 = sor.u32 256, 104
        %454 = vbcast.lane.b32.xlu0 %v400, %s453
        %v455 = vpop.permute.xlu0 %454
        %s457 = sor.u32 256, 112
        %458 = vbcast.lane.b32.xlu0 %v400, %s457
        %v459 = vpop.permute.xlu0 %458
        %s461 = sor.u32 256, 120
        %462 = vbcast.lane.b32.xlu0 %v400, %s461
        %v463 = vpop.permute.xlu0 %462
        %v464 = vlaneseq
        %v465 = vshrl.u32 %v464, 7
        %v466 = vsub.s32 5, %v465
        %v467 = vrot.slane %v121, %v466
        %469 = vbcast.lane.b32.xlu0 %v467, 256
        %v470 = vpop.permute.xlu0 %469
        %s472 = sor.u32 256, 8
        %473 = vbcast.lane.b32.xlu0 %v467, %s472
        %v474 = vpop.permute.xlu0 %473
        %s476 = sor.u32 256, 16
        %477 = vbcast.lane.b32.xlu0 %v467, %s476
        %v478 = vpop.permute.xlu0 %477
        %s480 = sor.u32 256, 24
        %481 = vbcast.lane.b32.xlu0 %v467, %s480
        %v482 = vpop.permute.xlu0 %481
        %s484 = sor.u32 256, 32
        %485 = vbcast.lane.b32.xlu0 %v467, %s484
        %v486 = vpop.permute.xlu0 %485
        %s488 = sor.u32 256, 40
        %489 = vbcast.lane.b32.xlu0 %v467, %s488
        %v490 = vpop.permute.xlu0 %489
        %s492 = sor.u32 256, 48
        %493 = vbcast.lane.b32.xlu0 %v467, %s492
        %v494 = vpop.permute.xlu0 %493
        %s496 = sor.u32 256, 56
        %497 = vbcast.lane.b32.xlu0 %v467, %s496
        %v498 = vpop.permute.xlu0 %497
        %s500 = sor.u32 256, 64
        %501 = vbcast.lane.b32.xlu0 %v467, %s500
        %v502 = vpop.permute.xlu0 %501
        %s504 = sor.u32 256, 72
        %505 = vbcast.lane.b32.xlu0 %v467, %s504
        %v506 = vpop.permute.xlu0 %505
        %s508 = sor.u32 256, 80
        %509 = vbcast.lane.b32.xlu0 %v467, %s508
        %v510 = vpop.permute.xlu0 %509
        %s512 = sor.u32 256, 88
        %513 = vbcast.lane.b32.xlu0 %v467, %s512
        %v514 = vpop.permute.xlu0 %513
        %s516 = sor.u32 256, 96
        %517 = vbcast.lane.b32.xlu0 %v467, %s516
        %v518 = vpop.permute.xlu0 %517
        %s520 = sor.u32 256, 104
        %521 = vbcast.lane.b32.xlu0 %v467, %s520
        %v522 = vpop.permute.xlu0 %521
        %s524 = sor.u32 256, 112
        %525 = vbcast.lane.b32.xlu0 %v467, %s524
        %v526 = vpop.permute.xlu0 %525
        %s528 = sor.u32 256, 120
        %529 = vbcast.lane.b32.xlu0 %v467, %s528
        %v530 = vpop.permute.xlu0 %529
        %v531 = vlaneseq
        %v532 = vshrl.u32 %v531, 7
        %v533 = vsub.s32 6, %v532
        %v534 = vrot.slane %v121, %v533
        %536 = vbcast.lane.b32.xlu0 %v534, 256
        %v537 = vpop.permute.xlu0 %536
        %s539 = sor.u32 256, 8
        %540 = vbcast.lane.b32.xlu0 %v534, %s539
        %v541 = vpop.permute.xlu0 %540
        %s543 = sor.u32 256, 16
        %544 = vbcast.lane.b32.xlu0 %v534, %s543
        %v545 = vpop.permute.xlu0 %544
        %s547 = sor.u32 256, 24
        %548 = vbcast.lane.b32.xlu0 %v534, %s547
        %v549 = vpop.permute.xlu0 %548
        %s551 = sor.u32 256, 32
        %552 = vbcast.lane.b32.xlu0 %v534, %s551
        %v553 = vpop.permute.xlu0 %552
        %s555 = sor.u32 256, 40
        %556 = vbcast.lane.b32.xlu0 %v534, %s555
        %v557 = vpop.permute.xlu0 %556
        %s559 = sor.u32 256, 48
        %560 = vbcast.lane.b32.xlu0 %v534, %s559
        %v561 = vpop.permute.xlu0 %560
        %s563 = sor.u32 256, 56
        %564 = vbcast.lane.b32.xlu0 %v534, %s563
        %v565 = vpop.permute.xlu0 %564
        %s567 = sor.u32 256, 64
        %568 = vbcast.lane.b32.xlu0 %v534, %s567
        %v569 = vpop.permute.xlu0 %568
        %s571 = sor.u32 256, 72
        %572 = vbcast.lane.b32.xlu0 %v534, %s571
        %v573 = vpop.permute.xlu0 %572
        %s575 = sor.u32 256, 80
        %576 = vbcast.lane.b32.xlu0 %v534, %s575
        %v577 = vpop.permute.xlu0 %576
        %s579 = sor.u32 256, 88
        %580 = vbcast.lane.b32.xlu0 %v534, %s579
        %v581 = vpop.permute.xlu0 %580
        %s583 = sor.u32 256, 96
        %584 = vbcast.lane.b32.xlu0 %v534, %s583
        %v585 = vpop.permute.xlu0 %584
        %s587 = sor.u32 256, 104
        %588 = vbcast.lane.b32.xlu0 %v534, %s587
        %v589 = vpop.permute.xlu0 %588
        %s591 = sor.u32 256, 112
        %592 = vbcast.lane.b32.xlu0 %v534, %s591
        %v593 = vpop.permute.xlu0 %592
        %s595 = sor.u32 256, 120
        %596 = vbcast.lane.b32.xlu0 %v534, %s595
        %v597 = vpop.permute.xlu0 %596
        %v598 = vlaneseq
        %v599 = vshrl.u32 %v598, 7
        %v600 = vsub.s32 7, %v599
        %v601 = vrot.slane %v121, %v600
        %603 = vbcast.lane.b32.xlu0 %v601, 256
        %v604 = vpop.permute.xlu0 %603
        %s606 = sor.u32 256, 8
        %607 = vbcast.lane.b32.xlu0 %v601, %s606
        %v608 = vpop.permute.xlu0 %607
        %s610 = sor.u32 256, 16
        %611 = vbcast.lane.b32.xlu0 %v601, %s610
        %v612 = vpop.permute.xlu0 %611
        %s614 = sor.u32 256, 24
        %615 = vbcast.lane.b32.xlu0 %v601, %s614
        %v616 = vpop.permute.xlu0 %615
        %s618 = sor.u32 256, 32
        %619 = vbcast.lane.b32.xlu0 %v601, %s618
        %v620 = vpop.permute.xlu0 %619
        %s622 = sor.u32 256, 40
        %623 = vbcast.lane.b32.xlu0 %v601, %s622
        %v624 = vpop.permute.xlu0 %623
        %s626 = sor.u32 256, 48
        %627 = vbcast.lane.b32.xlu0 %v601, %s626
        %v628 = vpop.permute.xlu0 %627
        %s630 = sor.u32 256, 56
        %631 = vbcast.lane.b32.xlu0 %v601, %s630
        %v632 = vpop.permute.xlu0 %631
        %s634 = sor.u32 256, 64
        %635 = vbcast.lane.b32.xlu0 %v601, %s634
        %v636 = vpop.permute.xlu0 %635
        %s638 = sor.u32 256, 72
        %639 = vbcast.lane.b32.xlu0 %v601, %s638
        %v640 = vpop.permute.xlu0 %639
        %s642 = sor.u32 256, 80
        %643 = vbcast.lane.b32.xlu0 %v601, %s642
        %v644 = vpop.permute.xlu0 %643
        %s646 = sor.u32 256, 88
        %647 = vbcast.lane.b32.xlu0 %v601, %s646
        %v648 = vpop.permute.xlu0 %647
        %s650 = sor.u32 256, 96
        %651 = vbcast.lane.b32.xlu0 %v601, %s650
        %v652 = vpop.permute.xlu0 %651
        %s654 = sor.u32 256, 104
        %655 = vbcast.lane.b32.xlu0 %v601, %s654
        %v656 = vpop.permute.xlu0 %655
        %s658 = sor.u32 256, 112
        %659 = vbcast.lane.b32.xlu0 %v601, %s658
        %v660 = vpop.permute.xlu0 %659
        %s662 = sor.u32 256, 120
        %663 = vbcast.lane.b32.xlu0 %v601, %s662
        %v664 = vpop.permute.xlu0 %663
        %v665 = vlaneseq
        %v666 = vshrl.u32 %v665, 7
        %v667 = vsub.s32 0, %v666
        %v668 = vrot.slane %v122, %v667
        %670 = vbcast.lane.b32.xlu0 %v668, 256
        %v671 = vpop.permute.xlu0 %670
        %s673 = sor.u32 256, 8
        %674 = vbcast.lane.b32.xlu0 %v668, %s673
        %v675 = vpop.permute.xlu0 %674
        %s677 = sor.u32 256, 16
        %678 = vbcast.lane.b32.xlu0 %v668, %s677
        %v679 = vpop.permute.xlu0 %678
        %s681 = sor.u32 256, 24
        %682 = vbcast.lane.b32.xlu0 %v668, %s681
        %v683 = vpop.permute.xlu0 %682
        %s685 = sor.u32 256, 32
        %686 = vbcast.lane.b32.xlu0 %v668, %s685
        %v687 = vpop.permute.xlu0 %686
        %s689 = sor.u32 256, 40
        %690 = vbcast.lane.b32.xlu0 %v668, %s689
        %v691 = vpop.permute.xlu0 %690
        %s693 = sor.u32 256, 48
        %694 = vbcast.lane.b32.xlu0 %v668, %s693
        %v695 = vpop.permute.xlu0 %694
        %s697 = sor.u32 256, 56
        %698 = vbcast.lane.b32.xlu0 %v668, %s697
        %v699 = vpop.permute.xlu0 %698
        %s701 = sor.u32 256, 64
        %702 = vbcast.lane.b32.xlu0 %v668, %s701
        %v703 = vpop.permute.xlu0 %702
        %s705 = sor.u32 256, 72
        %706 = vbcast.lane.b32.xlu0 %v668, %s705
        %v707 = vpop.permute.xlu0 %706
        %s709 = sor.u32 256, 80
        %710 = vbcast.lane.b32.xlu0 %v668, %s709
        %v711 = vpop.permute.xlu0 %710
        %s713 = sor.u32 256, 88
        %714 = vbcast.lane.b32.xlu0 %v668, %s713
        %v715 = vpop.permute.xlu0 %714
        %s717 = sor.u32 256, 96
        %718 = vbcast.lane.b32.xlu0 %v668, %s717
        %v719 = vpop.permute.xlu0 %718
        %s721 = sor.u32 256, 104
        %722 = vbcast.lane.b32.xlu0 %v668, %s721
        %v723 = vpop.permute.xlu0 %722
        %s725 = sor.u32 256, 112
        %726 = vbcast.lane.b32.xlu0 %v668, %s725
        %v727 = vpop.permute.xlu0 %726
        %s729 = sor.u32 256, 120
        %730 = vbcast.lane.b32.xlu0 %v668, %s729
        %v731 = vpop.permute.xlu0 %730
        %v732 = vlaneseq
        %v733 = vshrl.u32 %v732, 7
        %v734 = vsub.s32 1, %v733
        %v735 = vrot.slane %v122, %v734
        %737 = vbcast.lane.b32.xlu0 %v735, 256
        %v738 = vpop.permute.xlu0 %737
        %s740 = sor.u32 256, 8
        %741 = vbcast.lane.b32.xlu0 %v735, %s740
        %v742 = vpop.permute.xlu0 %741
        %s744 = sor.u32 256, 16
        %745 = vbcast.lane.b32.xlu0 %v735, %s744
        %v746 = vpop.permute.xlu0 %745
        %s748 = sor.u32 256, 24
        %749 = vbcast.lane.b32.xlu0 %v735, %s748
        %v750 = vpop.permute.xlu0 %749
        %s752 = sor.u32 256, 32
        %753 = vbcast.lane.b32.xlu0 %v735, %s752
        %v754 = vpop.permute.xlu0 %753
        %s756 = sor.u32 256, 40
        %757 = vbcast.lane.b32.xlu0 %v735, %s756
        %v758 = vpop.permute.xlu0 %757
        %s760 = sor.u32 256, 48
        %761 = vbcast.lane.b32.xlu0 %v735, %s760
        %v762 = vpop.permute.xlu0 %761
        %s764 = sor.u32 256, 56
        %765 = vbcast.lane.b32.xlu0 %v735, %s764
        %v766 = vpop.permute.xlu0 %765
        %s768 = sor.u32 256, 64
        %769 = vbcast.lane.b32.xlu0 %v735, %s768
        %v770 = vpop.permute.xlu0 %769
        %s772 = sor.u32 256, 72
        %773 = vbcast.lane.b32.xlu0 %v735, %s772
        %v774 = vpop.permute.xlu0 %773
        %s776 = sor.u32 256, 80
        %777 = vbcast.lane.b32.xlu0 %v735, %s776
        %v778 = vpop.permute.xlu0 %777
        %s780 = sor.u32 256, 88
        %781 = vbcast.lane.b32.xlu0 %v735, %s780
        %v782 = vpop.permute.xlu0 %781
        %s784 = sor.u32 256, 96
        %785 = vbcast.lane.b32.xlu0 %v735, %s784
        %v786 = vpop.permute.xlu0 %785
        %s788 = sor.u32 256, 104
        %789 = vbcast.lane.b32.xlu0 %v735, %s788
        %v790 = vpop.permute.xlu0 %789
        %s792 = sor.u32 256, 112
        %793 = vbcast.lane.b32.xlu0 %v735, %s792
        %v794 = vpop.permute.xlu0 %793
        %s796 = sor.u32 256, 120
        %797 = vbcast.lane.b32.xlu0 %v735, %s796
        %v798 = vpop.permute.xlu0 %797
        %v799 = vlaneseq
        %v800 = vshrl.u32 %v799, 7
        %v801 = vsub.s32 2, %v800
        %v802 = vrot.slane %v122, %v801
        %804 = vbcast.lane.b32.xlu0 %v802, 256
        %v805 = vpop.permute.xlu0 %804
        %s807 = sor.u32 256, 8
        %808 = vbcast.lane.b32.xlu0 %v802, %s807
        %v809 = vpop.permute.xlu0 %808
        %s811 = sor.u32 256, 16
        %812 = vbcast.lane.b32.xlu0 %v802, %s811
        %v813 = vpop.permute.xlu0 %812
        %s815 = sor.u32 256, 24
        %816 = vbcast.lane.b32.xlu0 %v802, %s815
        %v817 = vpop.permute.xlu0 %816
        %s819 = sor.u32 256, 32
        %820 = vbcast.lane.b32.xlu0 %v802, %s819
        %v821 = vpop.permute.xlu0 %820
        %s823 = sor.u32 256, 40
        %824 = vbcast.lane.b32.xlu0 %v802, %s823
        %v825 = vpop.permute.xlu0 %824
        %s827 = sor.u32 256, 48
        %828 = vbcast.lane.b32.xlu0 %v802, %s827
        %v829 = vpop.permute.xlu0 %828
        %s831 = sor.u32 256, 56
        %832 = vbcast.lane.b32.xlu0 %v802, %s831
        %v833 = vpop.permute.xlu0 %832
        %s835 = sor.u32 256, 64
        %836 = vbcast.lane.b32.xlu0 %v802, %s835
        %v837 = vpop.permute.xlu0 %836
        %s839 = sor.u32 256, 72
        %840 = vbcast.lane.b32.xlu0 %v802, %s839
        %v841 = vpop.permute.xlu0 %840
        %s843 = sor.u32 256, 80
        %844 = vbcast.lane.b32.xlu0 %v802, %s843
        %v845 = vpop.permute.xlu0 %844
        %s847 = sor.u32 256, 88
        %848 = vbcast.lane.b32.xlu0 %v802, %s847
        %v849 = vpop.permute.xlu0 %848
        %s851 = sor.u32 256, 96
        %852 = vbcast.lane.b32.xlu0 %v802, %s851
        %v853 = vpop.permute.xlu0 %852
        %s855 = sor.u32 256, 104
        %856 = vbcast.lane.b32.xlu0 %v802, %s855
        %v857 = vpop.permute.xlu0 %856
        %s859 = sor.u32 256, 112
        %860 = vbcast.lane.b32.xlu0 %v802, %s859
        %v861 = vpop.permute.xlu0 %860
        %s863 = sor.u32 256, 120
        %864 = vbcast.lane.b32.xlu0 %v802, %s863
        %v865 = vpop.permute.xlu0 %864
        %v866 = vlaneseq
        %v867 = vshrl.u32 %v866, 7
        %v868 = vsub.s32 3, %v867
        %v869 = vrot.slane %v122, %v868
        %871 = vbcast.lane.b32.xlu0 %v869, 256
        %v872 = vpop.permute.xlu0 %871
        %s874 = sor.u32 256, 8
        %875 = vbcast.lane.b32.xlu0 %v869, %s874
        %v876 = vpop.permute.xlu0 %875
        %s878 = sor.u32 256, 16
        %879 = vbcast.lane.b32.xlu0 %v869, %s878
        %v880 = vpop.permute.xlu0 %879
        %s882 = sor.u32 256, 24
        %883 = vbcast.lane.b32.xlu0 %v869, %s882
        %v884 = vpop.permute.xlu0 %883
        %s886 = sor.u32 256, 32
        %887 = vbcast.lane.b32.xlu0 %v869, %s886
        %v888 = vpop.permute.xlu0 %887
        %s890 = sor.u32 256, 40
        %891 = vbcast.lane.b32.xlu0 %v869, %s890
        %v892 = vpop.permute.xlu0 %891
        %s894 = sor.u32 256, 48
        %895 = vbcast.lane.b32.xlu0 %v869, %s894
        %v896 = vpop.permute.xlu0 %895
        %s898 = sor.u32 256, 56
        %899 = vbcast.lane.b32.xlu0 %v869, %s898
        %v900 = vpop.permute.xlu0 %899
        %s902 = sor.u32 256, 64
        %903 = vbcast.lane.b32.xlu0 %v869, %s902
        %v904 = vpop.permute.xlu0 %903
        %s906 = sor.u32 256, 72
        %907 = vbcast.lane.b32.xlu0 %v869, %s906
        %v908 = vpop.permute.xlu0 %907
        %s910 = sor.u32 256, 80
        %911 = vbcast.lane.b32.xlu0 %v869, %s910
        %v912 = vpop.permute.xlu0 %911
        %s914 = sor.u32 256, 88
        %915 = vbcast.lane.b32.xlu0 %v869, %s914
        %v916 = vpop.permute.xlu0 %915
        %s918 = sor.u32 256, 96
        %919 = vbcast.lane.b32.xlu0 %v869, %s918
        %v920 = vpop.permute.xlu0 %919
        %s922 = sor.u32 256, 104
        %923 = vbcast.lane.b32.xlu0 %v869, %s922
        %v924 = vpop.permute.xlu0 %923
        %s926 = sor.u32 256, 112
        %927 = vbcast.lane.b32.xlu0 %v869, %s926
        %v928 = vpop.permute.xlu0 %927
        %s930 = sor.u32 256, 120
        %931 = vbcast.lane.b32.xlu0 %v869, %s930
        %v932 = vpop.permute.xlu0 %931
        %v933 = vlaneseq
        %v934 = vshrl.u32 %v933, 7
        %v935 = vsub.s32 4, %v934
        %v936 = vrot.slane %v122, %v935
        %938 = vbcast.lane.b32.xlu0 %v936, 256
        %v939 = vpop.permute.xlu0 %938
        %s941 = sor.u32 256, 8
        %942 = vbcast.lane.b32.xlu0 %v936, %s941
        %v943 = vpop.permute.xlu0 %942
        %s945 = sor.u32 256, 16
        %946 = vbcast.lane.b32.xlu0 %v936, %s945
        %v947 = vpop.permute.xlu0 %946
        %s949 = sor.u32 256, 24
        %950 = vbcast.lane.b32.xlu0 %v936, %s949
        %v951 = vpop.permute.xlu0 %950
        %s953 = sor.u32 256, 32
        %954 = vbcast.lane.b32.xlu0 %v936, %s953
        %v955 = vpop.permute.xlu0 %954
        %s957 = sor.u32 256, 40
        %958 = vbcast.lane.b32.xlu0 %v936, %s957
        %v959 = vpop.permute.xlu0 %958
        %s961 = sor.u32 256, 48
        %962 = vbcast.lane.b32.xlu0 %v936, %s961
        %v963 = vpop.permute.xlu0 %962
        %s965 = sor.u32 256, 56
        %966 = vbcast.lane.b32.xlu0 %v936, %s965
        %v967 = vpop.permute.xlu0 %966
        %s969 = sor.u32 256, 64
        %970 = vbcast.lane.b32.xlu0 %v936, %s969
        %v971 = vpop.permute.xlu0 %970
        %s973 = sor.u32 256, 72
        %974 = vbcast.lane.b32.xlu0 %v936, %s973
        %v975 = vpop.permute.xlu0 %974
        %s977 = sor.u32 256, 80
        %978 = vbcast.lane.b32.xlu0 %v936, %s977
        %v979 = vpop.permute.xlu0 %978
        %s981 = sor.u32 256, 88
        %982 = vbcast.lane.b32.xlu0 %v936, %s981
        %v983 = vpop.permute.xlu0 %982
        %s985 = sor.u32 256, 96
        %986 = vbcast.lane.b32.xlu0 %v936, %s985
        %v987 = vpop.permute.xlu0 %986
        %s989 = sor.u32 256, 104
        %990 = vbcast.lane.b32.xlu0 %v936, %s989
        %v991 = vpop.permute.xlu0 %990
        %s993 = sor.u32 256, 112
        %994 = vbcast.lane.b32.xlu0 %v936, %s993
        %v995 = vpop.permute.xlu0 %994
        %s997 = sor.u32 256, 120
        %998 = vbcast.lane.b32.xlu0 %v936, %s997
        %v999 = vpop.permute.xlu0 %998
        %v1000 = vlaneseq
        %v1001 = vshrl.u32 %v1000, 7
        %v1002 = vsub.s32 5, %v1001
        %v1003 = vrot.slane %v122, %v1002
        %1005 = vbcast.lane.b32.xlu0 %v1003, 256
        %v1006 = vpop.permute.xlu0 %1005
        %s1008 = sor.u32 256, 8
        %1009 = vbcast.lane.b32.xlu0 %v1003, %s1008
        %v1010 = vpop.permute.xlu0 %1009
        %s1012 = sor.u32 256, 16
        %1013 = vbcast.lane.b32.xlu0 %v1003, %s1012
        %v1014 = vpop.permute.xlu0 %1013
        %s1016 = sor.u32 256, 24
        %1017 = vbcast.lane.b32.xlu0 %v1003, %s1016
        %v1018 = vpop.permute.xlu0 %1017
        %s1020 = sor.u32 256, 32
        %1021 = vbcast.lane.b32.xlu0 %v1003, %s1020
        %v1022 = vpop.permute.xlu0 %1021
        %s1024 = sor.u32 256, 40
        %1025 = vbcast.lane.b32.xlu0 %v1003, %s1024
        %v1026 = vpop.permute.xlu0 %1025
        %s1028 = sor.u32 256, 48
        %1029 = vbcast.lane.b32.xlu0 %v1003, %s1028
        %v1030 = vpop.permute.xlu0 %1029
        %s1032 = sor.u32 256, 56
        %1033 = vbcast.lane.b32.xlu0 %v1003, %s1032
        %v1034 = vpop.permute.xlu0 %1033
        %s1036 = sor.u32 256, 64
        %1037 = vbcast.lane.b32.xlu0 %v1003, %s1036
        %v1038 = vpop.permute.xlu0 %1037
        %s1040 = sor.u32 256, 72
        %1041 = vbcast.lane.b32.xlu0 %v1003, %s1040
        %v1042 = vpop.permute.xlu0 %1041
        %s1044 = sor.u32 256, 80
        %1045 = vbcast.lane.b32.xlu0 %v1003, %s1044
        %v1046 = vpop.permute.xlu0 %1045
        %s1048 = sor.u32 256, 88
        %1049 = vbcast.lane.b32.xlu0 %v1003, %s1048
        %v1050 = vpop.permute.xlu0 %1049
        %s1052 = sor.u32 256, 96
        %1053 = vbcast.lane.b32.xlu0 %v1003, %s1052
        %v1054 = vpop.permute.xlu0 %1053
        %s1056 = sor.u32 256, 104
        %1057 = vbcast.lane.b32.xlu0 %v1003, %s1056
        %v1058 = vpop.permute.xlu0 %1057
        %s1060 = sor.u32 256, 112
        %1061 = vbcast.lane.b32.xlu0 %v1003, %s1060
        %v1062 = vpop.permute.xlu0 %1061
        %s1064 = sor.u32 256, 120
        %1065 = vbcast.lane.b32.xlu0 %v1003, %s1064
        %v1066 = vpop.permute.xlu0 %1065
        %v1067 = vlaneseq
        %v1068 = vshrl.u32 %v1067, 7
        %v1069 = vsub.s32 6, %v1068
        %v1070 = vrot.slane %v122, %v1069
        %1072 = vbcast.lane.b32.xlu0 %v1070, 256
        %v1073 = vpop.permute.xlu0 %1072
        %s1075 = sor.u32 256, 8
        %1076 = vbcast.lane.b32.xlu0 %v1070, %s1075
        %v1077 = vpop.permute.xlu0 %1076
        %s1079 = sor.u32 256, 16
        %1080 = vbcast.lane.b32.xlu0 %v1070, %s1079
        %v1081 = vpop.permute.xlu0 %1080
        %s1083 = sor.u32 256, 24
        %1084 = vbcast.lane.b32.xlu0 %v1070, %s1083
        %v1085 = vpop.permute.xlu0 %1084
        %s1087 = sor.u32 256, 32
        %1088 = vbcast.lane.b32.xlu0 %v1070, %s1087
        %v1089 = vpop.permute.xlu0 %1088
        %s1091 = sor.u32 256, 40
        %1092 = vbcast.lane.b32.xlu0 %v1070, %s1091
        %v1093 = vpop.permute.xlu0 %1092
        %s1095 = sor.u32 256, 48
        %1096 = vbcast.lane.b32.xlu0 %v1070, %s1095
        %v1097 = vpop.permute.xlu0 %1096
        %s1099 = sor.u32 256, 56
        %1100 = vbcast.lane.b32.xlu0 %v1070, %s1099
        %v1101 = vpop.permute.xlu0 %1100
        %s1103 = sor.u32 256, 64
        %1104 = vbcast.lane.b32.xlu0 %v1070, %s1103
        %v1105 = vpop.permute.xlu0 %1104
        %s1107 = sor.u32 256, 72
        %1108 = vbcast.lane.b32.xlu0 %v1070, %s1107
        %v1109 = vpop.permute.xlu0 %1108
        %s1111 = sor.u32 256, 80
        %1112 = vbcast.lane.b32.xlu0 %v1070, %s1111
        %v1113 = vpop.permute.xlu0 %1112
        %s1115 = sor.u32 256, 88
        %1116 = vbcast.lane.b32.xlu0 %v1070, %s1115
        %v1117 = vpop.permute.xlu0 %1116
        %s1119 = sor.u32 256, 96
        %1120 = vbcast.lane.b32.xlu0 %v1070, %s1119
        %v1121 = vpop.permute.xlu0 %1120
        %s1123 = sor.u32 256, 104
        %1124 = vbcast.lane.b32.xlu0 %v1070, %s1123
        %v1125 = vpop.permute.xlu0 %1124
        %s1127 = sor.u32 256, 112
        %1128 = vbcast.lane.b32.xlu0 %v1070, %s1127
        %v1129 = vpop.permute.xlu0 %1128
        %s1131 = sor.u32 256, 120
        %1132 = vbcast.lane.b32.xlu0 %v1070, %s1131
        %v1133 = vpop.permute.xlu0 %1132
        %v1134 = vlaneseq
        %v1135 = vshrl.u32 %v1134, 7
        %v1136 = vsub.s32 7, %v1135
        %v1137 = vrot.slane %v122, %v1136
        %1139 = vbcast.lane.b32.xlu0 %v1137, 256
        %v1140 = vpop.permute.xlu0 %1139
        %s1142 = sor.u32 256, 8
        %1143 = vbcast.lane.b32.xlu0 %v1137, %s1142
        %v1144 = vpop.permute.xlu0 %1143
        %s1146 = sor.u32 256, 16
        %1147 = vbcast.lane.b32.xlu0 %v1137, %s1146
        %v1148 = vpop.permute.xlu0 %1147
        %s1150 = sor.u32 256, 24
        %1151 = vbcast.lane.b32.xlu0 %v1137, %s1150
        %v1152 = vpop.permute.xlu0 %1151
        %s1154 = sor.u32 256, 32
        %1155 = vbcast.lane.b32.xlu0 %v1137, %s1154
        %v1156 = vpop.permute.xlu0 %1155
        %s1158 = sor.u32 256, 40
        %1159 = vbcast.lane.b32.xlu0 %v1137, %s1158
        %v1160 = vpop.permute.xlu0 %1159
        %s1162 = sor.u32 256, 48
        %1163 = vbcast.lane.b32.xlu0 %v1137, %s1162
        %v1164 = vpop.permute.xlu0 %1163
        %s1166 = sor.u32 256, 56
        %1167 = vbcast.lane.b32.xlu0 %v1137, %s1166
        %v1168 = vpop.permute.xlu0 %1167
        %s1170 = sor.u32 256, 64
        %1171 = vbcast.lane.b32.xlu0 %v1137, %s1170
        %v1172 = vpop.permute.xlu0 %1171
        %s1174 = sor.u32 256, 72
        %1175 = vbcast.lane.b32.xlu0 %v1137, %s1174
        %v1176 = vpop.permute.xlu0 %1175
        %s1178 = sor.u32 256, 80
        %1179 = vbcast.lane.b32.xlu0 %v1137, %s1178
        %v1180 = vpop.permute.xlu0 %1179
        %s1182 = sor.u32 256, 88
        %1183 = vbcast.lane.b32.xlu0 %v1137, %s1182
        %v1184 = vpop.permute.xlu0 %1183
        %s1186 = sor.u32 256, 96
        %1187 = vbcast.lane.b32.xlu0 %v1137, %s1186
        %v1188 = vpop.permute.xlu0 %1187
        %s1190 = sor.u32 256, 104
        %1191 = vbcast.lane.b32.xlu0 %v1137, %s1190
        %v1192 = vpop.permute.xlu0 %1191
        %s1194 = sor.u32 256, 112
        %1195 = vbcast.lane.b32.xlu0 %v1137, %s1194
        %v1196 = vpop.permute.xlu0 %1195
        %s1198 = sor.u32 256, 120
        %1199 = vbcast.lane.b32.xlu0 %v1137, %s1198
        %v1200 = vpop.permute.xlu0 %1199
        %v1201 = vlaneseq
        %v1202 = vshrl.u32 %v1201, 7
        %v1203 = vsub.s32 0, %v1202
        %v1204 = vrot.slane %v123, %v1203
        %1206 = vbcast.lane.b32.xlu0 %v1204, 256
        %v1207 = vpop.permute.xlu0 %1206
        %s1209 = sor.u32 256, 8
        %1210 = vbcast.lane.b32.xlu0 %v1204, %s1209
        %v1211 = vpop.permute.xlu0 %1210
        %s1213 = sor.u32 256, 16
        %1214 = vbcast.lane.b32.xlu0 %v1204, %s1213
        %v1215 = vpop.permute.xlu0 %1214
        %s1217 = sor.u32 256, 24
        %1218 = vbcast.lane.b32.xlu0 %v1204, %s1217
        %v1219 = vpop.permute.xlu0 %1218
        %s1221 = sor.u32 256, 32
        %1222 = vbcast.lane.b32.xlu0 %v1204, %s1221
        %v1223 = vpop.permute.xlu0 %1222
        %s1225 = sor.u32 256, 40
        %1226 = vbcast.lane.b32.xlu0 %v1204, %s1225
        %v1227 = vpop.permute.xlu0 %1226
        %s1229 = sor.u32 256, 48
        %1230 = vbcast.lane.b32.xlu0 %v1204, %s1229
        %v1231 = vpop.permute.xlu0 %1230
        %s1233 = sor.u32 256, 56
        %1234 = vbcast.lane.b32.xlu0 %v1204, %s1233
        %v1235 = vpop.permute.xlu0 %1234
        %s1237 = sor.u32 256, 64
        %1238 = vbcast.lane.b32.xlu0 %v1204, %s1237
        %v1239 = vpop.permute.xlu0 %1238
        %s1241 = sor.u32 256, 72
        %1242 = vbcast.lane.b32.xlu0 %v1204, %s1241
        %v1243 = vpop.permute.xlu0 %1242
        %s1245 = sor.u32 256, 80
        %1246 = vbcast.lane.b32.xlu0 %v1204, %s1245
        %v1247 = vpop.permute.xlu0 %1246
        %s1249 = sor.u32 256, 88
        %1250 = vbcast.lane.b32.xlu0 %v1204, %s1249
        %v1251 = vpop.permute.xlu0 %1250
        %s1253 = sor.u32 256, 96
        %1254 = vbcast.lane.b32.xlu0 %v1204, %s1253
        %v1255 = vpop.permute.xlu0 %1254
        %s1257 = sor.u32 256, 104
        %1258 = vbcast.lane.b32.xlu0 %v1204, %s1257
        %v1259 = vpop.permute.xlu0 %1258
        %s1261 = sor.u32 256, 112
        %1262 = vbcast.lane.b32.xlu0 %v1204, %s1261
        %v1263 = vpop.permute.xlu0 %1262
        %s1265 = sor.u32 256, 120
        %1266 = vbcast.lane.b32.xlu0 %v1204, %s1265
        %v1267 = vpop.permute.xlu0 %1266
        %v1268 = vlaneseq
        %v1269 = vshrl.u32 %v1268, 7
        %v1270 = vsub.s32 1, %v1269
        %v1271 = vrot.slane %v123, %v1270
        %1273 = vbcast.lane.b32.xlu0 %v1271, 256
        %v1274 = vpop.permute.xlu0 %1273
        %s1276 = sor.u32 256, 8
        %1277 = vbcast.lane.b32.xlu0 %v1271, %s1276
        %v1278 = vpop.permute.xlu0 %1277
        %s1280 = sor.u32 256, 16
        %1281 = vbcast.lane.b32.xlu0 %v1271, %s1280
        %v1282 = vpop.permute.xlu0 %1281
        %s1284 = sor.u32 256, 24
        %1285 = vbcast.lane.b32.xlu0 %v1271, %s1284
        %v1286 = vpop.permute.xlu0 %1285
        %s1288 = sor.u32 256, 32
        %1289 = vbcast.lane.b32.xlu0 %v1271, %s1288
        %v1290 = vpop.permute.xlu0 %1289
        %s1292 = sor.u32 256, 40
        %1293 = vbcast.lane.b32.xlu0 %v1271, %s1292
        %v1294 = vpop.permute.xlu0 %1293
        %s1296 = sor.u32 256, 48
        %1297 = vbcast.lane.b32.xlu0 %v1271, %s1296
        %v1298 = vpop.permute.xlu0 %1297
        %s1300 = sor.u32 256, 56
        %1301 = vbcast.lane.b32.xlu0 %v1271, %s1300
        %v1302 = vpop.permute.xlu0 %1301
        %s1304 = sor.u32 256, 64
        %1305 = vbcast.lane.b32.xlu0 %v1271, %s1304
        %v1306 = vpop.permute.xlu0 %1305
        %s1308 = sor.u32 256, 72
        %1309 = vbcast.lane.b32.xlu0 %v1271, %s1308
        %v1310 = vpop.permute.xlu0 %1309
        %s1312 = sor.u32 256, 80
        %1313 = vbcast.lane.b32.xlu0 %v1271, %s1312
        %v1314 = vpop.permute.xlu0 %1313
        %s1316 = sor.u32 256, 88
        %1317 = vbcast.lane.b32.xlu0 %v1271, %s1316
        %v1318 = vpop.permute.xlu0 %1317
        %s1320 = sor.u32 256, 96
        %1321 = vbcast.lane.b32.xlu0 %v1271, %s1320
        %v1322 = vpop.permute.xlu0 %1321
        %s1324 = sor.u32 256, 104
        %1325 = vbcast.lane.b32.xlu0 %v1271, %s1324
        %v1326 = vpop.permute.xlu0 %1325
        %s1328 = sor.u32 256, 112
        %1329 = vbcast.lane.b32.xlu0 %v1271, %s1328
        %v1330 = vpop.permute.xlu0 %1329
        %s1332 = sor.u32 256, 120
        %1333 = vbcast.lane.b32.xlu0 %v1271, %s1332
        %v1334 = vpop.permute.xlu0 %1333
        %v1335 = vlaneseq
        %v1336 = vshrl.u32 %v1335, 7
        %v1337 = vsub.s32 2, %v1336
        %v1338 = vrot.slane %v123, %v1337
        %1340 = vbcast.lane.b32.xlu0 %v1338, 256
        %v1341 = vpop.permute.xlu0 %1340
        %s1343 = sor.u32 256, 8
        %1344 = vbcast.lane.b32.xlu0 %v1338, %s1343
        %v1345 = vpop.permute.xlu0 %1344
        %s1347 = sor.u32 256, 16
        %1348 = vbcast.lane.b32.xlu0 %v1338, %s1347
        %v1349 = vpop.permute.xlu0 %1348
        %s1351 = sor.u32 256, 24
        %1352 = vbcast.lane.b32.xlu0 %v1338, %s1351
        %v1353 = vpop.permute.xlu0 %1352
        %s1355 = sor.u32 256, 32
        %1356 = vbcast.lane.b32.xlu0 %v1338, %s1355
        %v1357 = vpop.permute.xlu0 %1356
        %s1359 = sor.u32 256, 40
        %1360 = vbcast.lane.b32.xlu0 %v1338, %s1359
        %v1361 = vpop.permute.xlu0 %1360
        %s1363 = sor.u32 256, 48
        %1364 = vbcast.lane.b32.xlu0 %v1338, %s1363
        %v1365 = vpop.permute.xlu0 %1364
        %s1367 = sor.u32 256, 56
        %1368 = vbcast.lane.b32.xlu0 %v1338, %s1367
        %v1369 = vpop.permute.xlu0 %1368
        %s1371 = sor.u32 256, 64
        %1372 = vbcast.lane.b32.xlu0 %v1338, %s1371
        %v1373 = vpop.permute.xlu0 %1372
        %s1375 = sor.u32 256, 72
        %1376 = vbcast.lane.b32.xlu0 %v1338, %s1375
        %v1377 = vpop.permute.xlu0 %1376
        %s1379 = sor.u32 256, 80
        %1380 = vbcast.lane.b32.xlu0 %v1338, %s1379
        %v1381 = vpop.permute.xlu0 %1380
        %s1383 = sor.u32 256, 88
        %1384 = vbcast.lane.b32.xlu0 %v1338, %s1383
        %v1385 = vpop.permute.xlu0 %1384
        %s1387 = sor.u32 256, 96
        %1388 = vbcast.lane.b32.xlu0 %v1338, %s1387
        %v1389 = vpop.permute.xlu0 %1388
        %s1391 = sor.u32 256, 104
        %1392 = vbcast.lane.b32.xlu0 %v1338, %s1391
        %v1393 = vpop.permute.xlu0 %1392
        %s1395 = sor.u32 256, 112
        %1396 = vbcast.lane.b32.xlu0 %v1338, %s1395
        %v1397 = vpop.permute.xlu0 %1396
        %s1399 = sor.u32 256, 120
        %1400 = vbcast.lane.b32.xlu0 %v1338, %s1399
        %v1401 = vpop.permute.xlu0 %1400
        %v1402 = vlaneseq
        %v1403 = vshrl.u32 %v1402, 7
        %v1404 = vsub.s32 3, %v1403
        %v1405 = vrot.slane %v123, %v1404
        %1407 = vbcast.lane.b32.xlu0 %v1405, 256
        %v1408 = vpop.permute.xlu0 %1407
        %s1410 = sor.u32 256, 8
        %1411 = vbcast.lane.b32.xlu0 %v1405, %s1410
        %v1412 = vpop.permute.xlu0 %1411
        %s1414 = sor.u32 256, 16
        %1415 = vbcast.lane.b32.xlu0 %v1405, %s1414
        %v1416 = vpop.permute.xlu0 %1415
        %s1418 = sor.u32 256, 24
        %1419 = vbcast.lane.b32.xlu0 %v1405, %s1418
        %v1420 = vpop.permute.xlu0 %1419
        %s1422 = sor.u32 256, 32
        %1423 = vbcast.lane.b32.xlu0 %v1405, %s1422
        %v1424 = vpop.permute.xlu0 %1423
        %s1426 = sor.u32 256, 40
        %1427 = vbcast.lane.b32.xlu0 %v1405, %s1426
        %v1428 = vpop.permute.xlu0 %1427
        %s1430 = sor.u32 256, 48
        %1431 = vbcast.lane.b32.xlu0 %v1405, %s1430
        %v1432 = vpop.permute.xlu0 %1431
        %s1434 = sor.u32 256, 56
        %1435 = vbcast.lane.b32.xlu0 %v1405, %s1434
        %v1436 = vpop.permute.xlu0 %1435
        %s1438 = sor.u32 256, 64
        %1439 = vbcast.lane.b32.xlu0 %v1405, %s1438
        %v1440 = vpop.permute.xlu0 %1439
        %s1442 = sor.u32 256, 72
        %1443 = vbcast.lane.b32.xlu0 %v1405, %s1442
        %v1444 = vpop.permute.xlu0 %1443
        %s1446 = sor.u32 256, 80
        %1447 = vbcast.lane.b32.xlu0 %v1405, %s1446
        %v1448 = vpop.permute.xlu0 %1447
        %s1450 = sor.u32 256, 88
        %1451 = vbcast.lane.b32.xlu0 %v1405, %s1450
        %v1452 = vpop.permute.xlu0 %1451
        %s1454 = sor.u32 256, 96
        %1455 = vbcast.lane.b32.xlu0 %v1405, %s1454
        %v1456 = vpop.permute.xlu0 %1455
        %s1458 = sor.u32 256, 104
        %1459 = vbcast.lane.b32.xlu0 %v1405, %s1458
        %v1460 = vpop.permute.xlu0 %1459
        %s1462 = sor.u32 256, 112
        %1463 = vbcast.lane.b32.xlu0 %v1405, %s1462
        %v1464 = vpop.permute.xlu0 %1463
        %s1466 = sor.u32 256, 120
        %1467 = vbcast.lane.b32.xlu0 %v1405, %s1466
        %v1468 = vpop.permute.xlu0 %1467
        %v1469 = vlaneseq
        %v1470 = vshrl.u32 %v1469, 7
        %v1471 = vsub.s32 4, %v1470
        %v1472 = vrot.slane %v123, %v1471
        %1474 = vbcast.lane.b32.xlu0 %v1472, 256
        %v1475 = vpop.permute.xlu0 %1474
        %s1477 = sor.u32 256, 8
        %1478 = vbcast.lane.b32.xlu0 %v1472, %s1477
        %v1479 = vpop.permute.xlu0 %1478
        %s1481 = sor.u32 256, 16
        %1482 = vbcast.lane.b32.xlu0 %v1472, %s1481
        %v1483 = vpop.permute.xlu0 %1482
        %s1485 = sor.u32 256, 24
        %1486 = vbcast.lane.b32.xlu0 %v1472, %s1485
        %v1487 = vpop.permute.xlu0 %1486
        %s1489 = sor.u32 256, 32
        %1490 = vbcast.lane.b32.xlu0 %v1472, %s1489
        %v1491 = vpop.permute.xlu0 %1490
        %s1493 = sor.u32 256, 40
        %1494 = vbcast.lane.b32.xlu0 %v1472, %s1493
        %v1495 = vpop.permute.xlu0 %1494
        %s1497 = sor.u32 256, 48
        %1498 = vbcast.lane.b32.xlu0 %v1472, %s1497
        %v1499 = vpop.permute.xlu0 %1498
        %s1501 = sor.u32 256, 56
        %1502 = vbcast.lane.b32.xlu0 %v1472, %s1501
        %v1503 = vpop.permute.xlu0 %1502
        %s1505 = sor.u32 256, 64
        %1506 = vbcast.lane.b32.xlu0 %v1472, %s1505
        %v1507 = vpop.permute.xlu0 %1506
        %s1509 = sor.u32 256, 72
        %1510 = vbcast.lane.b32.xlu0 %v1472, %s1509
        %v1511 = vpop.permute.xlu0 %1510
        %s1513 = sor.u32 256, 80
        %1514 = vbcast.lane.b32.xlu0 %v1472, %s1513
        %v1515 = vpop.permute.xlu0 %1514
        %s1517 = sor.u32 256, 88
        %1518 = vbcast.lane.b32.xlu0 %v1472, %s1517
        %v1519 = vpop.permute.xlu0 %1518
        %s1521 = sor.u32 256, 96
        %1522 = vbcast.lane.b32.xlu0 %v1472, %s1521
        %v1523 = vpop.permute.xlu0 %1522
        %s1525 = sor.u32 256, 104
        %1526 = vbcast.lane.b32.xlu0 %v1472, %s1525
        %v1527 = vpop.permute.xlu0 %1526
        %s1529 = sor.u32 256, 112
        %1530 = vbcast.lane.b32.xlu0 %v1472, %s1529
        %v1531 = vpop.permute.xlu0 %1530
        %s1533 = sor.u32 256, 120
        %1534 = vbcast.lane.b32.xlu0 %v1472, %s1533
        %v1535 = vpop.permute.xlu0 %1534
        %v1536 = vlaneseq
        %v1537 = vshrl.u32 %v1536, 7
        %v1538 = vsub.s32 5, %v1537
        %v1539 = vrot.slane %v123, %v1538
        %1541 = vbcast.lane.b32.xlu0 %v1539, 256
        %v1542 = vpop.permute.xlu0 %1541
        %s1544 = sor.u32 256, 8
        %1545 = vbcast.lane.b32.xlu0 %v1539, %s1544
        %v1546 = vpop.permute.xlu0 %1545
        %s1548 = sor.u32 256, 16
        %1549 = vbcast.lane.b32.xlu0 %v1539, %s1548
        %v1550 = vpop.permute.xlu0 %1549
        %s1552 = sor.u32 256, 24
        %1553 = vbcast.lane.b32.xlu0 %v1539, %s1552
        %v1554 = vpop.permute.xlu0 %1553
        %s1556 = sor.u32 256, 32
        %1557 = vbcast.lane.b32.xlu0 %v1539, %s1556
        %v1558 = vpop.permute.xlu0 %1557
        %s1560 = sor.u32 256, 40
        %1561 = vbcast.lane.b32.xlu0 %v1539, %s1560
        %v1562 = vpop.permute.xlu0 %1561
        %s1564 = sor.u32 256, 48
        %1565 = vbcast.lane.b32.xlu0 %v1539, %s1564
        %v1566 = vpop.permute.xlu0 %1565
        %s1568 = sor.u32 256, 56
        %1569 = vbcast.lane.b32.xlu0 %v1539, %s1568
        %v1570 = vpop.permute.xlu0 %1569
        %s1572 = sor.u32 256, 64
        %1573 = vbcast.lane.b32.xlu0 %v1539, %s1572
        %v1574 = vpop.permute.xlu0 %1573
        %s1576 = sor.u32 256, 72
        %1577 = vbcast.lane.b32.xlu0 %v1539, %s1576
        %v1578 = vpop.permute.xlu0 %1577
        %s1580 = sor.u32 256, 80
        %1581 = vbcast.lane.b32.xlu0 %v1539, %s1580
        %v1582 = vpop.permute.xlu0 %1581
        %s1584 = sor.u32 256, 88
        %1585 = vbcast.lane.b32.xlu0 %v1539, %s1584
        %v1586 = vpop.permute.xlu0 %1585
        %s1588 = sor.u32 256, 96
        %1589 = vbcast.lane.b32.xlu0 %v1539, %s1588
        %v1590 = vpop.permute.xlu0 %1589
        %s1592 = sor.u32 256, 104
        %1593 = vbcast.lane.b32.xlu0 %v1539, %s1592
        %v1594 = vpop.permute.xlu0 %1593
        %s1596 = sor.u32 256, 112
        %1597 = vbcast.lane.b32.xlu0 %v1539, %s1596
        %v1598 = vpop.permute.xlu0 %1597
        %s1600 = sor.u32 256, 120
        %1601 = vbcast.lane.b32.xlu0 %v1539, %s1600
        %v1602 = vpop.permute.xlu0 %1601
        %v1603 = vlaneseq
        %v1604 = vshrl.u32 %v1603, 7
        %v1605 = vsub.s32 6, %v1604
        %v1606 = vrot.slane %v123, %v1605
        %1608 = vbcast.lane.b32.xlu0 %v1606, 256
        %v1609 = vpop.permute.xlu0 %1608
        %s1611 = sor.u32 256, 8
        %1612 = vbcast.lane.b32.xlu0 %v1606, %s1611
        %v1613 = vpop.permute.xlu0 %1612
        %s1615 = sor.u32 256, 16
        %1616 = vbcast.lane.b32.xlu0 %v1606, %s1615
        %v1617 = vpop.permute.xlu0 %1616
        %s1619 = sor.u32 256, 24
        %1620 = vbcast.lane.b32.xlu0 %v1606, %s1619
        %v1621 = vpop.permute.xlu0 %1620
        %s1623 = sor.u32 256, 32
        %1624 = vbcast.lane.b32.xlu0 %v1606, %s1623
        %v1625 = vpop.permute.xlu0 %1624
        %s1627 = sor.u32 256, 40
        %1628 = vbcast.lane.b32.xlu0 %v1606, %s1627
        %v1629 = vpop.permute.xlu0 %1628
        %s1631 = sor.u32 256, 48
        %1632 = vbcast.lane.b32.xlu0 %v1606, %s1631
        %v1633 = vpop.permute.xlu0 %1632
        %s1635 = sor.u32 256, 56
        %1636 = vbcast.lane.b32.xlu0 %v1606, %s1635
        %v1637 = vpop.permute.xlu0 %1636
        %s1639 = sor.u32 256, 64
        %1640 = vbcast.lane.b32.xlu0 %v1606, %s1639
        %v1641 = vpop.permute.xlu0 %1640
        %s1643 = sor.u32 256, 72
        %1644 = vbcast.lane.b32.xlu0 %v1606, %s1643
        %v1645 = vpop.permute.xlu0 %1644
        %s1647 = sor.u32 256, 80
        %1648 = vbcast.lane.b32.xlu0 %v1606, %s1647
        %v1649 = vpop.permute.xlu0 %1648
        %s1651 = sor.u32 256, 88
        %1652 = vbcast.lane.b32.xlu0 %v1606, %s1651
        %v1653 = vpop.permute.xlu0 %1652
        %s1655 = sor.u32 256, 96
        %1656 = vbcast.lane.b32.xlu0 %v1606, %s1655
        %v1657 = vpop.permute.xlu0 %1656
        %s1659 = sor.u32 256, 104
        %1660 = vbcast.lane.b32.xlu0 %v1606, %s1659
        %v1661 = vpop.permute.xlu0 %1660
        %s1663 = sor.u32 256, 112
        %1664 = vbcast.lane.b32.xlu0 %v1606, %s1663
        %v1665 = vpop.permute.xlu0 %1664
        %s1667 = sor.u32 256, 120
        %1668 = vbcast.lane.b32.xlu0 %v1606, %s1667
        %v1669 = vpop.permute.xlu0 %1668
        %v1670 = vlaneseq
        %v1671 = vshrl.u32 %v1670, 7
        %v1672 = vsub.s32 7, %v1671
        %v1673 = vrot.slane %v123, %v1672
        %1675 = vbcast.lane.b32.xlu0 %v1673, 256
        %v1676 = vpop.permute.xlu0 %1675
        %s1678 = sor.u32 256, 8
        %1679 = vbcast.lane.b32.xlu0 %v1673, %s1678
        %v1680 = vpop.permute.xlu0 %1679
        %s1682 = sor.u32 256, 16
        %1683 = vbcast.lane.b32.xlu0 %v1673, %s1682
        %v1684 = vpop.permute.xlu0 %1683
        %s1686 = sor.u32 256, 24
        %1687 = vbcast.lane.b32.xlu0 %v1673, %s1686
        %v1688 = vpop.permute.xlu0 %1687
        %s1690 = sor.u32 256, 32
        %1691 = vbcast.lane.b32.xlu0 %v1673, %s1690
        %v1692 = vpop.permute.xlu0 %1691
        %s1694 = sor.u32 256, 40
        %1695 = vbcast.lane.b32.xlu0 %v1673, %s1694
        %v1696 = vpop.permute.xlu0 %1695
        %s1698 = sor.u32 256, 48
        %1699 = vbcast.lane.b32.xlu0 %v1673, %s1698
        %v1700 = vpop.permute.xlu0 %1699
        %s1702 = sor.u32 256, 56
        %1703 = vbcast.lane.b32.xlu0 %v1673, %s1702
        %v1704 = vpop.permute.xlu0 %1703
        %s1706 = sor.u32 256, 64
        %1707 = vbcast.lane.b32.xlu0 %v1673, %s1706
        %v1708 = vpop.permute.xlu0 %1707
        %s1710 = sor.u32 256, 72
        %1711 = vbcast.lane.b32.xlu0 %v1673, %s1710
        %v1712 = vpop.permute.xlu0 %1711
        %s1714 = sor.u32 256, 80
        %1715 = vbcast.lane.b32.xlu0 %v1673, %s1714
        %v1716 = vpop.permute.xlu0 %1715
        %s1718 = sor.u32 256, 88
        %1719 = vbcast.lane.b32.xlu0 %v1673, %s1718
        %v1720 = vpop.permute.xlu0 %1719
        %s1722 = sor.u32 256, 96
        %1723 = vbcast.lane.b32.xlu0 %v1673, %s1722
        %v1724 = vpop.permute.xlu0 %1723
        %s1726 = sor.u32 256, 104
        %1727 = vbcast.lane.b32.xlu0 %v1673, %s1726
        %v1728 = vpop.permute.xlu0 %1727
        %s1730 = sor.u32 256, 112
        %1731 = vbcast.lane.b32.xlu0 %v1673, %s1730
        %v1732 = vpop.permute.xlu0 %1731
        %s1734 = sor.u32 256, 120
        %1735 = vbcast.lane.b32.xlu0 %v1673, %s1734
        %v1736 = vpop.permute.xlu0 %1735
        %v1737 = vlaneseq
        %v1738 = vshrl.u32 %v1737, 7
        %v1739 = vsub.s32 0, %v1738
        %v1740 = vrot.slane %v124, %v1739
        %1742 = vbcast.lane.b32.xlu0 %v1740, 256
        %v1743 = vpop.permute.xlu0 %1742
        %s1745 = sor.u32 256, 8
        %1746 = vbcast.lane.b32.xlu0 %v1740, %s1745
        %v1747 = vpop.permute.xlu0 %1746
        %s1749 = sor.u32 256, 16
        %1750 = vbcast.lane.b32.xlu0 %v1740, %s1749
        %v1751 = vpop.permute.xlu0 %1750
        %s1753 = sor.u32 256, 24
        %1754 = vbcast.lane.b32.xlu0 %v1740, %s1753
        %v1755 = vpop.permute.xlu0 %1754
        %s1757 = sor.u32 256, 32
        %1758 = vbcast.lane.b32.xlu0 %v1740, %s1757
        %v1759 = vpop.permute.xlu0 %1758
        %s1761 = sor.u32 256, 40
        %1762 = vbcast.lane.b32.xlu0 %v1740, %s1761
        %v1763 = vpop.permute.xlu0 %1762
        %s1765 = sor.u32 256, 48
        %1766 = vbcast.lane.b32.xlu0 %v1740, %s1765
        %v1767 = vpop.permute.xlu0 %1766
        %s1769 = sor.u32 256, 56
        %1770 = vbcast.lane.b32.xlu0 %v1740, %s1769
        %v1771 = vpop.permute.xlu0 %1770
        %s1773 = sor.u32 256, 64
        %1774 = vbcast.lane.b32.xlu0 %v1740, %s1773
        %v1775 = vpop.permute.xlu0 %1774
        %s1777 = sor.u32 256, 72
        %1778 = vbcast.lane.b32.xlu0 %v1740, %s1777
        %v1779 = vpop.permute.xlu0 %1778
        %s1781 = sor.u32 256, 80
        %1782 = vbcast.lane.b32.xlu0 %v1740, %s1781
        %v1783 = vpop.permute.xlu0 %1782
        %s1785 = sor.u32 256, 88
        %1786 = vbcast.lane.b32.xlu0 %v1740, %s1785
        %v1787 = vpop.permute.xlu0 %1786
        %s1789 = sor.u32 256, 96
        %1790 = vbcast.lane.b32.xlu0 %v1740, %s1789
        %v1791 = vpop.permute.xlu0 %1790
        %s1793 = sor.u32 256, 104
        %1794 = vbcast.lane.b32.xlu0 %v1740, %s1793
        %v1795 = vpop.permute.xlu0 %1794
        %s1797 = sor.u32 256, 112
        %1798 = vbcast.lane.b32.xlu0 %v1740, %s1797
        %v1799 = vpop.permute.xlu0 %1798
        %s1801 = sor.u32 256, 120
        %1802 = vbcast.lane.b32.xlu0 %v1740, %s1801
        %v1803 = vpop.permute.xlu0 %1802
        %v1804 = vlaneseq
        %v1805 = vshrl.u32 %v1804, 7
        %v1806 = vsub.s32 1, %v1805
        %v1807 = vrot.slane %v124, %v1806
        %1809 = vbcast.lane.b32.xlu0 %v1807, 256
        %v1810 = vpop.permute.xlu0 %1809
        %s1812 = sor.u32 256, 8
        %1813 = vbcast.lane.b32.xlu0 %v1807, %s1812
        %v1814 = vpop.permute.xlu0 %1813
        %s1816 = sor.u32 256, 16
        %1817 = vbcast.lane.b32.xlu0 %v1807, %s1816
        %v1818 = vpop.permute.xlu0 %1817
        %s1820 = sor.u32 256, 24
        %1821 = vbcast.lane.b32.xlu0 %v1807, %s1820
        %v1822 = vpop.permute.xlu0 %1821
        %s1824 = sor.u32 256, 32
        %1825 = vbcast.lane.b32.xlu0 %v1807, %s1824
        %v1826 = vpop.permute.xlu0 %1825
        %s1828 = sor.u32 256, 40
        %1829 = vbcast.lane.b32.xlu0 %v1807, %s1828
        %v1830 = vpop.permute.xlu0 %1829
        %s1832 = sor.u32 256, 48
        %1833 = vbcast.lane.b32.xlu0 %v1807, %s1832
        %v1834 = vpop.permute.xlu0 %1833
        %s1836 = sor.u32 256, 56
        %1837 = vbcast.lane.b32.xlu0 %v1807, %s1836
        %v1838 = vpop.permute.xlu0 %1837
        %s1840 = sor.u32 256, 64
        %1841 = vbcast.lane.b32.xlu0 %v1807, %s1840
        %v1842 = vpop.permute.xlu0 %1841
        %s1844 = sor.u32 256, 72
        %1845 = vbcast.lane.b32.xlu0 %v1807, %s1844
        %v1846 = vpop.permute.xlu0 %1845
        %s1848 = sor.u32 256, 80
        %1849 = vbcast.lane.b32.xlu0 %v1807, %s1848
        %v1850 = vpop.permute.xlu0 %1849
        %s1852 = sor.u32 256, 88
        %1853 = vbcast.lane.b32.xlu0 %v1807, %s1852
        %v1854 = vpop.permute.xlu0 %1853
        %s1856 = sor.u32 256, 96
        %1857 = vbcast.lane.b32.xlu0 %v1807, %s1856
        %v1858 = vpop.permute.xlu0 %1857
        %s1860 = sor.u32 256, 104
        %1861 = vbcast.lane.b32.xlu0 %v1807, %s1860
        %v1862 = vpop.permute.xlu0 %1861
        %s1864 = sor.u32 256, 112
        %1865 = vbcast.lane.b32.xlu0 %v1807, %s1864
        %v1866 = vpop.permute.xlu0 %1865
        %s1868 = sor.u32 256, 120
        %1869 = vbcast.lane.b32.xlu0 %v1807, %s1868
        %v1870 = vpop.permute.xlu0 %1869
        %v1871 = vlaneseq
        %v1872 = vshrl.u32 %v1871, 7
        %v1873 = vsub.s32 2, %v1872
        %v1874 = vrot.slane %v124, %v1873
        %1876 = vbcast.lane.b32.xlu0 %v1874, 256
        %v1877 = vpop.permute.xlu0 %1876
        %s1879 = sor.u32 256, 8
        %1880 = vbcast.lane.b32.xlu0 %v1874, %s1879
        %v1881 = vpop.permute.xlu0 %1880
        %s1883 = sor.u32 256, 16
        %1884 = vbcast.lane.b32.xlu0 %v1874, %s1883
        %v1885 = vpop.permute.xlu0 %1884
        %s1887 = sor.u32 256, 24
        %1888 = vbcast.lane.b32.xlu0 %v1874, %s1887
        %v1889 = vpop.permute.xlu0 %1888
        %s1891 = sor.u32 256, 32
        %1892 = vbcast.lane.b32.xlu0 %v1874, %s1891
        %v1893 = vpop.permute.xlu0 %1892
        %s1895 = sor.u32 256, 40
        %1896 = vbcast.lane.b32.xlu0 %v1874, %s1895
        %v1897 = vpop.permute.xlu0 %1896
        %s1899 = sor.u32 256, 48
        %1900 = vbcast.lane.b32.xlu0 %v1874, %s1899
        %v1901 = vpop.permute.xlu0 %1900
        %s1903 = sor.u32 256, 56
        %1904 = vbcast.lane.b32.xlu0 %v1874, %s1903
        %v1905 = vpop.permute.xlu0 %1904
        %s1907 = sor.u32 256, 64
        %1908 = vbcast.lane.b32.xlu0 %v1874, %s1907
        %v1909 = vpop.permute.xlu0 %1908
        %s1911 = sor.u32 256, 72
        %1912 = vbcast.lane.b32.xlu0 %v1874, %s1911
        %v1913 = vpop.permute.xlu0 %1912
        %s1915 = sor.u32 256, 80
        %1916 = vbcast.lane.b32.xlu0 %v1874, %s1915
        %v1917 = vpop.permute.xlu0 %1916
        %s1919 = sor.u32 256, 88
        %1920 = vbcast.lane.b32.xlu0 %v1874, %s1919
        %v1921 = vpop.permute.xlu0 %1920
        %s1923 = sor.u32 256, 96
        %1924 = vbcast.lane.b32.xlu0 %v1874, %s1923
        %v1925 = vpop.permute.xlu0 %1924
        %s1927 = sor.u32 256, 104
        %1928 = vbcast.lane.b32.xlu0 %v1874, %s1927
        %v1929 = vpop.permute.xlu0 %1928
        %s1931 = sor.u32 256, 112
        %1932 = vbcast.lane.b32.xlu0 %v1874, %s1931
        %v1933 = vpop.permute.xlu0 %1932
        %s1935 = sor.u32 256, 120
        %1936 = vbcast.lane.b32.xlu0 %v1874, %s1935
        %v1937 = vpop.permute.xlu0 %1936
        %v1938 = vlaneseq
        %v1939 = vshrl.u32 %v1938, 7
        %v1940 = vsub.s32 3, %v1939
        %v1941 = vrot.slane %v124, %v1940
        %1943 = vbcast.lane.b32.xlu0 %v1941, 256
        %v1944 = vpop.permute.xlu0 %1943
        %s1946 = sor.u32 256, 8
        %1947 = vbcast.lane.b32.xlu0 %v1941, %s1946
        %v1948 = vpop.permute.xlu0 %1947
        %s1950 = sor.u32 256, 16
        %1951 = vbcast.lane.b32.xlu0 %v1941, %s1950
        %v1952 = vpop.permute.xlu0 %1951
        %s1954 = sor.u32 256, 24
        %1955 = vbcast.lane.b32.xlu0 %v1941, %s1954
        %v1956 = vpop.permute.xlu0 %1955
        %s1958 = sor.u32 256, 32
        %1959 = vbcast.lane.b32.xlu0 %v1941, %s1958
        %v1960 = vpop.permute.xlu0 %1959
        %s1962 = sor.u32 256, 40
        %1963 = vbcast.lane.b32.xlu0 %v1941, %s1962
        %v1964 = vpop.permute.xlu0 %1963
        %s1966 = sor.u32 256, 48
        %1967 = vbcast.lane.b32.xlu0 %v1941, %s1966
        %v1968 = vpop.permute.xlu0 %1967
        %s1970 = sor.u32 256, 56
        %1971 = vbcast.lane.b32.xlu0 %v1941, %s1970
        %v1972 = vpop.permute.xlu0 %1971
        %s1974 = sor.u32 256, 64
        %1975 = vbcast.lane.b32.xlu0 %v1941, %s1974
        %v1976 = vpop.permute.xlu0 %1975
        %s1978 = sor.u32 256, 72
        %1979 = vbcast.lane.b32.xlu0 %v1941, %s1978
        %v1980 = vpop.permute.xlu0 %1979
        %s1982 = sor.u32 256, 80
        %1983 = vbcast.lane.b32.xlu0 %v1941, %s1982
        %v1984 = vpop.permute.xlu0 %1983
        %s1986 = sor.u32 256, 88
        %1987 = vbcast.lane.b32.xlu0 %v1941, %s1986
        %v1988 = vpop.permute.xlu0 %1987
        %s1990 = sor.u32 256, 96
        %1991 = vbcast.lane.b32.xlu0 %v1941, %s1990
        %v1992 = vpop.permute.xlu0 %1991
        %s1994 = sor.u32 256, 104
        %1995 = vbcast.lane.b32.xlu0 %v1941, %s1994
        %v1996 = vpop.permute.xlu0 %1995
        %s1998 = sor.u32 256, 112
        %1999 = vbcast.lane.b32.xlu0 %v1941, %s1998
        %v2000 = vpop.permute.xlu0 %1999
        %s2002 = sor.u32 256, 120
        %2003 = vbcast.lane.b32.xlu0 %v1941, %s2002
        %v2004 = vpop.permute.xlu0 %2003
        %v2005 = vlaneseq
        %v2006 = vshrl.u32 %v2005, 7
        %v2007 = vsub.s32 4, %v2006
        %v2008 = vrot.slane %v124, %v2007
        %2010 = vbcast.lane.b32.xlu0 %v2008, 256
        %v2011 = vpop.permute.xlu0 %2010
        %s2013 = sor.u32 256, 8
        %2014 = vbcast.lane.b32.xlu0 %v2008, %s2013
        %v2015 = vpop.permute.xlu0 %2014
        %s2017 = sor.u32 256, 16
        %2018 = vbcast.lane.b32.xlu0 %v2008, %s2017
        %v2019 = vpop.permute.xlu0 %2018
        %s2021 = sor.u32 256, 24
        %2022 = vbcast.lane.b32.xlu0 %v2008, %s2021
        %v2023 = vpop.permute.xlu0 %2022
        %s2025 = sor.u32 256, 32
        %2026 = vbcast.lane.b32.xlu0 %v2008, %s2025
        %v2027 = vpop.permute.xlu0 %2026
        %s2029 = sor.u32 256, 40
        %2030 = vbcast.lane.b32.xlu0 %v2008, %s2029
        %v2031 = vpop.permute.xlu0 %2030
        %s2033 = sor.u32 256, 48
        %2034 = vbcast.lane.b32.xlu0 %v2008, %s2033
        %v2035 = vpop.permute.xlu0 %2034
        %s2037 = sor.u32 256, 56
        %2038 = vbcast.lane.b32.xlu0 %v2008, %s2037
        %v2039 = vpop.permute.xlu0 %2038
        %s2041 = sor.u32 256, 64
        %2042 = vbcast.lane.b32.xlu0 %v2008, %s2041
        %v2043 = vpop.permute.xlu0 %2042
        %s2045 = sor.u32 256, 72
        %2046 = vbcast.lane.b32.xlu0 %v2008, %s2045
        %v2047 = vpop.permute.xlu0 %2046
        %s2049 = sor.u32 256, 80
        %2050 = vbcast.lane.b32.xlu0 %v2008, %s2049
        %v2051 = vpop.permute.xlu0 %2050
        %s2053 = sor.u32 256, 88
        %2054 = vbcast.lane.b32.xlu0 %v2008, %s2053
        %v2055 = vpop.permute.xlu0 %2054
        %s2057 = sor.u32 256, 96
        %2058 = vbcast.lane.b32.xlu0 %v2008, %s2057
        %v2059 = vpop.permute.xlu0 %2058
        %s2061 = sor.u32 256, 104
        %2062 = vbcast.lane.b32.xlu0 %v2008, %s2061
        %v2063 = vpop.permute.xlu0 %2062
        %s2065 = sor.u32 256, 112
        %2066 = vbcast.lane.b32.xlu0 %v2008, %s2065
        %v2067 = vpop.permute.xlu0 %2066
        %s2069 = sor.u32 256, 120
        %2070 = vbcast.lane.b32.xlu0 %v2008, %s2069
        %v2071 = vpop.permute.xlu0 %2070
        %v2072 = vlaneseq
        %v2073 = vshrl.u32 %v2072, 7
        %v2074 = vsub.s32 5, %v2073
        %v2075 = vrot.slane %v124, %v2074
        %2077 = vbcast.lane.b32.xlu0 %v2075, 256
        %v2078 = vpop.permute.xlu0 %2077
        %s2080 = sor.u32 256, 8
        %2081 = vbcast.lane.b32.xlu0 %v2075, %s2080
        %v2082 = vpop.permute.xlu0 %2081
        %s2084 = sor.u32 256, 16
        %2085 = vbcast.lane.b32.xlu0 %v2075, %s2084
        %v2086 = vpop.permute.xlu0 %2085
        %s2088 = sor.u32 256, 24
        %2089 = vbcast.lane.b32.xlu0 %v2075, %s2088
        %v2090 = vpop.permute.xlu0 %2089
        %s2092 = sor.u32 256, 32
        %2093 = vbcast.lane.b32.xlu0 %v2075, %s2092
        %v2094 = vpop.permute.xlu0 %2093
        %s2096 = sor.u32 256, 40
        %2097 = vbcast.lane.b32.xlu0 %v2075, %s2096
        %v2098 = vpop.permute.xlu0 %2097
        %s2100 = sor.u32 256, 48
        %2101 = vbcast.lane.b32.xlu0 %v2075, %s2100
        %v2102 = vpop.permute.xlu0 %2101
        %s2104 = sor.u32 256, 56
        %2105 = vbcast.lane.b32.xlu0 %v2075, %s2104
        %v2106 = vpop.permute.xlu0 %2105
        %s2108 = sor.u32 256, 64
        %2109 = vbcast.lane.b32.xlu0 %v2075, %s2108
        %v2110 = vpop.permute.xlu0 %2109
        %s2112 = sor.u32 256, 72
        %2113 = vbcast.lane.b32.xlu0 %v2075, %s2112
        %v2114 = vpop.permute.xlu0 %2113
        %s2116 = sor.u32 256, 80
        %2117 = vbcast.lane.b32.xlu0 %v2075, %s2116
        %v2118 = vpop.permute.xlu0 %2117
        %s2120 = sor.u32 256, 88
        %2121 = vbcast.lane.b32.xlu0 %v2075, %s2120
        %v2122 = vpop.permute.xlu0 %2121
        %s2124 = sor.u32 256, 96
        %2125 = vbcast.lane.b32.xlu0 %v2075, %s2124
        %v2126 = vpop.permute.xlu0 %2125
        %s2128 = sor.u32 256, 104
        %2129 = vbcast.lane.b32.xlu0 %v2075, %s2128
        %v2130 = vpop.permute.xlu0 %2129
        %s2132 = sor.u32 256, 112
        %2133 = vbcast.lane.b32.xlu0 %v2075, %s2132
        %v2134 = vpop.permute.xlu0 %2133
        %s2136 = sor.u32 256, 120
        %2137 = vbcast.lane.b32.xlu0 %v2075, %s2136
        %v2138 = vpop.permute.xlu0 %2137
        %v2139 = vlaneseq
        %v2140 = vshrl.u32 %v2139, 7
        %v2141 = vsub.s32 6, %v2140
        %v2142 = vrot.slane %v124, %v2141
        %2144 = vbcast.lane.b32.xlu0 %v2142, 256
        %v2145 = vpop.permute.xlu0 %2144
        %s2147 = sor.u32 256, 8
        %2148 = vbcast.lane.b32.xlu0 %v2142, %s2147
        %v2149 = vpop.permute.xlu0 %2148
        %s2151 = sor.u32 256, 16
        %2152 = vbcast.lane.b32.xlu0 %v2142, %s2151
        %v2153 = vpop.permute.xlu0 %2152
        %s2155 = sor.u32 256, 24
        %2156 = vbcast.lane.b32.xlu0 %v2142, %s2155
        %v2157 = vpop.permute.xlu0 %2156
        %s2159 = sor.u32 256, 32
        %2160 = vbcast.lane.b32.xlu0 %v2142, %s2159
        %v2161 = vpop.permute.xlu0 %2160
        %s2163 = sor.u32 256, 40
        %2164 = vbcast.lane.b32.xlu0 %v2142, %s2163
        %v2165 = vpop.permute.xlu0 %2164
        %s2167 = sor.u32 256, 48
        %2168 = vbcast.lane.b32.xlu0 %v2142, %s2167
        %v2169 = vpop.permute.xlu0 %2168
        %s2171 = sor.u32 256, 56
        %2172 = vbcast.lane.b32.xlu0 %v2142, %s2171
        %v2173 = vpop.permute.xlu0 %2172
        %s2175 = sor.u32 256, 64
        %2176 = vbcast.lane.b32.xlu0 %v2142, %s2175
        %v2177 = vpop.permute.xlu0 %2176
        %s2179 = sor.u32 256, 72
        %2180 = vbcast.lane.b32.xlu0 %v2142, %s2179
        %v2181 = vpop.permute.xlu0 %2180
        %s2183 = sor.u32 256, 80
        %2184 = vbcast.lane.b32.xlu0 %v2142, %s2183
        %v2185 = vpop.permute.xlu0 %2184
        %s2187 = sor.u32 256, 88
        %2188 = vbcast.lane.b32.xlu0 %v2142, %s2187
        %v2189 = vpop.permute.xlu0 %2188
        %s2191 = sor.u32 256, 96
        %2192 = vbcast.lane.b32.xlu0 %v2142, %s2191
        %v2193 = vpop.permute.xlu0 %2192
        %s2195 = sor.u32 256, 104
        %2196 = vbcast.lane.b32.xlu0 %v2142, %s2195
        %v2197 = vpop.permute.xlu0 %2196
        %s2199 = sor.u32 256, 112
        %2200 = vbcast.lane.b32.xlu0 %v2142, %s2199
        %v2201 = vpop.permute.xlu0 %2200
        %s2203 = sor.u32 256, 120
        %2204 = vbcast.lane.b32.xlu0 %v2142, %s2203
        %v2205 = vpop.permute.xlu0 %2204
        %v2206 = vlaneseq
        %v2207 = vshrl.u32 %v2206, 7
        %v2208 = vsub.s32 7, %v2207
        %v2209 = vrot.slane %v124, %v2208
        %2211 = vbcast.lane.b32.xlu0 %v2209, 256
        %v2212 = vpop.permute.xlu0 %2211
        %s2214 = sor.u32 256, 8
        %2215 = vbcast.lane.b32.xlu0 %v2209, %s2214
        %v2216 = vpop.permute.xlu0 %2215
        %s2218 = sor.u32 256, 16
        %2219 = vbcast.lane.b32.xlu0 %v2209, %s2218
        %v2220 = vpop.permute.xlu0 %2219
        %s2222 = sor.u32 256, 24
        %2223 = vbcast.lane.b32.xlu0 %v2209, %s2222
        %v2224 = vpop.permute.xlu0 %2223
        %s2226 = sor.u32 256, 32
        %2227 = vbcast.lane.b32.xlu0 %v2209, %s2226
        %v2228 = vpop.permute.xlu0 %2227
        %s2230 = sor.u32 256, 40
        %2231 = vbcast.lane.b32.xlu0 %v2209, %s2230
        %v2232 = vpop.permute.xlu0 %2231
        %s2234 = sor.u32 256, 48
        %2235 = vbcast.lane.b32.xlu0 %v2209, %s2234
        %v2236 = vpop.permute.xlu0 %2235
        %s2238 = sor.u32 256, 56
        %2239 = vbcast.lane.b32.xlu0 %v2209, %s2238
        %v2240 = vpop.permute.xlu0 %2239
        %s2242 = sor.u32 256, 64
        %2243 = vbcast.lane.b32.xlu0 %v2209, %s2242
        %v2244 = vpop.permute.xlu0 %2243
        %s2246 = sor.u32 256, 72
        %2247 = vbcast.lane.b32.xlu0 %v2209, %s2246
        %v2248 = vpop.permute.xlu0 %2247
        %s2250 = sor.u32 256, 80
        %2251 = vbcast.lane.b32.xlu0 %v2209, %s2250
        %v2252 = vpop.permute.xlu0 %2251
        %s2254 = sor.u32 256, 88
        %2255 = vbcast.lane.b32.xlu0 %v2209, %s2254
        %v2256 = vpop.permute.xlu0 %2255
        %s2258 = sor.u32 256, 96
        %2259 = vbcast.lane.b32.xlu0 %v2209, %s2258
        %v2260 = vpop.permute.xlu0 %2259
        %s2262 = sor.u32 256, 104
        %2263 = vbcast.lane.b32.xlu0 %v2209, %s2262
        %v2264 = vpop.permute.xlu0 %2263
        %s2266 = sor.u32 256, 112
        %2267 = vbcast.lane.b32.xlu0 %v2209, %s2266
        %v2268 = vpop.permute.xlu0 %2267
        %s2270 = sor.u32 256, 120
        %2271 = vbcast.lane.b32.xlu0 %v2209, %s2270
        %v2272 = vpop.permute.xlu0 %2271
        %v2273 = vlaneseq
        %v2274 = vshrl.u32 %v2273, 7
        %v2275 = vsub.s32 0, %v2274
        %v2276 = vrot.slane %v125, %v2275
        %2278 = vbcast.lane.b32.xlu0 %v2276, 256
        %v2279 = vpop.permute.xlu0 %2278
        %s2281 = sor.u32 256, 8
        %2282 = vbcast.lane.b32.xlu0 %v2276, %s2281
        %v2283 = vpop.permute.xlu0 %2282
        %s2285 = sor.u32 256, 16
        %2286 = vbcast.lane.b32.xlu0 %v2276, %s2285
        %v2287 = vpop.permute.xlu0 %2286
        %s2289 = sor.u32 256, 24
        %2290 = vbcast.lane.b32.xlu0 %v2276, %s2289
        %v2291 = vpop.permute.xlu0 %2290
        %s2293 = sor.u32 256, 32
        %2294 = vbcast.lane.b32.xlu0 %v2276, %s2293
        %v2295 = vpop.permute.xlu0 %2294
        %s2297 = sor.u32 256, 40
        %2298 = vbcast.lane.b32.xlu0 %v2276, %s2297
        %v2299 = vpop.permute.xlu0 %2298
        %s2301 = sor.u32 256, 48
        %2302 = vbcast.lane.b32.xlu0 %v2276, %s2301
        %v2303 = vpop.permute.xlu0 %2302
        %s2305 = sor.u32 256, 56
        %2306 = vbcast.lane.b32.xlu0 %v2276, %s2305
        %v2307 = vpop.permute.xlu0 %2306
        %s2309 = sor.u32 256, 64
        %2310 = vbcast.lane.b32.xlu0 %v2276, %s2309
        %v2311 = vpop.permute.xlu0 %2310
        %s2313 = sor.u32 256, 72
        %2314 = vbcast.lane.b32.xlu0 %v2276, %s2313
        %v2315 = vpop.permute.xlu0 %2314
        %s2317 = sor.u32 256, 80
        %2318 = vbcast.lane.b32.xlu0 %v2276, %s2317
        %v2319 = vpop.permute.xlu0 %2318
        %s2321 = sor.u32 256, 88
        %2322 = vbcast.lane.b32.xlu0 %v2276, %s2321
        %v2323 = vpop.permute.xlu0 %2322
        %s2325 = sor.u32 256, 96
        %2326 = vbcast.lane.b32.xlu0 %v2276, %s2325
        %v2327 = vpop.permute.xlu0 %2326
        %s2329 = sor.u32 256, 104
        %2330 = vbcast.lane.b32.xlu0 %v2276, %s2329
        %v2331 = vpop.permute.xlu0 %2330
        %s2333 = sor.u32 256, 112
        %2334 = vbcast.lane.b32.xlu0 %v2276, %s2333
        %v2335 = vpop.permute.xlu0 %2334
        %s2337 = sor.u32 256, 120
        %2338 = vbcast.lane.b32.xlu0 %v2276, %s2337
        %v2339 = vpop.permute.xlu0 %2338
        %v2340 = vlaneseq
        %v2341 = vshrl.u32 %v2340, 7
        %v2342 = vsub.s32 1, %v2341
        %v2343 = vrot.slane %v125, %v2342
        %2345 = vbcast.lane.b32.xlu0 %v2343, 256
        %v2346 = vpop.permute.xlu0 %2345
        %s2348 = sor.u32 256, 8
        %2349 = vbcast.lane.b32.xlu0 %v2343, %s2348
        %v2350 = vpop.permute.xlu0 %2349
        %s2352 = sor.u32 256, 16
        %2353 = vbcast.lane.b32.xlu0 %v2343, %s2352
        %v2354 = vpop.permute.xlu0 %2353
        %s2356 = sor.u32 256, 24
        %2357 = vbcast.lane.b32.xlu0 %v2343, %s2356
        %v2358 = vpop.permute.xlu0 %2357
        %s2360 = sor.u32 256, 32
        %2361 = vbcast.lane.b32.xlu0 %v2343, %s2360
        %v2362 = vpop.permute.xlu0 %2361
        %s2364 = sor.u32 256, 40
        %2365 = vbcast.lane.b32.xlu0 %v2343, %s2364
        %v2366 = vpop.permute.xlu0 %2365
        %s2368 = sor.u32 256, 48
        %2369 = vbcast.lane.b32.xlu0 %v2343, %s2368
        %v2370 = vpop.permute.xlu0 %2369
        %s2372 = sor.u32 256, 56
        %2373 = vbcast.lane.b32.xlu0 %v2343, %s2372
        %v2374 = vpop.permute.xlu0 %2373
        %s2376 = sor.u32 256, 64
        %2377 = vbcast.lane.b32.xlu0 %v2343, %s2376
        %v2378 = vpop.permute.xlu0 %2377
        %s2380 = sor.u32 256, 72
        %2381 = vbcast.lane.b32.xlu0 %v2343, %s2380
        %v2382 = vpop.permute.xlu0 %2381
        %s2384 = sor.u32 256, 80
        %2385 = vbcast.lane.b32.xlu0 %v2343, %s2384
        %v2386 = vpop.permute.xlu0 %2385
        %s2388 = sor.u32 256, 88
        %2389 = vbcast.lane.b32.xlu0 %v2343, %s2388
        %v2390 = vpop.permute.xlu0 %2389
        %s2392 = sor.u32 256, 96
        %2393 = vbcast.lane.b32.xlu0 %v2343, %s2392
        %v2394 = vpop.permute.xlu0 %2393
        %s2396 = sor.u32 256, 104
        %2397 = vbcast.lane.b32.xlu0 %v2343, %s2396
        %v2398 = vpop.permute.xlu0 %2397
        %s2400 = sor.u32 256, 112
        %2401 = vbcast.lane.b32.xlu0 %v2343, %s2400
        %v2402 = vpop.permute.xlu0 %2401
        %s2404 = sor.u32 256, 120
        %2405 = vbcast.lane.b32.xlu0 %v2343, %s2404
        %v2406 = vpop.permute.xlu0 %2405
        %v2407 = vlaneseq
        %v2408 = vshrl.u32 %v2407, 7
        %v2409 = vsub.s32 2, %v2408
        %v2410 = vrot.slane %v125, %v2409
        %2412 = vbcast.lane.b32.xlu0 %v2410, 256
        %v2413 = vpop.permute.xlu0 %2412
        %s2415 = sor.u32 256, 8
        %2416 = vbcast.lane.b32.xlu0 %v2410, %s2415
        %v2417 = vpop.permute.xlu0 %2416
        %s2419 = sor.u32 256, 16
        %2420 = vbcast.lane.b32.xlu0 %v2410, %s2419
        %v2421 = vpop.permute.xlu0 %2420
        %s2423 = sor.u32 256, 24
        %2424 = vbcast.lane.b32.xlu0 %v2410, %s2423
        %v2425 = vpop.permute.xlu0 %2424
        %s2427 = sor.u32 256, 32
        %2428 = vbcast.lane.b32.xlu0 %v2410, %s2427
        %v2429 = vpop.permute.xlu0 %2428
        %s2431 = sor.u32 256, 40
        %2432 = vbcast.lane.b32.xlu0 %v2410, %s2431
        %v2433 = vpop.permute.xlu0 %2432
        %s2435 = sor.u32 256, 48
        %2436 = vbcast.lane.b32.xlu0 %v2410, %s2435
        %v2437 = vpop.permute.xlu0 %2436
        %s2439 = sor.u32 256, 56
        %2440 = vbcast.lane.b32.xlu0 %v2410, %s2439
        %v2441 = vpop.permute.xlu0 %2440
        %s2443 = sor.u32 256, 64
        %2444 = vbcast.lane.b32.xlu0 %v2410, %s2443
        %v2445 = vpop.permute.xlu0 %2444
        %s2447 = sor.u32 256, 72
        %2448 = vbcast.lane.b32.xlu0 %v2410, %s2447
        %v2449 = vpop.permute.xlu0 %2448
        %s2451 = sor.u32 256, 80
        %2452 = vbcast.lane.b32.xlu0 %v2410, %s2451
        %v2453 = vpop.permute.xlu0 %2452
        %s2455 = sor.u32 256, 88
        %2456 = vbcast.lane.b32.xlu0 %v2410, %s2455
        %v2457 = vpop.permute.xlu0 %2456
        %s2459 = sor.u32 256, 96
        %2460 = vbcast.lane.b32.xlu0 %v2410, %s2459
        %v2461 = vpop.permute.xlu0 %2460
        %s2463 = sor.u32 256, 104
        %2464 = vbcast.lane.b32.xlu0 %v2410, %s2463
        %v2465 = vpop.permute.xlu0 %2464
        %s2467 = sor.u32 256, 112
        %2468 = vbcast.lane.b32.xlu0 %v2410, %s2467
        %v2469 = vpop.permute.xlu0 %2468
        %s2471 = sor.u32 256, 120
        %2472 = vbcast.lane.b32.xlu0 %v2410, %s2471
        %v2473 = vpop.permute.xlu0 %2472
        %v2474 = vlaneseq
        %v2475 = vshrl.u32 %v2474, 7
        %v2476 = vsub.s32 3, %v2475
        %v2477 = vrot.slane %v125, %v2476
        %2479 = vbcast.lane.b32.xlu0 %v2477, 256
        %v2480 = vpop.permute.xlu0 %2479
        %s2482 = sor.u32 256, 8
        %2483 = vbcast.lane.b32.xlu0 %v2477, %s2482
        %v2484 = vpop.permute.xlu0 %2483
        %s2486 = sor.u32 256, 16
        %2487 = vbcast.lane.b32.xlu0 %v2477, %s2486
        %v2488 = vpop.permute.xlu0 %2487
        %s2490 = sor.u32 256, 24
        %2491 = vbcast.lane.b32.xlu0 %v2477, %s2490
        %v2492 = vpop.permute.xlu0 %2491
        %s2494 = sor.u32 256, 32
        %2495 = vbcast.lane.b32.xlu0 %v2477, %s2494
        %v2496 = vpop.permute.xlu0 %2495
        %s2498 = sor.u32 256, 40
        %2499 = vbcast.lane.b32.xlu0 %v2477, %s2498
        %v2500 = vpop.permute.xlu0 %2499
        %s2502 = sor.u32 256, 48
        %2503 = vbcast.lane.b32.xlu0 %v2477, %s2502
        %v2504 = vpop.permute.xlu0 %2503
        %s2506 = sor.u32 256, 56
        %2507 = vbcast.lane.b32.xlu0 %v2477, %s2506
        %v2508 = vpop.permute.xlu0 %2507
        %s2510 = sor.u32 256, 64
        %2511 = vbcast.lane.b32.xlu0 %v2477, %s2510
        %v2512 = vpop.permute.xlu0 %2511
        %s2514 = sor.u32 256, 72
        %2515 = vbcast.lane.b32.xlu0 %v2477, %s2514
        %v2516 = vpop.permute.xlu0 %2515
        %s2518 = sor.u32 256, 80
        %2519 = vbcast.lane.b32.xlu0 %v2477, %s2518
        %v2520 = vpop.permute.xlu0 %2519
        %s2522 = sor.u32 256, 88
        %2523 = vbcast.lane.b32.xlu0 %v2477, %s2522
        %v2524 = vpop.permute.xlu0 %2523
        %s2526 = sor.u32 256, 96
        %2527 = vbcast.lane.b32.xlu0 %v2477, %s2526
        %v2528 = vpop.permute.xlu0 %2527
        %s2530 = sor.u32 256, 104
        %2531 = vbcast.lane.b32.xlu0 %v2477, %s2530
        %v2532 = vpop.permute.xlu0 %2531
        %s2534 = sor.u32 256, 112
        %2535 = vbcast.lane.b32.xlu0 %v2477, %s2534
        %v2536 = vpop.permute.xlu0 %2535
        %s2538 = sor.u32 256, 120
        %2539 = vbcast.lane.b32.xlu0 %v2477, %s2538
        %v2540 = vpop.permute.xlu0 %2539
        %v2541 = vlaneseq
        %v2542 = vshrl.u32 %v2541, 7
        %v2543 = vsub.s32 4, %v2542
        %v2544 = vrot.slane %v125, %v2543
        %2546 = vbcast.lane.b32.xlu0 %v2544, 256
        %v2547 = vpop.permute.xlu0 %2546
        %s2549 = sor.u32 256, 8
        %2550 = vbcast.lane.b32.xlu0 %v2544, %s2549
        %v2551 = vpop.permute.xlu0 %2550
        %s2553 = sor.u32 256, 16
        %2554 = vbcast.lane.b32.xlu0 %v2544, %s2553
        %v2555 = vpop.permute.xlu0 %2554
        %s2557 = sor.u32 256, 24
        %2558 = vbcast.lane.b32.xlu0 %v2544, %s2557
        %v2559 = vpop.permute.xlu0 %2558
        %s2561 = sor.u32 256, 32
        %2562 = vbcast.lane.b32.xlu0 %v2544, %s2561
        %v2563 = vpop.permute.xlu0 %2562
        %s2565 = sor.u32 256, 40
        %2566 = vbcast.lane.b32.xlu0 %v2544, %s2565
        %v2567 = vpop.permute.xlu0 %2566
        %s2569 = sor.u32 256, 48
        %2570 = vbcast.lane.b32.xlu0 %v2544, %s2569
        %v2571 = vpop.permute.xlu0 %2570
        %s2573 = sor.u32 256, 56
        %2574 = vbcast.lane.b32.xlu0 %v2544, %s2573
        %v2575 = vpop.permute.xlu0 %2574
        %s2577 = sor.u32 256, 64
        %2578 = vbcast.lane.b32.xlu0 %v2544, %s2577
        %v2579 = vpop.permute.xlu0 %2578
        %s2581 = sor.u32 256, 72
        %2582 = vbcast.lane.b32.xlu0 %v2544, %s2581
        %v2583 = vpop.permute.xlu0 %2582
        %s2585 = sor.u32 256, 80
        %2586 = vbcast.lane.b32.xlu0 %v2544, %s2585
        %v2587 = vpop.permute.xlu0 %2586
        %s2589 = sor.u32 256, 88
        %2590 = vbcast.lane.b32.xlu0 %v2544, %s2589
        %v2591 = vpop.permute.xlu0 %2590
        %s2593 = sor.u32 256, 96
        %2594 = vbcast.lane.b32.xlu0 %v2544, %s2593
        %v2595 = vpop.permute.xlu0 %2594
        %s2597 = sor.u32 256, 104
        %2598 = vbcast.lane.b32.xlu0 %v2544, %s2597
        %v2599 = vpop.permute.xlu0 %2598
        %s2601 = sor.u32 256, 112
        %2602 = vbcast.lane.b32.xlu0 %v2544, %s2601
        %v2603 = vpop.permute.xlu0 %2602
        %s2605 = sor.u32 256, 120
        %2606 = vbcast.lane.b32.xlu0 %v2544, %s2605
        %v2607 = vpop.permute.xlu0 %2606
        %v2608 = vlaneseq
        %v2609 = vshrl.u32 %v2608, 7
        %v2610 = vsub.s32 5, %v2609
        %v2611 = vrot.slane %v125, %v2610
        %2613 = vbcast.lane.b32.xlu0 %v2611, 256
        %v2614 = vpop.permute.xlu0 %2613
        %s2616 = sor.u32 256, 8
        %2617 = vbcast.lane.b32.xlu0 %v2611, %s2616
        %v2618 = vpop.permute.xlu0 %2617
        %s2620 = sor.u32 256, 16
        %2621 = vbcast.lane.b32.xlu0 %v2611, %s2620
        %v2622 = vpop.permute.xlu0 %2621
        %s2624 = sor.u32 256, 24
        %2625 = vbcast.lane.b32.xlu0 %v2611, %s2624
        %v2626 = vpop.permute.xlu0 %2625
        %s2628 = sor.u32 256, 32
        %2629 = vbcast.lane.b32.xlu0 %v2611, %s2628
        %v2630 = vpop.permute.xlu0 %2629
        %s2632 = sor.u32 256, 40
        %2633 = vbcast.lane.b32.xlu0 %v2611, %s2632
        %v2634 = vpop.permute.xlu0 %2633
        %s2636 = sor.u32 256, 48
        %2637 = vbcast.lane.b32.xlu0 %v2611, %s2636
        %v2638 = vpop.permute.xlu0 %2637
        %s2640 = sor.u32 256, 56
        %2641 = vbcast.lane.b32.xlu0 %v2611, %s2640
        %v2642 = vpop.permute.xlu0 %2641
        %s2644 = sor.u32 256, 64
        %2645 = vbcast.lane.b32.xlu0 %v2611, %s2644
        %v2646 = vpop.permute.xlu0 %2645
        %s2648 = sor.u32 256, 72
        %2649 = vbcast.lane.b32.xlu0 %v2611, %s2648
        %v2650 = vpop.permute.xlu0 %2649
        %s2652 = sor.u32 256, 80
        %2653 = vbcast.lane.b32.xlu0 %v2611, %s2652
        %v2654 = vpop.permute.xlu0 %2653
        %s2656 = sor.u32 256, 88
        %2657 = vbcast.lane.b32.xlu0 %v2611, %s2656
        %v2658 = vpop.permute.xlu0 %2657
        %s2660 = sor.u32 256, 96
        %2661 = vbcast.lane.b32.xlu0 %v2611, %s2660
        %v2662 = vpop.permute.xlu0 %2661
        %s2664 = sor.u32 256, 104
        %2665 = vbcast.lane.b32.xlu0 %v2611, %s2664
        %v2666 = vpop.permute.xlu0 %2665
        %s2668 = sor.u32 256, 112
        %2669 = vbcast.lane.b32.xlu0 %v2611, %s2668
        %v2670 = vpop.permute.xlu0 %2669
        %s2672 = sor.u32 256, 120
        %2673 = vbcast.lane.b32.xlu0 %v2611, %s2672
        %v2674 = vpop.permute.xlu0 %2673
        %v2675 = vlaneseq
        %v2676 = vshrl.u32 %v2675, 7
        %v2677 = vsub.s32 6, %v2676
        %v2678 = vrot.slane %v125, %v2677
        %2680 = vbcast.lane.b32.xlu0 %v2678, 256
        %v2681 = vpop.permute.xlu0 %2680
        %s2683 = sor.u32 256, 8
        %2684 = vbcast.lane.b32.xlu0 %v2678, %s2683
        %v2685 = vpop.permute.xlu0 %2684
        %s2687 = sor.u32 256, 16
        %2688 = vbcast.lane.b32.xlu0 %v2678, %s2687
        %v2689 = vpop.permute.xlu0 %2688
        %s2691 = sor.u32 256, 24
        %2692 = vbcast.lane.b32.xlu0 %v2678, %s2691
        %v2693 = vpop.permute.xlu0 %2692
        %s2695 = sor.u32 256, 32
        %2696 = vbcast.lane.b32.xlu0 %v2678, %s2695
        %v2697 = vpop.permute.xlu0 %2696
        %s2699 = sor.u32 256, 40
        %2700 = vbcast.lane.b32.xlu0 %v2678, %s2699
        %v2701 = vpop.permute.xlu0 %2700
        %s2703 = sor.u32 256, 48
        %2704 = vbcast.lane.b32.xlu0 %v2678, %s2703
        %v2705 = vpop.permute.xlu0 %2704
        %s2707 = sor.u32 256, 56
        %2708 = vbcast.lane.b32.xlu0 %v2678, %s2707
        %v2709 = vpop.permute.xlu0 %2708
        %s2711 = sor.u32 256, 64
        %2712 = vbcast.lane.b32.xlu0 %v2678, %s2711
        %v2713 = vpop.permute.xlu0 %2712
        %s2715 = sor.u32 256, 72
        %2716 = vbcast.lane.b32.xlu0 %v2678, %s2715
        %v2717 = vpop.permute.xlu0 %2716
        %s2719 = sor.u32 256, 80
        %2720 = vbcast.lane.b32.xlu0 %v2678, %s2719
        %v2721 = vpop.permute.xlu0 %2720
        %s2723 = sor.u32 256, 88
        %2724 = vbcast.lane.b32.xlu0 %v2678, %s2723
        %v2725 = vpop.permute.xlu0 %2724
        %s2727 = sor.u32 256, 96
        %2728 = vbcast.lane.b32.xlu0 %v2678, %s2727
        %v2729 = vpop.permute.xlu0 %2728
        %s2731 = sor.u32 256, 104
        %2732 = vbcast.lane.b32.xlu0 %v2678, %s2731
        %v2733 = vpop.permute.xlu0 %2732
        %s2735 = sor.u32 256, 112
        %2736 = vbcast.lane.b32.xlu0 %v2678, %s2735
        %v2737 = vpop.permute.xlu0 %2736
        %s2739 = sor.u32 256, 120
        %2740 = vbcast.lane.b32.xlu0 %v2678, %s2739
        %v2741 = vpop.permute.xlu0 %2740
        %v2742 = vlaneseq
        %v2743 = vshrl.u32 %v2742, 7
        %v2744 = vsub.s32 7, %v2743
        %v2745 = vrot.slane %v125, %v2744
        %2747 = vbcast.lane.b32.xlu0 %v2745, 256
        %v2748 = vpop.permute.xlu0 %2747
        %s2750 = sor.u32 256, 8
        %2751 = vbcast.lane.b32.xlu0 %v2745, %s2750
        %v2752 = vpop.permute.xlu0 %2751
        %s2754 = sor.u32 256, 16
        %2755 = vbcast.lane.b32.xlu0 %v2745, %s2754
        %v2756 = vpop.permute.xlu0 %2755
        %s2758 = sor.u32 256, 24
        %2759 = vbcast.lane.b32.xlu0 %v2745, %s2758
        %v2760 = vpop.permute.xlu0 %2759
        %s2762 = sor.u32 256, 32
        %2763 = vbcast.lane.b32.xlu0 %v2745, %s2762
        %v2764 = vpop.permute.xlu0 %2763
        %s2766 = sor.u32 256, 40
        %2767 = vbcast.lane.b32.xlu0 %v2745, %s2766
        %v2768 = vpop.permute.xlu0 %2767
        %s2770 = sor.u32 256, 48
        %2771 = vbcast.lane.b32.xlu0 %v2745, %s2770
        %v2772 = vpop.permute.xlu0 %2771
        %s2774 = sor.u32 256, 56
        %2775 = vbcast.lane.b32.xlu0 %v2745, %s2774
        %v2776 = vpop.permute.xlu0 %2775
        %s2778 = sor.u32 256, 64
        %2779 = vbcast.lane.b32.xlu0 %v2745, %s2778
        %v2780 = vpop.permute.xlu0 %2779
        %s2782 = sor.u32 256, 72
        %2783 = vbcast.lane.b32.xlu0 %v2745, %s2782
        %v2784 = vpop.permute.xlu0 %2783
        %s2786 = sor.u32 256, 80
        %2787 = vbcast.lane.b32.xlu0 %v2745, %s2786
        %v2788 = vpop.permute.xlu0 %2787
        %s2790 = sor.u32 256, 88
        %2791 = vbcast.lane.b32.xlu0 %v2745, %s2790
        %v2792 = vpop.permute.xlu0 %2791
        %s2794 = sor.u32 256, 96
        %2795 = vbcast.lane.b32.xlu0 %v2745, %s2794
        %v2796 = vpop.permute.xlu0 %2795
        %s2798 = sor.u32 256, 104
        %2799 = vbcast.lane.b32.xlu0 %v2745, %s2798
        %v2800 = vpop.permute.xlu0 %2799
        %s2802 = sor.u32 256, 112
        %2803 = vbcast.lane.b32.xlu0 %v2745, %s2802
        %v2804 = vpop.permute.xlu0 %2803
        %s2806 = sor.u32 256, 120
        %2807 = vbcast.lane.b32.xlu0 %v2745, %s2806
        %v2808 = vpop.permute.xlu0 %2807
        %v2809 = vlaneseq
        %v2810 = vshrl.u32 %v2809, 7
        %v2811 = vsub.s32 0, %v2810
        %v2812 = vrot.slane %v126, %v2811
        %2814 = vbcast.lane.b32.xlu0 %v2812, 256
        %v2815 = vpop.permute.xlu0 %2814
        %s2817 = sor.u32 256, 8
        %2818 = vbcast.lane.b32.xlu0 %v2812, %s2817
        %v2819 = vpop.permute.xlu0 %2818
        %s2821 = sor.u32 256, 16
        %2822 = vbcast.lane.b32.xlu0 %v2812, %s2821
        %v2823 = vpop.permute.xlu0 %2822
        %s2825 = sor.u32 256, 24
        %2826 = vbcast.lane.b32.xlu0 %v2812, %s2825
        %v2827 = vpop.permute.xlu0 %2826
        %s2829 = sor.u32 256, 32
        %2830 = vbcast.lane.b32.xlu0 %v2812, %s2829
        %v2831 = vpop.permute.xlu0 %2830
        %s2833 = sor.u32 256, 40
        %2834 = vbcast.lane.b32.xlu0 %v2812, %s2833
        %v2835 = vpop.permute.xlu0 %2834
        %s2837 = sor.u32 256, 48
        %2838 = vbcast.lane.b32.xlu0 %v2812, %s2837
        %v2839 = vpop.permute.xlu0 %2838
        %s2841 = sor.u32 256, 56
        %2842 = vbcast.lane.b32.xlu0 %v2812, %s2841
        %v2843 = vpop.permute.xlu0 %2842
        %s2845 = sor.u32 256, 64
        %2846 = vbcast.lane.b32.xlu0 %v2812, %s2845
        %v2847 = vpop.permute.xlu0 %2846
        %s2849 = sor.u32 256, 72
        %2850 = vbcast.lane.b32.xlu0 %v2812, %s2849
        %v2851 = vpop.permute.xlu0 %2850
        %s2853 = sor.u32 256, 80
        %2854 = vbcast.lane.b32.xlu0 %v2812, %s2853
        %v2855 = vpop.permute.xlu0 %2854
        %s2857 = sor.u32 256, 88
        %2858 = vbcast.lane.b32.xlu0 %v2812, %s2857
        %v2859 = vpop.permute.xlu0 %2858
        %s2861 = sor.u32 256, 96
        %2862 = vbcast.lane.b32.xlu0 %v2812, %s2861
        %v2863 = vpop.permute.xlu0 %2862
        %s2865 = sor.u32 256, 104
        %2866 = vbcast.lane.b32.xlu0 %v2812, %s2865
        %v2867 = vpop.permute.xlu0 %2866
        %s2869 = sor.u32 256, 112
        %2870 = vbcast.lane.b32.xlu0 %v2812, %s2869
        %v2871 = vpop.permute.xlu0 %2870
        %s2873 = sor.u32 256, 120
        %2874 = vbcast.lane.b32.xlu0 %v2812, %s2873
        %v2875 = vpop.permute.xlu0 %2874
        %v2876 = vlaneseq
        %v2877 = vshrl.u32 %v2876, 7
        %v2878 = vsub.s32 1, %v2877
        %v2879 = vrot.slane %v126, %v2878
        %2881 = vbcast.lane.b32.xlu0 %v2879, 256
        %v2882 = vpop.permute.xlu0 %2881
        %s2884 = sor.u32 256, 8
        %2885 = vbcast.lane.b32.xlu0 %v2879, %s2884
        %v2886 = vpop.permute.xlu0 %2885
        %s2888 = sor.u32 256, 16
        %2889 = vbcast.lane.b32.xlu0 %v2879, %s2888
        %v2890 = vpop.permute.xlu0 %2889
        %s2892 = sor.u32 256, 24
        %2893 = vbcast.lane.b32.xlu0 %v2879, %s2892
        %v2894 = vpop.permute.xlu0 %2893
        %s2896 = sor.u32 256, 32
        %2897 = vbcast.lane.b32.xlu0 %v2879, %s2896
        %v2898 = vpop.permute.xlu0 %2897
        %s2900 = sor.u32 256, 40
        %2901 = vbcast.lane.b32.xlu0 %v2879, %s2900
        %v2902 = vpop.permute.xlu0 %2901
        %s2904 = sor.u32 256, 48
        %2905 = vbcast.lane.b32.xlu0 %v2879, %s2904
        %v2906 = vpop.permute.xlu0 %2905
        %s2908 = sor.u32 256, 56
        %2909 = vbcast.lane.b32.xlu0 %v2879, %s2908
        %v2910 = vpop.permute.xlu0 %2909
        %s2912 = sor.u32 256, 64
        %2913 = vbcast.lane.b32.xlu0 %v2879, %s2912
        %v2914 = vpop.permute.xlu0 %2913
        %s2916 = sor.u32 256, 72
        %2917 = vbcast.lane.b32.xlu0 %v2879, %s2916
        %v2918 = vpop.permute.xlu0 %2917
        %s2920 = sor.u32 256, 80
        %2921 = vbcast.lane.b32.xlu0 %v2879, %s2920
        %v2922 = vpop.permute.xlu0 %2921
        %s2924 = sor.u32 256, 88
        %2925 = vbcast.lane.b32.xlu0 %v2879, %s2924
        %v2926 = vpop.permute.xlu0 %2925
        %s2928 = sor.u32 256, 96
        %2929 = vbcast.lane.b32.xlu0 %v2879, %s2928
        %v2930 = vpop.permute.xlu0 %2929
        %s2932 = sor.u32 256, 104
        %2933 = vbcast.lane.b32.xlu0 %v2879, %s2932
        %v2934 = vpop.permute.xlu0 %2933
        %s2936 = sor.u32 256, 112
        %2937 = vbcast.lane.b32.xlu0 %v2879, %s2936
        %v2938 = vpop.permute.xlu0 %2937
        %s2940 = sor.u32 256, 120
        %2941 = vbcast.lane.b32.xlu0 %v2879, %s2940
        %v2942 = vpop.permute.xlu0 %2941
        %v2943 = vlaneseq
        %v2944 = vshrl.u32 %v2943, 7
        %v2945 = vsub.s32 2, %v2944
        %v2946 = vrot.slane %v126, %v2945
        %2948 = vbcast.lane.b32.xlu0 %v2946, 256
        %v2949 = vpop.permute.xlu0 %2948
        %s2951 = sor.u32 256, 8
        %2952 = vbcast.lane.b32.xlu0 %v2946, %s2951
        %v2953 = vpop.permute.xlu0 %2952
        %s2955 = sor.u32 256, 16
        %2956 = vbcast.lane.b32.xlu0 %v2946, %s2955
        %v2957 = vpop.permute.xlu0 %2956
        %s2959 = sor.u32 256, 24
        %2960 = vbcast.lane.b32.xlu0 %v2946, %s2959
        %v2961 = vpop.permute.xlu0 %2960
        %s2963 = sor.u32 256, 32
        %2964 = vbcast.lane.b32.xlu0 %v2946, %s2963
        %v2965 = vpop.permute.xlu0 %2964
        %s2967 = sor.u32 256, 40
        %2968 = vbcast.lane.b32.xlu0 %v2946, %s2967
        %v2969 = vpop.permute.xlu0 %2968
        %s2971 = sor.u32 256, 48
        %2972 = vbcast.lane.b32.xlu0 %v2946, %s2971
        %v2973 = vpop.permute.xlu0 %2972
        %s2975 = sor.u32 256, 56
        %2976 = vbcast.lane.b32.xlu0 %v2946, %s2975
        %v2977 = vpop.permute.xlu0 %2976
        %s2979 = sor.u32 256, 64
        %2980 = vbcast.lane.b32.xlu0 %v2946, %s2979
        %v2981 = vpop.permute.xlu0 %2980
        %s2983 = sor.u32 256, 72
        %2984 = vbcast.lane.b32.xlu0 %v2946, %s2983
        %v2985 = vpop.permute.xlu0 %2984
        %s2987 = sor.u32 256, 80
        %2988 = vbcast.lane.b32.xlu0 %v2946, %s2987
        %v2989 = vpop.permute.xlu0 %2988
        %s2991 = sor.u32 256, 88
        %2992 = vbcast.lane.b32.xlu0 %v2946, %s2991
        %v2993 = vpop.permute.xlu0 %2992
        %s2995 = sor.u32 256, 96
        %2996 = vbcast.lane.b32.xlu0 %v2946, %s2995
        %v2997 = vpop.permute.xlu0 %2996
        %s2999 = sor.u32 256, 104
        %3000 = vbcast.lane.b32.xlu0 %v2946, %s2999
        %v3001 = vpop.permute.xlu0 %3000
        %s3003 = sor.u32 256, 112
        %3004 = vbcast.lane.b32.xlu0 %v2946, %s3003
        %v3005 = vpop.permute.xlu0 %3004
        %s3007 = sor.u32 256, 120
        %3008 = vbcast.lane.b32.xlu0 %v2946, %s3007
        %v3009 = vpop.permute.xlu0 %3008
        %v3010 = vlaneseq
        %v3011 = vshrl.u32 %v3010, 7
        %v3012 = vsub.s32 3, %v3011
        %v3013 = vrot.slane %v126, %v3012
        %3015 = vbcast.lane.b32.xlu0 %v3013, 256
        %v3016 = vpop.permute.xlu0 %3015
        %s3018 = sor.u32 256, 8
        %3019 = vbcast.lane.b32.xlu0 %v3013, %s3018
        %v3020 = vpop.permute.xlu0 %3019
        %s3022 = sor.u32 256, 16
        %3023 = vbcast.lane.b32.xlu0 %v3013, %s3022
        %v3024 = vpop.permute.xlu0 %3023
        %s3026 = sor.u32 256, 24
        %3027 = vbcast.lane.b32.xlu0 %v3013, %s3026
        %v3028 = vpop.permute.xlu0 %3027
        %s3030 = sor.u32 256, 32
        %3031 = vbcast.lane.b32.xlu0 %v3013, %s3030
        %v3032 = vpop.permute.xlu0 %3031
        %s3034 = sor.u32 256, 40
        %3035 = vbcast.lane.b32.xlu0 %v3013, %s3034
        %v3036 = vpop.permute.xlu0 %3035
        %s3038 = sor.u32 256, 48
        %3039 = vbcast.lane.b32.xlu0 %v3013, %s3038
        %v3040 = vpop.permute.xlu0 %3039
        %s3042 = sor.u32 256, 56
        %3043 = vbcast.lane.b32.xlu0 %v3013, %s3042
        %v3044 = vpop.permute.xlu0 %3043
        %s3046 = sor.u32 256, 64
        %3047 = vbcast.lane.b32.xlu0 %v3013, %s3046
        %v3048 = vpop.permute.xlu0 %3047
        %s3050 = sor.u32 256, 72
        %3051 = vbcast.lane.b32.xlu0 %v3013, %s3050
        %v3052 = vpop.permute.xlu0 %3051
        %s3054 = sor.u32 256, 80
        %3055 = vbcast.lane.b32.xlu0 %v3013, %s3054
        %v3056 = vpop.permute.xlu0 %3055
        %s3058 = sor.u32 256, 88
        %3059 = vbcast.lane.b32.xlu0 %v3013, %s3058
        %v3060 = vpop.permute.xlu0 %3059
        %s3062 = sor.u32 256, 96
        %3063 = vbcast.lane.b32.xlu0 %v3013, %s3062
        %v3064 = vpop.permute.xlu0 %3063
        %s3066 = sor.u32 256, 104
        %3067 = vbcast.lane.b32.xlu0 %v3013, %s3066
        %v3068 = vpop.permute.xlu0 %3067
        %s3070 = sor.u32 256, 112
        %3071 = vbcast.lane.b32.xlu0 %v3013, %s3070
        %v3072 = vpop.permute.xlu0 %3071
        %s3074 = sor.u32 256, 120
        %3075 = vbcast.lane.b32.xlu0 %v3013, %s3074
        %v3076 = vpop.permute.xlu0 %3075
        %v3077 = vlaneseq
        %v3078 = vshrl.u32 %v3077, 7
        %v3079 = vsub.s32 4, %v3078
        %v3080 = vrot.slane %v126, %v3079
        %3082 = vbcast.lane.b32.xlu0 %v3080, 256
        %v3083 = vpop.permute.xlu0 %3082
        %s3085 = sor.u32 256, 8
        %3086 = vbcast.lane.b32.xlu0 %v3080, %s3085
        %v3087 = vpop.permute.xlu0 %3086
        %s3089 = sor.u32 256, 16
        %3090 = vbcast.lane.b32.xlu0 %v3080, %s3089
        %v3091 = vpop.permute.xlu0 %3090
        %s3093 = sor.u32 256, 24
        %3094 = vbcast.lane.b32.xlu0 %v3080, %s3093
        %v3095 = vpop.permute.xlu0 %3094
        %s3097 = sor.u32 256, 32
        %3098 = vbcast.lane.b32.xlu0 %v3080, %s3097
        %v3099 = vpop.permute.xlu0 %3098
        %s3101 = sor.u32 256, 40
        %3102 = vbcast.lane.b32.xlu0 %v3080, %s3101
        %v3103 = vpop.permute.xlu0 %3102
        %s3105 = sor.u32 256, 48
        %3106 = vbcast.lane.b32.xlu0 %v3080, %s3105
        %v3107 = vpop.permute.xlu0 %3106
        %s3109 = sor.u32 256, 56
        %3110 = vbcast.lane.b32.xlu0 %v3080, %s3109
        %v3111 = vpop.permute.xlu0 %3110
        %s3113 = sor.u32 256, 64
        %3114 = vbcast.lane.b32.xlu0 %v3080, %s3113
        %v3115 = vpop.permute.xlu0 %3114
        %s3117 = sor.u32 256, 72
        %3118 = vbcast.lane.b32.xlu0 %v3080, %s3117
        %v3119 = vpop.permute.xlu0 %3118
        %s3121 = sor.u32 256, 80
        %3122 = vbcast.lane.b32.xlu0 %v3080, %s3121
        %v3123 = vpop.permute.xlu0 %3122
        %s3125 = sor.u32 256, 88
        %3126 = vbcast.lane.b32.xlu0 %v3080, %s3125
        %v3127 = vpop.permute.xlu0 %3126
        %s3129 = sor.u32 256, 96
        %3130 = vbcast.lane.b32.xlu0 %v3080, %s3129
        %v3131 = vpop.permute.xlu0 %3130
        %s3133 = sor.u32 256, 104
        %3134 = vbcast.lane.b32.xlu0 %v3080, %s3133
        %v3135 = vpop.permute.xlu0 %3134
        %s3137 = sor.u32 256, 112
        %3138 = vbcast.lane.b32.xlu0 %v3080, %s3137
        %v3139 = vpop.permute.xlu0 %3138
        %s3141 = sor.u32 256, 120
        %3142 = vbcast.lane.b32.xlu0 %v3080, %s3141
        %v3143 = vpop.permute.xlu0 %3142
        %v3144 = vlaneseq
        %v3145 = vshrl.u32 %v3144, 7
        %v3146 = vsub.s32 5, %v3145
        %v3147 = vrot.slane %v126, %v3146
        %3149 = vbcast.lane.b32.xlu0 %v3147, 256
        %v3150 = vpop.permute.xlu0 %3149
        %s3152 = sor.u32 256, 8
        %3153 = vbcast.lane.b32.xlu0 %v3147, %s3152
        %v3154 = vpop.permute.xlu0 %3153
        %s3156 = sor.u32 256, 16
        %3157 = vbcast.lane.b32.xlu0 %v3147, %s3156
        %v3158 = vpop.permute.xlu0 %3157
        %s3160 = sor.u32 256, 24
        %3161 = vbcast.lane.b32.xlu0 %v3147, %s3160
        %v3162 = vpop.permute.xlu0 %3161
        %s3164 = sor.u32 256, 32
        %3165 = vbcast.lane.b32.xlu0 %v3147, %s3164
        %v3166 = vpop.permute.xlu0 %3165
        %s3168 = sor.u32 256, 40
        %3169 = vbcast.lane.b32.xlu0 %v3147, %s3168
        %v3170 = vpop.permute.xlu0 %3169
        %s3172 = sor.u32 256, 48
        %3173 = vbcast.lane.b32.xlu0 %v3147, %s3172
        %v3174 = vpop.permute.xlu0 %3173
        %s3176 = sor.u32 256, 56
        %3177 = vbcast.lane.b32.xlu0 %v3147, %s3176
        %v3178 = vpop.permute.xlu0 %3177
        %s3180 = sor.u32 256, 64
        %3181 = vbcast.lane.b32.xlu0 %v3147, %s3180
        %v3182 = vpop.permute.xlu0 %3181
        %s3184 = sor.u32 256, 72
        %3185 = vbcast.lane.b32.xlu0 %v3147, %s3184
        %v3186 = vpop.permute.xlu0 %3185
        %s3188 = sor.u32 256, 80
        %3189 = vbcast.lane.b32.xlu0 %v3147, %s3188
        %v3190 = vpop.permute.xlu0 %3189
        %s3192 = sor.u32 256, 88
        %3193 = vbcast.lane.b32.xlu0 %v3147, %s3192
        %v3194 = vpop.permute.xlu0 %3193
        %s3196 = sor.u32 256, 96
        %3197 = vbcast.lane.b32.xlu0 %v3147, %s3196
        %v3198 = vpop.permute.xlu0 %3197
        %s3200 = sor.u32 256, 104
        %3201 = vbcast.lane.b32.xlu0 %v3147, %s3200
        %v3202 = vpop.permute.xlu0 %3201
        %s3204 = sor.u32 256, 112
        %3205 = vbcast.lane.b32.xlu0 %v3147, %s3204
        %v3206 = vpop.permute.xlu0 %3205
        %s3208 = sor.u32 256, 120
        %3209 = vbcast.lane.b32.xlu0 %v3147, %s3208
        %v3210 = vpop.permute.xlu0 %3209
        %v3211 = vlaneseq
        %v3212 = vshrl.u32 %v3211, 7
        %v3213 = vsub.s32 6, %v3212
        %v3214 = vrot.slane %v126, %v3213
        %3216 = vbcast.lane.b32.xlu0 %v3214, 256
        %v3217 = vpop.permute.xlu0 %3216
        %s3219 = sor.u32 256, 8
        %3220 = vbcast.lane.b32.xlu0 %v3214, %s3219
        %v3221 = vpop.permute.xlu0 %3220
        %s3223 = sor.u32 256, 16
        %3224 = vbcast.lane.b32.xlu0 %v3214, %s3223
        %v3225 = vpop.permute.xlu0 %3224
        %s3227 = sor.u32 256, 24
        %3228 = vbcast.lane.b32.xlu0 %v3214, %s3227
        %v3229 = vpop.permute.xlu0 %3228
        %s3231 = sor.u32 256, 32
        %3232 = vbcast.lane.b32.xlu0 %v3214, %s3231
        %v3233 = vpop.permute.xlu0 %3232
        %s3235 = sor.u32 256, 40
        %3236 = vbcast.lane.b32.xlu0 %v3214, %s3235
        %v3237 = vpop.permute.xlu0 %3236
        %s3239 = sor.u32 256, 48
        %3240 = vbcast.lane.b32.xlu0 %v3214, %s3239
        %v3241 = vpop.permute.xlu0 %3240
        %s3243 = sor.u32 256, 56
        %3244 = vbcast.lane.b32.xlu0 %v3214, %s3243
        %v3245 = vpop.permute.xlu0 %3244
        %s3247 = sor.u32 256, 64
        %3248 = vbcast.lane.b32.xlu0 %v3214, %s3247
        %v3249 = vpop.permute.xlu0 %3248
        %s3251 = sor.u32 256, 72
        %3252 = vbcast.lane.b32.xlu0 %v3214, %s3251
        %v3253 = vpop.permute.xlu0 %3252
        %s3255 = sor.u32 256, 80
        %3256 = vbcast.lane.b32.xlu0 %v3214, %s3255
        %v3257 = vpop.permute.xlu0 %3256
        %s3259 = sor.u32 256, 88
        %3260 = vbcast.lane.b32.xlu0 %v3214, %s3259
        %v3261 = vpop.permute.xlu0 %3260
        %s3263 = sor.u32 256, 96
        %3264 = vbcast.lane.b32.xlu0 %v3214, %s3263
        %v3265 = vpop.permute.xlu0 %3264
        %s3267 = sor.u32 256, 104
        %3268 = vbcast.lane.b32.xlu0 %v3214, %s3267
        %v3269 = vpop.permute.xlu0 %3268
        %s3271 = sor.u32 256, 112
        %3272 = vbcast.lane.b32.xlu0 %v3214, %s3271
        %v3273 = vpop.permute.xlu0 %3272
        %s3275 = sor.u32 256, 120
        %3276 = vbcast.lane.b32.xlu0 %v3214, %s3275
        %v3277 = vpop.permute.xlu0 %3276
        %v3278 = vlaneseq
        %v3279 = vshrl.u32 %v3278, 7
        %v3280 = vsub.s32 7, %v3279
        %v3281 = vrot.slane %v126, %v3280
        %3283 = vbcast.lane.b32.xlu0 %v3281, 256
        %v3284 = vpop.permute.xlu0 %3283
        %s3286 = sor.u32 256, 8
        %3287 = vbcast.lane.b32.xlu0 %v3281, %s3286
        %v3288 = vpop.permute.xlu0 %3287
        %s3290 = sor.u32 256, 16
        %3291 = vbcast.lane.b32.xlu0 %v3281, %s3290
        %v3292 = vpop.permute.xlu0 %3291
        %s3294 = sor.u32 256, 24
        %3295 = vbcast.lane.b32.xlu0 %v3281, %s3294
        %v3296 = vpop.permute.xlu0 %3295
        %s3298 = sor.u32 256, 32
        %3299 = vbcast.lane.b32.xlu0 %v3281, %s3298
        %v3300 = vpop.permute.xlu0 %3299
        %s3302 = sor.u32 256, 40
        %3303 = vbcast.lane.b32.xlu0 %v3281, %s3302
        %v3304 = vpop.permute.xlu0 %3303
        %s3306 = sor.u32 256, 48
        %3307 = vbcast.lane.b32.xlu0 %v3281, %s3306
        %v3308 = vpop.permute.xlu0 %3307
        %s3310 = sor.u32 256, 56
        %3311 = vbcast.lane.b32.xlu0 %v3281, %s3310
        %v3312 = vpop.permute.xlu0 %3311
        %s3314 = sor.u32 256, 64
        %3315 = vbcast.lane.b32.xlu0 %v3281, %s3314
        %v3316 = vpop.permute.xlu0 %3315
        %s3318 = sor.u32 256, 72
        %3319 = vbcast.lane.b32.xlu0 %v3281, %s3318
        %v3320 = vpop.permute.xlu0 %3319
        %s3322 = sor.u32 256, 80
        %3323 = vbcast.lane.b32.xlu0 %v3281, %s3322
        %v3324 = vpop.permute.xlu0 %3323
        %s3326 = sor.u32 256, 88
        %3327 = vbcast.lane.b32.xlu0 %v3281, %s3326
        %v3328 = vpop.permute.xlu0 %3327
        %s3330 = sor.u32 256, 96
        %3331 = vbcast.lane.b32.xlu0 %v3281, %s3330
        %v3332 = vpop.permute.xlu0 %3331
        %s3334 = sor.u32 256, 104
        %3335 = vbcast.lane.b32.xlu0 %v3281, %s3334
        %v3336 = vpop.permute.xlu0 %3335
        %s3338 = sor.u32 256, 112
        %3339 = vbcast.lane.b32.xlu0 %v3281, %s3338
        %v3340 = vpop.permute.xlu0 %3339
        %s3342 = sor.u32 256, 120
        %3343 = vbcast.lane.b32.xlu0 %v3281, %s3342
        %v3344 = vpop.permute.xlu0 %3343
        %v3345 = vlaneseq
        %v3346 = vshrl.u32 %v3345, 7
        %v3347 = vsub.s32 0, %v3346
        %v3348 = vrot.slane %v127, %v3347
        %3350 = vbcast.lane.b32.xlu0 %v3348, 256
        %v3351 = vpop.permute.xlu0 %3350
        %s3353 = sor.u32 256, 8
        %3354 = vbcast.lane.b32.xlu0 %v3348, %s3353
        %v3355 = vpop.permute.xlu0 %3354
        %s3357 = sor.u32 256, 16
        %3358 = vbcast.lane.b32.xlu0 %v3348, %s3357
        %v3359 = vpop.permute.xlu0 %3358
        %s3361 = sor.u32 256, 24
        %3362 = vbcast.lane.b32.xlu0 %v3348, %s3361
        %v3363 = vpop.permute.xlu0 %3362
        %s3365 = sor.u32 256, 32
        %3366 = vbcast.lane.b32.xlu0 %v3348, %s3365
        %v3367 = vpop.permute.xlu0 %3366
        %s3369 = sor.u32 256, 40
        %3370 = vbcast.lane.b32.xlu0 %v3348, %s3369
        %v3371 = vpop.permute.xlu0 %3370
        %s3373 = sor.u32 256, 48
        %3374 = vbcast.lane.b32.xlu0 %v3348, %s3373
        %v3375 = vpop.permute.xlu0 %3374
        %s3377 = sor.u32 256, 56
        %3378 = vbcast.lane.b32.xlu0 %v3348, %s3377
        %v3379 = vpop.permute.xlu0 %3378
        %s3381 = sor.u32 256, 64
        %3382 = vbcast.lane.b32.xlu0 %v3348, %s3381
        %v3383 = vpop.permute.xlu0 %3382
        %s3385 = sor.u32 256, 72
        %3386 = vbcast.lane.b32.xlu0 %v3348, %s3385
        %v3387 = vpop.permute.xlu0 %3386
        %s3389 = sor.u32 256, 80
        %3390 = vbcast.lane.b32.xlu0 %v3348, %s3389
        %v3391 = vpop.permute.xlu0 %3390
        %s3393 = sor.u32 256, 88
        %3394 = vbcast.lane.b32.xlu0 %v3348, %s3393
        %v3395 = vpop.permute.xlu0 %3394
        %s3397 = sor.u32 256, 96
        %3398 = vbcast.lane.b32.xlu0 %v3348, %s3397
        %v3399 = vpop.permute.xlu0 %3398
        %s3401 = sor.u32 256, 104
        %3402 = vbcast.lane.b32.xlu0 %v3348, %s3401
        %v3403 = vpop.permute.xlu0 %3402
        %s3405 = sor.u32 256, 112
        %3406 = vbcast.lane.b32.xlu0 %v3348, %s3405
        %v3407 = vpop.permute.xlu0 %3406
        %s3409 = sor.u32 256, 120
        %3410 = vbcast.lane.b32.xlu0 %v3348, %s3409
        %v3411 = vpop.permute.xlu0 %3410
        %v3412 = vlaneseq
        %v3413 = vshrl.u32 %v3412, 7
        %v3414 = vsub.s32 1, %v3413
        %v3415 = vrot.slane %v127, %v3414
        %3417 = vbcast.lane.b32.xlu0 %v3415, 256
        %v3418 = vpop.permute.xlu0 %3417
        %s3420 = sor.u32 256, 8
        %3421 = vbcast.lane.b32.xlu0 %v3415, %s3420
        %v3422 = vpop.permute.xlu0 %3421
        %s3424 = sor.u32 256, 16
        %3425 = vbcast.lane.b32.xlu0 %v3415, %s3424
        %v3426 = vpop.permute.xlu0 %3425
        %s3428 = sor.u32 256, 24
        %3429 = vbcast.lane.b32.xlu0 %v3415, %s3428
        %v3430 = vpop.permute.xlu0 %3429
        %s3432 = sor.u32 256, 32
        %3433 = vbcast.lane.b32.xlu0 %v3415, %s3432
        %v3434 = vpop.permute.xlu0 %3433
        %s3436 = sor.u32 256, 40
        %3437 = vbcast.lane.b32.xlu0 %v3415, %s3436
        %v3438 = vpop.permute.xlu0 %3437
        %s3440 = sor.u32 256, 48
        %3441 = vbcast.lane.b32.xlu0 %v3415, %s3440
        %v3442 = vpop.permute.xlu0 %3441
        %s3444 = sor.u32 256, 56
        %3445 = vbcast.lane.b32.xlu0 %v3415, %s3444
        %v3446 = vpop.permute.xlu0 %3445
        %s3448 = sor.u32 256, 64
        %3449 = vbcast.lane.b32.xlu0 %v3415, %s3448
        %v3450 = vpop.permute.xlu0 %3449
        %s3452 = sor.u32 256, 72
        %3453 = vbcast.lane.b32.xlu0 %v3415, %s3452
        %v3454 = vpop.permute.xlu0 %3453
        %s3456 = sor.u32 256, 80
        %3457 = vbcast.lane.b32.xlu0 %v3415, %s3456
        %v3458 = vpop.permute.xlu0 %3457
        %s3460 = sor.u32 256, 88
        %3461 = vbcast.lane.b32.xlu0 %v3415, %s3460
        %v3462 = vpop.permute.xlu0 %3461
        %s3464 = sor.u32 256, 96
        %3465 = vbcast.lane.b32.xlu0 %v3415, %s3464
        %v3466 = vpop.permute.xlu0 %3465
        %s3468 = sor.u32 256, 104
        %3469 = vbcast.lane.b32.xlu0 %v3415, %s3468
        %v3470 = vpop.permute.xlu0 %3469
        %s3472 = sor.u32 256, 112
        %3473 = vbcast.lane.b32.xlu0 %v3415, %s3472
        %v3474 = vpop.permute.xlu0 %3473
        %s3476 = sor.u32 256, 120
        %3477 = vbcast.lane.b32.xlu0 %v3415, %s3476
        %v3478 = vpop.permute.xlu0 %3477
        %v3479 = vlaneseq
        %v3480 = vshrl.u32 %v3479, 7
        %v3481 = vsub.s32 2, %v3480
        %v3482 = vrot.slane %v127, %v3481
        %3484 = vbcast.lane.b32.xlu0 %v3482, 256
        %v3485 = vpop.permute.xlu0 %3484
        %s3487 = sor.u32 256, 8
        %3488 = vbcast.lane.b32.xlu0 %v3482, %s3487
        %v3489 = vpop.permute.xlu0 %3488
        %s3491 = sor.u32 256, 16
        %3492 = vbcast.lane.b32.xlu0 %v3482, %s3491
        %v3493 = vpop.permute.xlu0 %3492
        %s3495 = sor.u32 256, 24
        %3496 = vbcast.lane.b32.xlu0 %v3482, %s3495
        %v3497 = vpop.permute.xlu0 %3496
        %s3499 = sor.u32 256, 32
        %3500 = vbcast.lane.b32.xlu0 %v3482, %s3499
        %v3501 = vpop.permute.xlu0 %3500
        %s3503 = sor.u32 256, 40
        %3504 = vbcast.lane.b32.xlu0 %v3482, %s3503
        %v3505 = vpop.permute.xlu0 %3504
        %s3507 = sor.u32 256, 48
        %3508 = vbcast.lane.b32.xlu0 %v3482, %s3507
        %v3509 = vpop.permute.xlu0 %3508
        %s3511 = sor.u32 256, 56
        %3512 = vbcast.lane.b32.xlu0 %v3482, %s3511
        %v3513 = vpop.permute.xlu0 %3512
        %s3515 = sor.u32 256, 64
        %3516 = vbcast.lane.b32.xlu0 %v3482, %s3515
        %v3517 = vpop.permute.xlu0 %3516
        %s3519 = sor.u32 256, 72
        %3520 = vbcast.lane.b32.xlu0 %v3482, %s3519
        %v3521 = vpop.permute.xlu0 %3520
        %s3523 = sor.u32 256, 80
        %3524 = vbcast.lane.b32.xlu0 %v3482, %s3523
        %v3525 = vpop.permute.xlu0 %3524
        %s3527 = sor.u32 256, 88
        %3528 = vbcast.lane.b32.xlu0 %v3482, %s3527
        %v3529 = vpop.permute.xlu0 %3528
        %s3531 = sor.u32 256, 96
        %3532 = vbcast.lane.b32.xlu0 %v3482, %s3531
        %v3533 = vpop.permute.xlu0 %3532
        %s3535 = sor.u32 256, 104
        %3536 = vbcast.lane.b32.xlu0 %v3482, %s3535
        %v3537 = vpop.permute.xlu0 %3536
        %s3539 = sor.u32 256, 112
        %3540 = vbcast.lane.b32.xlu0 %v3482, %s3539
        %v3541 = vpop.permute.xlu0 %3540
        %s3543 = sor.u32 256, 120
        %3544 = vbcast.lane.b32.xlu0 %v3482, %s3543
        %v3545 = vpop.permute.xlu0 %3544
        %v3546 = vlaneseq
        %v3547 = vshrl.u32 %v3546, 7
        %v3548 = vsub.s32 3, %v3547
        %v3549 = vrot.slane %v127, %v3548
        %3551 = vbcast.lane.b32.xlu0 %v3549, 256
        %v3552 = vpop.permute.xlu0 %3551
        %s3554 = sor.u32 256, 8
        %3555 = vbcast.lane.b32.xlu0 %v3549, %s3554
        %v3556 = vpop.permute.xlu0 %3555
        %s3558 = sor.u32 256, 16
        %3559 = vbcast.lane.b32.xlu0 %v3549, %s3558
        %v3560 = vpop.permute.xlu0 %3559
        %s3562 = sor.u32 256, 24
        %3563 = vbcast.lane.b32.xlu0 %v3549, %s3562
        %v3564 = vpop.permute.xlu0 %3563
        %s3566 = sor.u32 256, 32
        %3567 = vbcast.lane.b32.xlu0 %v3549, %s3566
        %v3568 = vpop.permute.xlu0 %3567
        %s3570 = sor.u32 256, 40
        %3571 = vbcast.lane.b32.xlu0 %v3549, %s3570
        %v3572 = vpop.permute.xlu0 %3571
        %s3574 = sor.u32 256, 48
        %3575 = vbcast.lane.b32.xlu0 %v3549, %s3574
        %v3576 = vpop.permute.xlu0 %3575
        %s3578 = sor.u32 256, 56
        %3579 = vbcast.lane.b32.xlu0 %v3549, %s3578
        %v3580 = vpop.permute.xlu0 %3579
        %s3582 = sor.u32 256, 64
        %3583 = vbcast.lane.b32.xlu0 %v3549, %s3582
        %v3584 = vpop.permute.xlu0 %3583
        %s3586 = sor.u32 256, 72
        %3587 = vbcast.lane.b32.xlu0 %v3549, %s3586
        %v3588 = vpop.permute.xlu0 %3587
        %s3590 = sor.u32 256, 80
        %3591 = vbcast.lane.b32.xlu0 %v3549, %s3590
        %v3592 = vpop.permute.xlu0 %3591
        %s3594 = sor.u32 256, 88
        %3595 = vbcast.lane.b32.xlu0 %v3549, %s3594
        %v3596 = vpop.permute.xlu0 %3595
        %s3598 = sor.u32 256, 96
        %3599 = vbcast.lane.b32.xlu0 %v3549, %s3598
        %v3600 = vpop.permute.xlu0 %3599
        %s3602 = sor.u32 256, 104
        %3603 = vbcast.lane.b32.xlu0 %v3549, %s3602
        %v3604 = vpop.permute.xlu0 %3603
        %s3606 = sor.u32 256, 112
        %3607 = vbcast.lane.b32.xlu0 %v3549, %s3606
        %v3608 = vpop.permute.xlu0 %3607
        %s3610 = sor.u32 256, 120
        %3611 = vbcast.lane.b32.xlu0 %v3549, %s3610
        %v3612 = vpop.permute.xlu0 %3611
        %v3613 = vlaneseq
        %v3614 = vshrl.u32 %v3613, 7
        %v3615 = vsub.s32 4, %v3614
        %v3616 = vrot.slane %v127, %v3615
        %3618 = vbcast.lane.b32.xlu0 %v3616, 256
        %v3619 = vpop.permute.xlu0 %3618
        %s3621 = sor.u32 256, 8
        %3622 = vbcast.lane.b32.xlu0 %v3616, %s3621
        %v3623 = vpop.permute.xlu0 %3622
        %s3625 = sor.u32 256, 16
        %3626 = vbcast.lane.b32.xlu0 %v3616, %s3625
        %v3627 = vpop.permute.xlu0 %3626
        %s3629 = sor.u32 256, 24
        %3630 = vbcast.lane.b32.xlu0 %v3616, %s3629
        %v3631 = vpop.permute.xlu0 %3630
        %s3633 = sor.u32 256, 32
        %3634 = vbcast.lane.b32.xlu0 %v3616, %s3633
        %v3635 = vpop.permute.xlu0 %3634
        %s3637 = sor.u32 256, 40
        %3638 = vbcast.lane.b32.xlu0 %v3616, %s3637
        %v3639 = vpop.permute.xlu0 %3638
        %s3641 = sor.u32 256, 48
        %3642 = vbcast.lane.b32.xlu0 %v3616, %s3641
        %v3643 = vpop.permute.xlu0 %3642
        %s3645 = sor.u32 256, 56
        %3646 = vbcast.lane.b32.xlu0 %v3616, %s3645
        %v3647 = vpop.permute.xlu0 %3646
        %s3649 = sor.u32 256, 64
        %3650 = vbcast.lane.b32.xlu0 %v3616, %s3649
        %v3651 = vpop.permute.xlu0 %3650
        %s3653 = sor.u32 256, 72
        %3654 = vbcast.lane.b32.xlu0 %v3616, %s3653
        %v3655 = vpop.permute.xlu0 %3654
        %s3657 = sor.u32 256, 80
        %3658 = vbcast.lane.b32.xlu0 %v3616, %s3657
        %v3659 = vpop.permute.xlu0 %3658
        %s3661 = sor.u32 256, 88
        %3662 = vbcast.lane.b32.xlu0 %v3616, %s3661
        %v3663 = vpop.permute.xlu0 %3662
        %s3665 = sor.u32 256, 96
        %3666 = vbcast.lane.b32.xlu0 %v3616, %s3665
        %v3667 = vpop.permute.xlu0 %3666
        %s3669 = sor.u32 256, 104
        %3670 = vbcast.lane.b32.xlu0 %v3616, %s3669
        %v3671 = vpop.permute.xlu0 %3670
        %s3673 = sor.u32 256, 112
        %3674 = vbcast.lane.b32.xlu0 %v3616, %s3673
        %v3675 = vpop.permute.xlu0 %3674
        %s3677 = sor.u32 256, 120
        %3678 = vbcast.lane.b32.xlu0 %v3616, %s3677
        %v3679 = vpop.permute.xlu0 %3678
        %v3680 = vlaneseq
        %v3681 = vshrl.u32 %v3680, 7
        %v3682 = vsub.s32 5, %v3681
        %v3683 = vrot.slane %v127, %v3682
        %3685 = vbcast.lane.b32.xlu0 %v3683, 256
        %v3686 = vpop.permute.xlu0 %3685
        %s3688 = sor.u32 256, 8
        %3689 = vbcast.lane.b32.xlu0 %v3683, %s3688
        %v3690 = vpop.permute.xlu0 %3689
        %s3692 = sor.u32 256, 16
        %3693 = vbcast.lane.b32.xlu0 %v3683, %s3692
        %v3694 = vpop.permute.xlu0 %3693
        %s3696 = sor.u32 256, 24
        %3697 = vbcast.lane.b32.xlu0 %v3683, %s3696
        %v3698 = vpop.permute.xlu0 %3697
        %s3700 = sor.u32 256, 32
        %3701 = vbcast.lane.b32.xlu0 %v3683, %s3700
        %v3702 = vpop.permute.xlu0 %3701
        %s3704 = sor.u32 256, 40
        %3705 = vbcast.lane.b32.xlu0 %v3683, %s3704
        %v3706 = vpop.permute.xlu0 %3705
        %s3708 = sor.u32 256, 48
        %3709 = vbcast.lane.b32.xlu0 %v3683, %s3708
        %v3710 = vpop.permute.xlu0 %3709
        %s3712 = sor.u32 256, 56
        %3713 = vbcast.lane.b32.xlu0 %v3683, %s3712
        %v3714 = vpop.permute.xlu0 %3713
        %s3716 = sor.u32 256, 64
        %3717 = vbcast.lane.b32.xlu0 %v3683, %s3716
        %v3718 = vpop.permute.xlu0 %3717
        %s3720 = sor.u32 256, 72
        %3721 = vbcast.lane.b32.xlu0 %v3683, %s3720
        %v3722 = vpop.permute.xlu0 %3721
        %s3724 = sor.u32 256, 80
        %3725 = vbcast.lane.b32.xlu0 %v3683, %s3724
        %v3726 = vpop.permute.xlu0 %3725
        %s3728 = sor.u32 256, 88
        %3729 = vbcast.lane.b32.xlu0 %v3683, %s3728
        %v3730 = vpop.permute.xlu0 %3729
        %s3732 = sor.u32 256, 96
        %3733 = vbcast.lane.b32.xlu0 %v3683, %s3732
        %v3734 = vpop.permute.xlu0 %3733
        %s3736 = sor.u32 256, 104
        %3737 = vbcast.lane.b32.xlu0 %v3683, %s3736
        %v3738 = vpop.permute.xlu0 %3737
        %s3740 = sor.u32 256, 112
        %3741 = vbcast.lane.b32.xlu0 %v3683, %s3740
        %v3742 = vpop.permute.xlu0 %3741
        %s3744 = sor.u32 256, 120
        %3745 = vbcast.lane.b32.xlu0 %v3683, %s3744
        %v3746 = vpop.permute.xlu0 %3745
        %v3747 = vlaneseq
        %v3748 = vshrl.u32 %v3747, 7
        %v3749 = vsub.s32 6, %v3748
        %v3750 = vrot.slane %v127, %v3749
        %3752 = vbcast.lane.b32.xlu0 %v3750, 256
        %v3753 = vpop.permute.xlu0 %3752
        %s3755 = sor.u32 256, 8
        %3756 = vbcast.lane.b32.xlu0 %v3750, %s3755
        %v3757 = vpop.permute.xlu0 %3756
        %s3759 = sor.u32 256, 16
        %3760 = vbcast.lane.b32.xlu0 %v3750, %s3759
        %v3761 = vpop.permute.xlu0 %3760
        %s3763 = sor.u32 256, 24
        %3764 = vbcast.lane.b32.xlu0 %v3750, %s3763
        %v3765 = vpop.permute.xlu0 %3764
        %s3767 = sor.u32 256, 32
        %3768 = vbcast.lane.b32.xlu0 %v3750, %s3767
        %v3769 = vpop.permute.xlu0 %3768
        %s3771 = sor.u32 256, 40
        %3772 = vbcast.lane.b32.xlu0 %v3750, %s3771
        %v3773 = vpop.permute.xlu0 %3772
        %s3775 = sor.u32 256, 48
        %3776 = vbcast.lane.b32.xlu0 %v3750, %s3775
        %v3777 = vpop.permute.xlu0 %3776
        %s3779 = sor.u32 256, 56
        %3780 = vbcast.lane.b32.xlu0 %v3750, %s3779
        %v3781 = vpop.permute.xlu0 %3780
        %s3783 = sor.u32 256, 64
        %3784 = vbcast.lane.b32.xlu0 %v3750, %s3783
        %v3785 = vpop.permute.xlu0 %3784
        %s3787 = sor.u32 256, 72
        %3788 = vbcast.lane.b32.xlu0 %v3750, %s3787
        %v3789 = vpop.permute.xlu0 %3788
        %s3791 = sor.u32 256, 80
        %3792 = vbcast.lane.b32.xlu0 %v3750, %s3791
        %v3793 = vpop.permute.xlu0 %3792
        %s3795 = sor.u32 256, 88
        %3796 = vbcast.lane.b32.xlu0 %v3750, %s3795
        %v3797 = vpop.permute.xlu0 %3796
        %s3799 = sor.u32 256, 96
        %3800 = vbcast.lane.b32.xlu0 %v3750, %s3799
        %v3801 = vpop.permute.xlu0 %3800
        %s3803 = sor.u32 256, 104
        %3804 = vbcast.lane.b32.xlu0 %v3750, %s3803
        %v3805 = vpop.permute.xlu0 %3804
        %s3807 = sor.u32 256, 112
        %3808 = vbcast.lane.b32.xlu0 %v3750, %s3807
        %v3809 = vpop.permute.xlu0 %3808
        %s3811 = sor.u32 256, 120
        %3812 = vbcast.lane.b32.xlu0 %v3750, %s3811
        %v3813 = vpop.permute.xlu0 %3812
        %v3814 = vlaneseq
        %v3815 = vshrl.u32 %v3814, 7
        %v3816 = vsub.s32 7, %v3815
        %v3817 = vrot.slane %v127, %v3816
        %3819 = vbcast.lane.b32.xlu0 %v3817, 256
        %v3820 = vpop.permute.xlu0 %3819
        %s3822 = sor.u32 256, 8
        %3823 = vbcast.lane.b32.xlu0 %v3817, %s3822
        %v3824 = vpop.permute.xlu0 %3823
        %s3826 = sor.u32 256, 16
        %3827 = vbcast.lane.b32.xlu0 %v3817, %s3826
        %v3828 = vpop.permute.xlu0 %3827
        %s3830 = sor.u32 256, 24
        %3831 = vbcast.lane.b32.xlu0 %v3817, %s3830
        %v3832 = vpop.permute.xlu0 %3831
        %s3834 = sor.u32 256, 32
        %3835 = vbcast.lane.b32.xlu0 %v3817, %s3834
        %v3836 = vpop.permute.xlu0 %3835
        %s3838 = sor.u32 256, 40
        %3839 = vbcast.lane.b32.xlu0 %v3817, %s3838
        %v3840 = vpop.permute.xlu0 %3839
        %s3842 = sor.u32 256, 48
        %3843 = vbcast.lane.b32.xlu0 %v3817, %s3842
        %v3844 = vpop.permute.xlu0 %3843
        %s3846 = sor.u32 256, 56
        %3847 = vbcast.lane.b32.xlu0 %v3817, %s3846
        %v3848 = vpop.permute.xlu0 %3847
        %s3850 = sor.u32 256, 64
        %3851 = vbcast.lane.b32.xlu0 %v3817, %s3850
        %v3852 = vpop.permute.xlu0 %3851
        %s3854 = sor.u32 256, 72
        %3855 = vbcast.lane.b32.xlu0 %v3817, %s3854
        %v3856 = vpop.permute.xlu0 %3855
        %s3858 = sor.u32 256, 80
        %3859 = vbcast.lane.b32.xlu0 %v3817, %s3858
        %v3860 = vpop.permute.xlu0 %3859
        %s3862 = sor.u32 256, 88
        %3863 = vbcast.lane.b32.xlu0 %v3817, %s3862
        %v3864 = vpop.permute.xlu0 %3863
        %s3866 = sor.u32 256, 96
        %3867 = vbcast.lane.b32.xlu0 %v3817, %s3866
        %v3868 = vpop.permute.xlu0 %3867
        %s3870 = sor.u32 256, 104
        %3871 = vbcast.lane.b32.xlu0 %v3817, %s3870
        %v3872 = vpop.permute.xlu0 %3871
        %s3874 = sor.u32 256, 112
        %3875 = vbcast.lane.b32.xlu0 %v3817, %s3874
        %v3876 = vpop.permute.xlu0 %3875
        %s3878 = sor.u32 256, 120
        %3879 = vbcast.lane.b32.xlu0 %v3817, %s3878
        %v3880 = vpop.permute.xlu0 %3879
        %v3881 = vlaneseq
        %v3882 = vshrl.u32 %v3881, 7
        %v3883 = vsub.s32 0, %v3882
        %v3884 = vrot.slane %v128, %v3883
        %3886 = vbcast.lane.b32.xlu0 %v3884, 256
        %v3887 = vpop.permute.xlu0 %3886
        %s3889 = sor.u32 256, 8
        %3890 = vbcast.lane.b32.xlu0 %v3884, %s3889
        %v3891 = vpop.permute.xlu0 %3890
        %s3893 = sor.u32 256, 16
        %3894 = vbcast.lane.b32.xlu0 %v3884, %s3893
        %v3895 = vpop.permute.xlu0 %3894
        %s3897 = sor.u32 256, 24
        %3898 = vbcast.lane.b32.xlu0 %v3884, %s3897
        %v3899 = vpop.permute.xlu0 %3898
        %s3901 = sor.u32 256, 32
        %3902 = vbcast.lane.b32.xlu0 %v3884, %s3901
        %v3903 = vpop.permute.xlu0 %3902
        %s3905 = sor.u32 256, 40
        %3906 = vbcast.lane.b32.xlu0 %v3884, %s3905
        %v3907 = vpop.permute.xlu0 %3906
        %s3909 = sor.u32 256, 48
        %3910 = vbcast.lane.b32.xlu0 %v3884, %s3909
        %v3911 = vpop.permute.xlu0 %3910
        %s3913 = sor.u32 256, 56
        %3914 = vbcast.lane.b32.xlu0 %v3884, %s3913
        %v3915 = vpop.permute.xlu0 %3914
        %s3917 = sor.u32 256, 64
        %3918 = vbcast.lane.b32.xlu0 %v3884, %s3917
        %v3919 = vpop.permute.xlu0 %3918
        %s3921 = sor.u32 256, 72
        %3922 = vbcast.lane.b32.xlu0 %v3884, %s3921
        %v3923 = vpop.permute.xlu0 %3922
        %s3925 = sor.u32 256, 80
        %3926 = vbcast.lane.b32.xlu0 %v3884, %s3925
        %v3927 = vpop.permute.xlu0 %3926
        %s3929 = sor.u32 256, 88
        %3930 = vbcast.lane.b32.xlu0 %v3884, %s3929
        %v3931 = vpop.permute.xlu0 %3930
        %s3933 = sor.u32 256, 96
        %3934 = vbcast.lane.b32.xlu0 %v3884, %s3933
        %v3935 = vpop.permute.xlu0 %3934
        %s3937 = sor.u32 256, 104
        %3938 = vbcast.lane.b32.xlu0 %v3884, %s3937
        %v3939 = vpop.permute.xlu0 %3938
        %s3941 = sor.u32 256, 112
        %3942 = vbcast.lane.b32.xlu0 %v3884, %s3941
        %v3943 = vpop.permute.xlu0 %3942
        %s3945 = sor.u32 256, 120
        %3946 = vbcast.lane.b32.xlu0 %v3884, %s3945
        %v3947 = vpop.permute.xlu0 %3946
        %v3948 = vlaneseq
        %v3949 = vshrl.u32 %v3948, 7
        %v3950 = vsub.s32 1, %v3949
        %v3951 = vrot.slane %v128, %v3950
        %3953 = vbcast.lane.b32.xlu0 %v3951, 256
        %v3954 = vpop.permute.xlu0 %3953
        %s3956 = sor.u32 256, 8
        %3957 = vbcast.lane.b32.xlu0 %v3951, %s3956
        %v3958 = vpop.permute.xlu0 %3957
        %s3960 = sor.u32 256, 16
        %3961 = vbcast.lane.b32.xlu0 %v3951, %s3960
        %v3962 = vpop.permute.xlu0 %3961
        %s3964 = sor.u32 256, 24
        %3965 = vbcast.lane.b32.xlu0 %v3951, %s3964
        %v3966 = vpop.permute.xlu0 %3965
        %s3968 = sor.u32 256, 32
        %3969 = vbcast.lane.b32.xlu0 %v3951, %s3968
        %v3970 = vpop.permute.xlu0 %3969
        %s3972 = sor.u32 256, 40
        %3973 = vbcast.lane.b32.xlu0 %v3951, %s3972
        %v3974 = vpop.permute.xlu0 %3973
        %s3976 = sor.u32 256, 48
        %3977 = vbcast.lane.b32.xlu0 %v3951, %s3976
        %v3978 = vpop.permute.xlu0 %3977
        %s3980 = sor.u32 256, 56
        %3981 = vbcast.lane.b32.xlu0 %v3951, %s3980
        %v3982 = vpop.permute.xlu0 %3981
        %s3984 = sor.u32 256, 64
        %3985 = vbcast.lane.b32.xlu0 %v3951, %s3984
        %v3986 = vpop.permute.xlu0 %3985
        %s3988 = sor.u32 256, 72
        %3989 = vbcast.lane.b32.xlu0 %v3951, %s3988
        %v3990 = vpop.permute.xlu0 %3989
        %s3992 = sor.u32 256, 80
        %3993 = vbcast.lane.b32.xlu0 %v3951, %s3992
        %v3994 = vpop.permute.xlu0 %3993
        %s3996 = sor.u32 256, 88
        %3997 = vbcast.lane.b32.xlu0 %v3951, %s3996
        %v3998 = vpop.permute.xlu0 %3997
        %s4000 = sor.u32 256, 96
        %4001 = vbcast.lane.b32.xlu0 %v3951, %s4000
        %v4002 = vpop.permute.xlu0 %4001
        %s4004 = sor.u32 256, 104
        %4005 = vbcast.lane.b32.xlu0 %v3951, %s4004
        %v4006 = vpop.permute.xlu0 %4005
        %s4008 = sor.u32 256, 112
        %4009 = vbcast.lane.b32.xlu0 %v3951, %s4008
        %v4010 = vpop.permute.xlu0 %4009
        %s4012 = sor.u32 256, 120
        %4013 = vbcast.lane.b32.xlu0 %v3951, %s4012
        %v4014 = vpop.permute.xlu0 %4013
        %v4015 = vlaneseq
        %v4016 = vshrl.u32 %v4015, 7
        %v4017 = vsub.s32 2, %v4016
        %v4018 = vrot.slane %v128, %v4017
        %4020 = vbcast.lane.b32.xlu0 %v4018, 256
        %v4021 = vpop.permute.xlu0 %4020
        %s4023 = sor.u32 256, 8
        %4024 = vbcast.lane.b32.xlu0 %v4018, %s4023
        %v4025 = vpop.permute.xlu0 %4024
        %s4027 = sor.u32 256, 16
        %4028 = vbcast.lane.b32.xlu0 %v4018, %s4027
        %v4029 = vpop.permute.xlu0 %4028
        %s4031 = sor.u32 256, 24
        %4032 = vbcast.lane.b32.xlu0 %v4018, %s4031
        %v4033 = vpop.permute.xlu0 %4032
        %s4035 = sor.u32 256, 32
        %4036 = vbcast.lane.b32.xlu0 %v4018, %s4035
        %v4037 = vpop.permute.xlu0 %4036
        %s4039 = sor.u32 256, 40
        %4040 = vbcast.lane.b32.xlu0 %v4018, %s4039
        %v4041 = vpop.permute.xlu0 %4040
        %s4043 = sor.u32 256, 48
        %4044 = vbcast.lane.b32.xlu0 %v4018, %s4043
        %v4045 = vpop.permute.xlu0 %4044
        %s4047 = sor.u32 256, 56
        %4048 = vbcast.lane.b32.xlu0 %v4018, %s4047
        %v4049 = vpop.permute.xlu0 %4048
        %s4051 = sor.u32 256, 64
        %4052 = vbcast.lane.b32.xlu0 %v4018, %s4051
        %v4053 = vpop.permute.xlu0 %4052
        %s4055 = sor.u32 256, 72
        %4056 = vbcast.lane.b32.xlu0 %v4018, %s4055
        %v4057 = vpop.permute.xlu0 %4056
        %s4059 = sor.u32 256, 80
        %4060 = vbcast.lane.b32.xlu0 %v4018, %s4059
        %v4061 = vpop.permute.xlu0 %4060
        %s4063 = sor.u32 256, 88
        %4064 = vbcast.lane.b32.xlu0 %v4018, %s4063
        %v4065 = vpop.permute.xlu0 %4064
        %s4067 = sor.u32 256, 96
        %4068 = vbcast.lane.b32.xlu0 %v4018, %s4067
        %v4069 = vpop.permute.xlu0 %4068
        %s4071 = sor.u32 256, 104
        %4072 = vbcast.lane.b32.xlu0 %v4018, %s4071
        %v4073 = vpop.permute.xlu0 %4072
        %s4075 = sor.u32 256, 112
        %4076 = vbcast.lane.b32.xlu0 %v4018, %s4075
        %v4077 = vpop.permute.xlu0 %4076
        %s4079 = sor.u32 256, 120
        %4080 = vbcast.lane.b32.xlu0 %v4018, %s4079
        %v4081 = vpop.permute.xlu0 %4080
        %v4082 = vlaneseq
        %v4083 = vshrl.u32 %v4082, 7
        %v4084 = vsub.s32 3, %v4083
        %v4085 = vrot.slane %v128, %v4084
        %4087 = vbcast.lane.b32.xlu0 %v4085, 256
        %v4088 = vpop.permute.xlu0 %4087
        %s4090 = sor.u32 256, 8
        %4091 = vbcast.lane.b32.xlu0 %v4085, %s4090
        %v4092 = vpop.permute.xlu0 %4091
        %s4094 = sor.u32 256, 16
        %4095 = vbcast.lane.b32.xlu0 %v4085, %s4094
        %v4096 = vpop.permute.xlu0 %4095
        %s4098 = sor.u32 256, 24
        %4099 = vbcast.lane.b32.xlu0 %v4085, %s4098
        %v4100 = vpop.permute.xlu0 %4099
        %s4102 = sor.u32 256, 32
        %4103 = vbcast.lane.b32.xlu0 %v4085, %s4102
        %v4104 = vpop.permute.xlu0 %4103
        %s4106 = sor.u32 256, 40
        %4107 = vbcast.lane.b32.xlu0 %v4085, %s4106
        %v4108 = vpop.permute.xlu0 %4107
        %s4110 = sor.u32 256, 48
        %4111 = vbcast.lane.b32.xlu0 %v4085, %s4110
        %v4112 = vpop.permute.xlu0 %4111
        %s4114 = sor.u32 256, 56
        %4115 = vbcast.lane.b32.xlu0 %v4085, %s4114
        %v4116 = vpop.permute.xlu0 %4115
        %s4118 = sor.u32 256, 64
        %4119 = vbcast.lane.b32.xlu0 %v4085, %s4118
        %v4120 = vpop.permute.xlu0 %4119
        %s4122 = sor.u32 256, 72
        %4123 = vbcast.lane.b32.xlu0 %v4085, %s4122
        %v4124 = vpop.permute.xlu0 %4123
        %s4126 = sor.u32 256, 80
        %4127 = vbcast.lane.b32.xlu0 %v4085, %s4126
        %v4128 = vpop.permute.xlu0 %4127
        %s4130 = sor.u32 256, 88
        %4131 = vbcast.lane.b32.xlu0 %v4085, %s4130
        %v4132 = vpop.permute.xlu0 %4131
        %s4134 = sor.u32 256, 96
        %4135 = vbcast.lane.b32.xlu0 %v4085, %s4134
        %v4136 = vpop.permute.xlu0 %4135
        %s4138 = sor.u32 256, 104
        %4139 = vbcast.lane.b32.xlu0 %v4085, %s4138
        %v4140 = vpop.permute.xlu0 %4139
        %s4142 = sor.u32 256, 112
        %4143 = vbcast.lane.b32.xlu0 %v4085, %s4142
        %v4144 = vpop.permute.xlu0 %4143
        %s4146 = sor.u32 256, 120
        %4147 = vbcast.lane.b32.xlu0 %v4085, %s4146
        %v4148 = vpop.permute.xlu0 %4147
        %v4149 = vlaneseq
        %v4150 = vshrl.u32 %v4149, 7
        %v4151 = vsub.s32 4, %v4150
        %v4152 = vrot.slane %v128, %v4151
        %4154 = vbcast.lane.b32.xlu0 %v4152, 256
        %v4155 = vpop.permute.xlu0 %4154
        %s4157 = sor.u32 256, 8
        %4158 = vbcast.lane.b32.xlu0 %v4152, %s4157
        %v4159 = vpop.permute.xlu0 %4158
        %s4161 = sor.u32 256, 16
        %4162 = vbcast.lane.b32.xlu0 %v4152, %s4161
        %v4163 = vpop.permute.xlu0 %4162
        %s4165 = sor.u32 256, 24
        %4166 = vbcast.lane.b32.xlu0 %v4152, %s4165
        %v4167 = vpop.permute.xlu0 %4166
        %s4169 = sor.u32 256, 32
        %4170 = vbcast.lane.b32.xlu0 %v4152, %s4169
        %v4171 = vpop.permute.xlu0 %4170
        %s4173 = sor.u32 256, 40
        %4174 = vbcast.lane.b32.xlu0 %v4152, %s4173
        %v4175 = vpop.permute.xlu0 %4174
        %s4177 = sor.u32 256, 48
        %4178 = vbcast.lane.b32.xlu0 %v4152, %s4177
        %v4179 = vpop.permute.xlu0 %4178
        %s4181 = sor.u32 256, 56
        %4182 = vbcast.lane.b32.xlu0 %v4152, %s4181
        %v4183 = vpop.permute.xlu0 %4182
        %s4185 = sor.u32 256, 64
        %4186 = vbcast.lane.b32.xlu0 %v4152, %s4185
        %v4187 = vpop.permute.xlu0 %4186
        %s4189 = sor.u32 256, 72
        %4190 = vbcast.lane.b32.xlu0 %v4152, %s4189
        %v4191 = vpop.permute.xlu0 %4190
        %s4193 = sor.u32 256, 80
        %4194 = vbcast.lane.b32.xlu0 %v4152, %s4193
        %v4195 = vpop.permute.xlu0 %4194
        %s4197 = sor.u32 256, 88
        %4198 = vbcast.lane.b32.xlu0 %v4152, %s4197
        %v4199 = vpop.permute.xlu0 %4198
        %s4201 = sor.u32 256, 96
        %4202 = vbcast.lane.b32.xlu0 %v4152, %s4201
        %v4203 = vpop.permute.xlu0 %4202
        %s4205 = sor.u32 256, 104
        %4206 = vbcast.lane.b32.xlu0 %v4152, %s4205
        %v4207 = vpop.permute.xlu0 %4206
        %s4209 = sor.u32 256, 112
        %4210 = vbcast.lane.b32.xlu0 %v4152, %s4209
        %v4211 = vpop.permute.xlu0 %4210
        %s4213 = sor.u32 256, 120
        %4214 = vbcast.lane.b32.xlu0 %v4152, %s4213
        %v4215 = vpop.permute.xlu0 %4214
        %v4216 = vlaneseq
        %v4217 = vshrl.u32 %v4216, 7
        %v4218 = vsub.s32 5, %v4217
        %v4219 = vrot.slane %v128, %v4218
        %4221 = vbcast.lane.b32.xlu0 %v4219, 256
        %v4222 = vpop.permute.xlu0 %4221
        %s4224 = sor.u32 256, 8
        %4225 = vbcast.lane.b32.xlu0 %v4219, %s4224
        %v4226 = vpop.permute.xlu0 %4225
        %s4228 = sor.u32 256, 16
        %4229 = vbcast.lane.b32.xlu0 %v4219, %s4228
        %v4230 = vpop.permute.xlu0 %4229
        %s4232 = sor.u32 256, 24
        %4233 = vbcast.lane.b32.xlu0 %v4219, %s4232
        %v4234 = vpop.permute.xlu0 %4233
        %s4236 = sor.u32 256, 32
        %4237 = vbcast.lane.b32.xlu0 %v4219, %s4236
        %v4238 = vpop.permute.xlu0 %4237
        %s4240 = sor.u32 256, 40
        %4241 = vbcast.lane.b32.xlu0 %v4219, %s4240
        %v4242 = vpop.permute.xlu0 %4241
        %s4244 = sor.u32 256, 48
        %4245 = vbcast.lane.b32.xlu0 %v4219, %s4244
        %v4246 = vpop.permute.xlu0 %4245
        %s4248 = sor.u32 256, 56
        %4249 = vbcast.lane.b32.xlu0 %v4219, %s4248
        %v4250 = vpop.permute.xlu0 %4249
        %s4252 = sor.u32 256, 64
        %4253 = vbcast.lane.b32.xlu0 %v4219, %s4252
        %v4254 = vpop.permute.xlu0 %4253
        %s4256 = sor.u32 256, 72
        %4257 = vbcast.lane.b32.xlu0 %v4219, %s4256
        %v4258 = vpop.permute.xlu0 %4257
        %s4260 = sor.u32 256, 80
        %4261 = vbcast.lane.b32.xlu0 %v4219, %s4260
        %v4262 = vpop.permute.xlu0 %4261
        %s4264 = sor.u32 256, 88
        %4265 = vbcast.lane.b32.xlu0 %v4219, %s4264
        %v4266 = vpop.permute.xlu0 %4265
        %s4268 = sor.u32 256, 96
        %4269 = vbcast.lane.b32.xlu0 %v4219, %s4268
        %v4270 = vpop.permute.xlu0 %4269
        %s4272 = sor.u32 256, 104
        %4273 = vbcast.lane.b32.xlu0 %v4219, %s4272
        %v4274 = vpop.permute.xlu0 %4273
        %s4276 = sor.u32 256, 112
        %4277 = vbcast.lane.b32.xlu0 %v4219, %s4276
        %v4278 = vpop.permute.xlu0 %4277
        %s4280 = sor.u32 256, 120
        %4281 = vbcast.lane.b32.xlu0 %v4219, %s4280
        %v4282 = vpop.permute.xlu0 %4281
        %v4283 = vlaneseq
        %v4284 = vshrl.u32 %v4283, 7
        %v4285 = vsub.s32 6, %v4284
        %v4286 = vrot.slane %v128, %v4285
        %4288 = vbcast.lane.b32.xlu0 %v4286, 256
        %v4289 = vpop.permute.xlu0 %4288
        %s4291 = sor.u32 256, 8
        %4292 = vbcast.lane.b32.xlu0 %v4286, %s4291
        %v4293 = vpop.permute.xlu0 %4292
        %s4295 = sor.u32 256, 16
        %4296 = vbcast.lane.b32.xlu0 %v4286, %s4295
        %v4297 = vpop.permute.xlu0 %4296
        %s4299 = sor.u32 256, 24
        %4300 = vbcast.lane.b32.xlu0 %v4286, %s4299
        %v4301 = vpop.permute.xlu0 %4300
        %s4303 = sor.u32 256, 32
        %4304 = vbcast.lane.b32.xlu0 %v4286, %s4303
        %v4305 = vpop.permute.xlu0 %4304
        %s4307 = sor.u32 256, 40
        %4308 = vbcast.lane.b32.xlu0 %v4286, %s4307
        %v4309 = vpop.permute.xlu0 %4308
        %s4311 = sor.u32 256, 48
        %4312 = vbcast.lane.b32.xlu0 %v4286, %s4311
        %v4313 = vpop.permute.xlu0 %4312
        %s4315 = sor.u32 256, 56
        %4316 = vbcast.lane.b32.xlu0 %v4286, %s4315
        %v4317 = vpop.permute.xlu0 %4316
        %s4319 = sor.u32 256, 64
        %4320 = vbcast.lane.b32.xlu0 %v4286, %s4319
        %v4321 = vpop.permute.xlu0 %4320
        %s4323 = sor.u32 256, 72
        %4324 = vbcast.lane.b32.xlu0 %v4286, %s4323
        %v4325 = vpop.permute.xlu0 %4324
        %s4327 = sor.u32 256, 80
        %4328 = vbcast.lane.b32.xlu0 %v4286, %s4327
        %v4329 = vpop.permute.xlu0 %4328
        %s4331 = sor.u32 256, 88
        %4332 = vbcast.lane.b32.xlu0 %v4286, %s4331
        %v4333 = vpop.permute.xlu0 %4332
        %s4335 = sor.u32 256, 96
        %4336 = vbcast.lane.b32.xlu0 %v4286, %s4335
        %v4337 = vpop.permute.xlu0 %4336
        %s4339 = sor.u32 256, 104
        %4340 = vbcast.lane.b32.xlu0 %v4286, %s4339
        %v4341 = vpop.permute.xlu0 %4340
        %s4343 = sor.u32 256, 112
        %4344 = vbcast.lane.b32.xlu0 %v4286, %s4343
        %v4345 = vpop.permute.xlu0 %4344
        %s4347 = sor.u32 256, 120
        %4348 = vbcast.lane.b32.xlu0 %v4286, %s4347
        %v4349 = vpop.permute.xlu0 %4348
        %v4350 = vlaneseq
        %v4351 = vshrl.u32 %v4350, 7
        %v4352 = vsub.s32 7, %v4351
        %v4353 = vrot.slane %v128, %v4352
        %4355 = vbcast.lane.b32.xlu0 %v4353, 256
        %v4356 = vpop.permute.xlu0 %4355
        %s4358 = sor.u32 256, 8
        %4359 = vbcast.lane.b32.xlu0 %v4353, %s4358
        %v4360 = vpop.permute.xlu0 %4359
        %s4362 = sor.u32 256, 16
        %4363 = vbcast.lane.b32.xlu0 %v4353, %s4362
        %v4364 = vpop.permute.xlu0 %4363
        %s4366 = sor.u32 256, 24
        %4367 = vbcast.lane.b32.xlu0 %v4353, %s4366
        %v4368 = vpop.permute.xlu0 %4367
        %s4370 = sor.u32 256, 32
        %4371 = vbcast.lane.b32.xlu0 %v4353, %s4370
        %v4372 = vpop.permute.xlu0 %4371
        %s4374 = sor.u32 256, 40
        %4375 = vbcast.lane.b32.xlu0 %v4353, %s4374
        %v4376 = vpop.permute.xlu0 %4375
        %s4378 = sor.u32 256, 48
        %4379 = vbcast.lane.b32.xlu0 %v4353, %s4378
        %v4380 = vpop.permute.xlu0 %4379
        %s4382 = sor.u32 256, 56
        %4383 = vbcast.lane.b32.xlu0 %v4353, %s4382
        %v4384 = vpop.permute.xlu0 %4383
        %s4386 = sor.u32 256, 64
        %4387 = vbcast.lane.b32.xlu0 %v4353, %s4386
        %v4388 = vpop.permute.xlu0 %4387
        %s4390 = sor.u32 256, 72
        %4391 = vbcast.lane.b32.xlu0 %v4353, %s4390
        %v4392 = vpop.permute.xlu0 %4391
        %s4394 = sor.u32 256, 80
        %4395 = vbcast.lane.b32.xlu0 %v4353, %s4394
        %v4396 = vpop.permute.xlu0 %4395
        %s4398 = sor.u32 256, 88
        %4399 = vbcast.lane.b32.xlu0 %v4353, %s4398
        %v4400 = vpop.permute.xlu0 %4399
        %s4402 = sor.u32 256, 96
        %4403 = vbcast.lane.b32.xlu0 %v4353, %s4402
        %v4404 = vpop.permute.xlu0 %4403
        %s4406 = sor.u32 256, 104
        %4407 = vbcast.lane.b32.xlu0 %v4353, %s4406
        %v4408 = vpop.permute.xlu0 %4407
        %s4410 = sor.u32 256, 112
        %4411 = vbcast.lane.b32.xlu0 %v4353, %s4410
        %v4412 = vpop.permute.xlu0 %4411
        %s4414 = sor.u32 256, 120
        %4415 = vbcast.lane.b32.xlu0 %v4353, %s4414
        %v4416 = vpop.permute.xlu0 %4415
        %v4425 = vcombine.high %v121, %v121
        %v4427 = vunpack.c.l.s4 1966171168
        %v4428 = vunpack.c.0.s8 %v4427
        %v4429 = vlaneseq
        %v4430 = vshrl.u32 %v4429, 7
        %v4431 = vsub.s32 %v4428, %v4430
        %v4432 = vrot.slane %v121, %v4431
        %v4434 = vunpack.c.l.s4 1966171168
        %v4435 = vunpack.c.0.s8 %v4434
        %v4436 = vlaneseq
        %v4437 = vshrl.u32 %v4436, 7
        %v4438 = vsub.s32 %v4435, %v4437
        %v4439 = vrot.slane %v4425, %v4438
        %v4440 = vcombine.high %v4432, %v4432
        %v4441 = vcombine.high %v4439, %v4439
        %v4443 = vunpack.c.l.s4 1966171168
        %v4444 = vunpack.c.0.s8 %v4443
        %v4445 = vlaneseq
        %v4446 = vshrl.u32 %v4445, 7
        %v4447 = vsub.s32 %v4444, %v4446
        %v4448 = vrot.slane %v4432, %v4447
        %v4450 = vunpack.c.l.s4 1966171168
        %v4451 = vunpack.c.0.s8 %v4450
        %v4452 = vlaneseq
        %v4453 = vshrl.u32 %v4452, 7
        %v4454 = vsub.s32 %v4451, %v4453
        %v4455 = vrot.slane %v4439, %v4454
        %v4457 = vunpack.c.l.s4 1966171168
        %v4458 = vunpack.c.0.s8 %v4457
        %v4459 = vlaneseq
        %v4460 = vshrl.u32 %v4459, 7
        %v4461 = vsub.s32 %v4458, %v4460
        %v4462 = vrot.slane %v4440, %v4461
        %v4464 = vunpack.c.l.s4 1966171168
        %v4465 = vunpack.c.0.s8 %v4464
        %v4466 = vlaneseq
        %v4467 = vshrl.u32 %v4466, 7
        %v4468 = vsub.s32 %v4465, %v4467
        %v4469 = vrot.slane %v4441, %v4468
        %v4470 = vcombine.high %v4448, %v4448
        %v4471 = vcombine.high %v4455, %v4455
        %v4472 = vcombine.high %v4462, %v4462
        %v4473 = vcombine.high %v4469, %v4469
        %v4474 = vcombine.high %v122, %v122
        %v4476 = vunpack.c.l.s4 1966171168
        %v4477 = vunpack.c.0.s8 %v4476
        %v4478 = vlaneseq
        %v4479 = vshrl.u32 %v4478, 7
        %v4480 = vsub.s32 %v4477, %v4479
        %v4481 = vrot.slane %v122, %v4480
        %v4483 = vunpack.c.l.s4 1966171168
        %v4484 = vunpack.c.0.s8 %v4483
        %v4485 = vlaneseq
        %v4486 = vshrl.u32 %v4485, 7
        %v4487 = vsub.s32 %v4484, %v4486
        %v4488 = vrot.slane %v4474, %v4487
        %v4489 = vcombine.high %v4481, %v4481
        %v4490 = vcombine.high %v4488, %v4488
        %v4492 = vunpack.c.l.s4 1966171168
        %v4493 = vunpack.c.0.s8 %v4492
        %v4494 = vlaneseq
        %v4495 = vshrl.u32 %v4494, 7
        %v4496 = vsub.s32 %v4493, %v4495
        %v4497 = vrot.slane %v4481, %v4496
        %v4499 = vunpack.c.l.s4 1966171168
        %v4500 = vunpack.c.0.s8 %v4499
        %v4501 = vlaneseq
        %v4502 = vshrl.u32 %v4501, 7
        %v4503 = vsub.s32 %v4500, %v4502
        %v4504 = vrot.slane %v4488, %v4503
        %v4506 = vunpack.c.l.s4 1966171168
        %v4507 = vunpack.c.0.s8 %v4506
        %v4508 = vlaneseq
        %v4509 = vshrl.u32 %v4508, 7
        %v4510 = vsub.s32 %v4507, %v4509
        %v4511 = vrot.slane %v4489, %v4510
        %v4513 = vunpack.c.l.s4 1966171168
        %v4514 = vunpack.c.0.s8 %v4513
        %v4515 = vlaneseq
        %v4516 = vshrl.u32 %v4515, 7
        %v4517 = vsub.s32 %v4514, %v4516
        %v4518 = vrot.slane %v4490, %v4517
        %v4519 = vcombine.high %v4497, %v4497
        %v4520 = vcombine.high %v4504, %v4504
        %v4521 = vcombine.high %v4511, %v4511
        %v4522 = vcombine.high %v4518, %v4518
        %v4523 = vcombine.high %v123, %v123
        %v4525 = vunpack.c.l.s4 1966171168
        %v4526 = vunpack.c.0.s8 %v4525
        %v4527 = vlaneseq
        %v4528 = vshrl.u32 %v4527, 7
        %v4529 = vsub.s32 %v4526, %v4528
        %v4530 = vrot.slane %v123, %v4529
        %v4532 = vunpack.c.l.s4 1966171168
        %v4533 = vunpack.c.0.s8 %v4532
        %v4534 = vlaneseq
        %v4535 = vshrl.u32 %v4534, 7
        %v4536 = vsub.s32 %v4533, %v4535
        %v4537 = vrot.slane %v4523, %v4536
        %v4538 = vcombine.high %v4530, %v4530
        %v4539 = vcombine.high %v4537, %v4537
        %v4541 = vunpack.c.l.s4 1966171168
        %v4542 = vunpack.c.0.s8 %v4541
        %v4543 = vlaneseq
        %v4544 = vshrl.u32 %v4543, 7
        %v4545 = vsub.s32 %v4542, %v4544
        %v4546 = vrot.slane %v4530, %v4545
        %v4548 = vunpack.c.l.s4 1966171168
        %v4549 = vunpack.c.0.s8 %v4548
        %v4550 = vlaneseq
        %v4551 = vshrl.u32 %v4550, 7
        %v4552 = vsub.s32 %v4549, %v4551
        %v4553 = vrot.slane %v4537, %v4552
        %v4555 = vunpack.c.l.s4 1966171168
        %v4556 = vunpack.c.0.s8 %v4555
        %v4557 = vlaneseq
        %v4558 = vshrl.u32 %v4557, 7
        %v4559 = vsub.s32 %v4556, %v4558
        %v4560 = vrot.slane %v4538, %v4559
        %v4562 = vunpack.c.l.s4 1966171168
        %v4563 = vunpack.c.0.s8 %v4562
        %v4564 = vlaneseq
        %v4565 = vshrl.u32 %v4564, 7
        %v4566 = vsub.s32 %v4563, %v4565
        %v4567 = vrot.slane %v4539, %v4566
        %v4568 = vcombine.high %v4546, %v4546
        %v4569 = vcombine.high %v4553, %v4553
        %v4570 = vcombine.high %v4560, %v4560
        %v4571 = vcombine.high %v4567, %v4567
        %v4572 = vcombine.high %v124, %v124
        %v4574 = vunpack.c.l.s4 1966171168
        %v4575 = vunpack.c.0.s8 %v4574
        %v4576 = vlaneseq
        %v4577 = vshrl.u32 %v4576, 7
        %v4578 = vsub.s32 %v4575, %v4577
        %v4579 = vrot.slane %v124, %v4578
        %v4581 = vunpack.c.l.s4 1966171168
        %v4582 = vunpack.c.0.s8 %v4581
        %v4583 = vlaneseq
        %v4584 = vshrl.u32 %v4583, 7
        %v4585 = vsub.s32 %v4582, %v4584
        %v4586 = vrot.slane %v4572, %v4585
        %v4587 = vcombine.high %v4579, %v4579
        %v4588 = vcombine.high %v4586, %v4586
        %v4590 = vunpack.c.l.s4 1966171168
        %v4591 = vunpack.c.0.s8 %v4590
        %v4592 = vlaneseq
        %v4593 = vshrl.u32 %v4592, 7
        %v4594 = vsub.s32 %v4591, %v4593
        %v4595 = vrot.slane %v4579, %v4594
        %v4597 = vunpack.c.l.s4 1966171168
        %v4598 = vunpack.c.0.s8 %v4597
        %v4599 = vlaneseq
        %v4600 = vshrl.u32 %v4599, 7
        %v4601 = vsub.s32 %v4598, %v4600
        %v4602 = vrot.slane %v4586, %v4601
        %v4604 = vunpack.c.l.s4 1966171168
        %v4605 = vunpack.c.0.s8 %v4604
        %v4606 = vlaneseq
        %v4607 = vshrl.u32 %v4606, 7
        %v4608 = vsub.s32 %v4605, %v4607
        %v4609 = vrot.slane %v4587, %v4608
        %v4611 = vunpack.c.l.s4 1966171168
        %v4612 = vunpack.c.0.s8 %v4611
        %v4613 = vlaneseq
        %v4614 = vshrl.u32 %v4613, 7
        %v4615 = vsub.s32 %v4612, %v4614
        %v4616 = vrot.slane %v4588, %v4615
        %v4617 = vcombine.high %v4595, %v4595
        %v4618 = vcombine.high %v4602, %v4602
        %v4619 = vcombine.high %v4609, %v4609
        %v4620 = vcombine.high %v4616, %v4616
        %v4621 = vcombine.high %v125, %v125
        %v4623 = vunpack.c.l.s4 1966171168
        %v4624 = vunpack.c.0.s8 %v4623
        %v4625 = vlaneseq
        %v4626 = vshrl.u32 %v4625, 7
        %v4627 = vsub.s32 %v4624, %v4626
        %v4628 = vrot.slane %v125, %v4627
        %v4630 = vunpack.c.l.s4 1966171168
        %v4631 = vunpack.c.0.s8 %v4630
        %v4632 = vlaneseq
        %v4633 = vshrl.u32 %v4632, 7
        %v4634 = vsub.s32 %v4631, %v4633
        %v4635 = vrot.slane %v4621, %v4634
        %v4636 = vcombine.high %v4628, %v4628
        %v4637 = vcombine.high %v4635, %v4635
        %v4639 = vunpack.c.l.s4 1966171168
        %v4640 = vunpack.c.0.s8 %v4639
        %v4641 = vlaneseq
        %v4642 = vshrl.u32 %v4641, 7
        %v4643 = vsub.s32 %v4640, %v4642
        %v4644 = vrot.slane %v4628, %v4643
        %v4646 = vunpack.c.l.s4 1966171168
        %v4647 = vunpack.c.0.s8 %v4646
        %v4648 = vlaneseq
        %v4649 = vshrl.u32 %v4648, 7
        %v4650 = vsub.s32 %v4647, %v4649
        %v4651 = vrot.slane %v4635, %v4650
        %v4653 = vunpack.c.l.s4 1966171168
        %v4654 = vunpack.c.0.s8 %v4653
        %v4655 = vlaneseq
        %v4656 = vshrl.u32 %v4655, 7
        %v4657 = vsub.s32 %v4654, %v4656
        %v4658 = vrot.slane %v4636, %v4657
        %v4660 = vunpack.c.l.s4 1966171168
        %v4661 = vunpack.c.0.s8 %v4660
        %v4662 = vlaneseq
        %v4663 = vshrl.u32 %v4662, 7
        %v4664 = vsub.s32 %v4661, %v4663
        %v4665 = vrot.slane %v4637, %v4664
        %v4666 = vcombine.high %v4644, %v4644
        %v4667 = vcombine.high %v4651, %v4651
        %v4668 = vcombine.high %v4658, %v4658
        %v4669 = vcombine.high %v4665, %v4665
        %v4670 = vcombine.high %v126, %v126
        %v4672 = vunpack.c.l.s4 1966171168
        %v4673 = vunpack.c.0.s8 %v4672
        %v4674 = vlaneseq
        %v4675 = vshrl.u32 %v4674, 7
        %v4676 = vsub.s32 %v4673, %v4675
        %v4677 = vrot.slane %v126, %v4676
        %v4679 = vunpack.c.l.s4 1966171168
        %v4680 = vunpack.c.0.s8 %v4679
        %v4681 = vlaneseq
        %v4682 = vshrl.u32 %v4681, 7
        %v4683 = vsub.s32 %v4680, %v4682
        %v4684 = vrot.slane %v4670, %v4683
        %v4685 = vcombine.high %v4677, %v4677
        %v4686 = vcombine.high %v4684, %v4684
        %v4688 = vunpack.c.l.s4 1966171168
        %v4689 = vunpack.c.0.s8 %v4688
        %v4690 = vlaneseq
        %v4691 = vshrl.u32 %v4690, 7
        %v4692 = vsub.s32 %v4689, %v4691
        %v4693 = vrot.slane %v4677, %v4692
        %v4695 = vunpack.c.l.s4 1966171168
        %v4696 = vunpack.c.0.s8 %v4695
        %v4697 = vlaneseq
        %v4698 = vshrl.u32 %v4697, 7
        %v4699 = vsub.s32 %v4696, %v4698
        %v4700 = vrot.slane %v4684, %v4699
        %v4702 = vunpack.c.l.s4 1966171168
        %v4703 = vunpack.c.0.s8 %v4702
        %v4704 = vlaneseq
        %v4705 = vshrl.u32 %v4704, 7
        %v4706 = vsub.s32 %v4703, %v4705
        %v4707 = vrot.slane %v4685, %v4706
        %v4709 = vunpack.c.l.s4 1966171168
        %v4710 = vunpack.c.0.s8 %v4709
        %v4711 = vlaneseq
        %v4712 = vshrl.u32 %v4711, 7
        %v4713 = vsub.s32 %v4710, %v4712
        %v4714 = vrot.slane %v4686, %v4713
        %v4715 = vcombine.high %v4693, %v4693
        %v4716 = vcombine.high %v4700, %v4700
        %v4717 = vcombine.high %v4707, %v4707
        %v4718 = vcombine.high %v4714, %v4714
        %v4719 = vcombine.high %v127, %v127
        %v4721 = vunpack.c.l.s4 1966171168
        %v4722 = vunpack.c.0.s8 %v4721
        %v4723 = vlaneseq
        %v4724 = vshrl.u32 %v4723, 7
        %v4725 = vsub.s32 %v4722, %v4724
        %v4726 = vrot.slane %v127, %v4725
        %v4728 = vunpack.c.l.s4 1966171168
        %v4729 = vunpack.c.0.s8 %v4728
        %v4730 = vlaneseq
        %v4731 = vshrl.u32 %v4730, 7
        %v4732 = vsub.s32 %v4729, %v4731
        %v4733 = vrot.slane %v4719, %v4732
        %v4734 = vcombine.high %v4726, %v4726
        %v4735 = vcombine.high %v4733, %v4733
        %v4737 = vunpack.c.l.s4 1966171168
        %v4738 = vunpack.c.0.s8 %v4737
        %v4739 = vlaneseq
        %v4740 = vshrl.u32 %v4739, 7
        %v4741 = vsub.s32 %v4738, %v4740
        %v4742 = vrot.slane %v4726, %v4741
        %v4744 = vunpack.c.l.s4 1966171168
        %v4745 = vunpack.c.0.s8 %v4744
        %v4746 = vlaneseq
        %v4747 = vshrl.u32 %v4746, 7
        %v4748 = vsub.s32 %v4745, %v4747
        %v4749 = vrot.slane %v4733, %v4748
        %v4751 = vunpack.c.l.s4 1966171168
        %v4752 = vunpack.c.0.s8 %v4751
        %v4753 = vlaneseq
        %v4754 = vshrl.u32 %v4753, 7
        %v4755 = vsub.s32 %v4752, %v4754
        %v4756 = vrot.slane %v4734, %v4755
        %v4758 = vunpack.c.l.s4 1966171168
        %v4759 = vunpack.c.0.s8 %v4758
        %v4760 = vlaneseq
        %v4761 = vshrl.u32 %v4760, 7
        %v4762 = vsub.s32 %v4759, %v4761
        %v4763 = vrot.slane %v4735, %v4762
        %v4764 = vcombine.high %v4742, %v4742
        %v4765 = vcombine.high %v4749, %v4749
        %v4766 = vcombine.high %v4756, %v4756
        %v4767 = vcombine.high %v4763, %v4763
        %v4768 = vcombine.high %v128, %v128
        %v4770 = vunpack.c.l.s4 1966171168
        %v4771 = vunpack.c.0.s8 %v4770
        %v4772 = vlaneseq
        %v4773 = vshrl.u32 %v4772, 7
        %v4774 = vsub.s32 %v4771, %v4773
        %v4775 = vrot.slane %v128, %v4774
        %v4777 = vunpack.c.l.s4 1966171168
        %v4778 = vunpack.c.0.s8 %v4777
        %v4779 = vlaneseq
        %v4780 = vshrl.u32 %v4779, 7
        %v4781 = vsub.s32 %v4778, %v4780
        %v4782 = vrot.slane %v4768, %v4781
        %v4783 = vcombine.high %v4775, %v4775
        %v4784 = vcombine.high %v4782, %v4782
        %v4786 = vunpack.c.l.s4 1966171168
        %v4787 = vunpack.c.0.s8 %v4786
        %v4788 = vlaneseq
        %v4789 = vshrl.u32 %v4788, 7
        %v4790 = vsub.s32 %v4787, %v4789
        %v4791 = vrot.slane %v4775, %v4790
        %v4793 = vunpack.c.l.s4 1966171168
        %v4794 = vunpack.c.0.s8 %v4793
        %v4795 = vlaneseq
        %v4796 = vshrl.u32 %v4795, 7
        %v4797 = vsub.s32 %v4794, %v4796
        %v4798 = vrot.slane %v4782, %v4797
        %v4800 = vunpack.c.l.s4 1966171168
        %v4801 = vunpack.c.0.s8 %v4800
        %v4802 = vlaneseq
        %v4803 = vshrl.u32 %v4802, 7
        %v4804 = vsub.s32 %v4801, %v4803
        %v4805 = vrot.slane %v4783, %v4804
        %v4807 = vunpack.c.l.s4 1966171168
        %v4808 = vunpack.c.0.s8 %v4807
        %v4809 = vlaneseq
        %v4810 = vshrl.u32 %v4809, 7
        %v4811 = vsub.s32 %v4808, %v4810
        %v4812 = vrot.slane %v4784, %v4811
        %v4813 = vcombine.high %v4791, %v4791
        %v4814 = vcombine.high %v4798, %v4798
        %v4815 = vcombine.high %v4805, %v4805
        %v4816 = vcombine.high %v4812, %v4812
        %v4817 = vlaneseq
        %v4818 = vshrl.u32 %v4817, 7
        %v4819 = vsub.s32 0, %v4818
        %v4820 = vrot.slane %v4448, %v4819
        %v4821 = vlaneseq
        %v4822 = vshrl.u32 %v4821, 7
        %v4823 = vsub.s32 0, %v4822
        %v4824 = vrot.slane %v4462, %v4823
        %v4825 = vlaneseq
        %v4826 = vshrl.u32 %v4825, 7
        %v4827 = vsub.s32 0, %v4826
        %v4828 = vrot.slane %v4470, %v4827
        %v4829 = vlaneseq
        %v4830 = vshrl.u32 %v4829, 7
        %v4831 = vsub.s32 0, %v4830
        %v4832 = vrot.slane %v4472, %v4831
        %v4833 = vlaneseq
        %v4834 = vshrl.u32 %v4833, 7
        %v4835 = vsub.s32 0, %v4834
        %v4836 = vrot.slane %v4455, %v4835
        %v4837 = vlaneseq
        %v4838 = vshrl.u32 %v4837, 7
        %v4839 = vsub.s32 0, %v4838
        %v4840 = vrot.slane %v4469, %v4839
        %v4841 = vlaneseq
        %v4842 = vshrl.u32 %v4841, 7
        %v4843 = vsub.s32 0, %v4842
        %v4844 = vrot.slane %v4471, %v4843
        %v4845 = vlaneseq
        %v4846 = vshrl.u32 %v4845, 7
        %v4847 = vsub.s32 0, %v4846
        %v4848 = vrot.slane %v4473, %v4847
        %v4849 = vlaneseq
        %v4850 = vshrl.u32 %v4849, 7
        %v4851 = vsub.s32 0, %v4850
        %v4852 = vrot.slane %v4497, %v4851
        %v4853 = vlaneseq
        %v4854 = vshrl.u32 %v4853, 7
        %v4855 = vsub.s32 0, %v4854
        %v4856 = vrot.slane %v4511, %v4855
        %v4857 = vlaneseq
        %v4858 = vshrl.u32 %v4857, 7
        %v4859 = vsub.s32 0, %v4858
        %v4860 = vrot.slane %v4519, %v4859
        %v4861 = vlaneseq
        %v4862 = vshrl.u32 %v4861, 7
        %v4863 = vsub.s32 0, %v4862
        %v4864 = vrot.slane %v4521, %v4863
        %v4865 = vlaneseq
        %v4866 = vshrl.u32 %v4865, 7
        %v4867 = vsub.s32 0, %v4866
        %v4868 = vrot.slane %v4504, %v4867
        %v4869 = vlaneseq
        %v4870 = vshrl.u32 %v4869, 7
        %v4871 = vsub.s32 0, %v4870
        %v4872 = vrot.slane %v4518, %v4871
        %v4873 = vlaneseq
        %v4874 = vshrl.u32 %v4873, 7
        %v4875 = vsub.s32 0, %v4874
        %v4876 = vrot.slane %v4520, %v4875
        %v4877 = vlaneseq
        %v4878 = vshrl.u32 %v4877, 7
        %v4879 = vsub.s32 0, %v4878
        %v4880 = vrot.slane %v4522, %v4879
        %v4881 = vlaneseq
        %v4882 = vshrl.u32 %v4881, 7
        %v4883 = vsub.s32 0, %v4882
        %v4884 = vrot.slane %v4546, %v4883
        %v4885 = vlaneseq
        %v4886 = vshrl.u32 %v4885, 7
        %v4887 = vsub.s32 0, %v4886
        %v4888 = vrot.slane %v4560, %v4887
        %v4889 = vlaneseq
        %v4890 = vshrl.u32 %v4889, 7
        %v4891 = vsub.s32 0, %v4890
        %v4892 = vrot.slane %v4568, %v4891
        %v4893 = vlaneseq
        %v4894 = vshrl.u32 %v4893, 7
        %v4895 = vsub.s32 0, %v4894
        %v4896 = vrot.slane %v4570, %v4895
        %v4897 = vlaneseq
        %v4898 = vshrl.u32 %v4897, 7
        %v4899 = vsub.s32 0, %v4898
        %v4900 = vrot.slane %v4553, %v4899
        %v4901 = vlaneseq
        %v4902 = vshrl.u32 %v4901, 7
        %v4903 = vsub.s32 0, %v4902
        %v4904 = vrot.slane %v4567, %v4903
        %v4905 = vlaneseq
        %v4906 = vshrl.u32 %v4905, 7
        %v4907 = vsub.s32 0, %v4906
        %v4908 = vrot.slane %v4569, %v4907
        %v4909 = vlaneseq
        %v4910 = vshrl.u32 %v4909, 7
        %v4911 = vsub.s32 0, %v4910
        %v4912 = vrot.slane %v4571, %v4911
        %v4913 = vlaneseq
        %v4914 = vshrl.u32 %v4913, 7
        %v4915 = vsub.s32 0, %v4914
        %v4916 = vrot.slane %v4595, %v4915
        %v4917 = vlaneseq
        %v4918 = vshrl.u32 %v4917, 7
        %v4919 = vsub.s32 0, %v4918
        %v4920 = vrot.slane %v4609, %v4919
        %v4921 = vlaneseq
        %v4922 = vshrl.u32 %v4921, 7
        %v4923 = vsub.s32 0, %v4922
        %v4924 = vrot.slane %v4617, %v4923
        %v4925 = vlaneseq
        %v4926 = vshrl.u32 %v4925, 7
        %v4927 = vsub.s32 0, %v4926
        %v4928 = vrot.slane %v4619, %v4927
        %v4929 = vlaneseq
        %v4930 = vshrl.u32 %v4929, 7
        %v4931 = vsub.s32 0, %v4930
        %v4932 = vrot.slane %v4602, %v4931
        %v4933 = vlaneseq
        %v4934 = vshrl.u32 %v4933, 7
        %v4935 = vsub.s32 0, %v4934
        %v4936 = vrot.slane %v4616, %v4935
        %v4937 = vlaneseq
        %v4938 = vshrl.u32 %v4937, 7
        %v4939 = vsub.s32 0, %v4938
        %v4940 = vrot.slane %v4618, %v4939
        %v4941 = vlaneseq
        %v4942 = vshrl.u32 %v4941, 7
        %v4943 = vsub.s32 0, %v4942
        %v4944 = vrot.slane %v4620, %v4943
        %v4945 = vlaneseq
        %v4946 = vshrl.u32 %v4945, 7
        %v4947 = vsub.s32 0, %v4946
        %v4948 = vrot.slane %v4644, %v4947
        %v4949 = vlaneseq
        %v4950 = vshrl.u32 %v4949, 7
        %v4951 = vsub.s32 0, %v4950
        %v4952 = vrot.slane %v4658, %v4951
        %v4953 = vlaneseq
        %v4954 = vshrl.u32 %v4953, 7
        %v4955 = vsub.s32 0, %v4954
        %v4956 = vrot.slane %v4666, %v4955
        %v4957 = vlaneseq
        %v4958 = vshrl.u32 %v4957, 7
        %v4959 = vsub.s32 0, %v4958
        %v4960 = vrot.slane %v4668, %v4959
        %v4961 = vlaneseq
        %v4962 = vshrl.u32 %v4961, 7
        %v4963 = vsub.s32 0, %v4962
        %v4964 = vrot.slane %v4651, %v4963
        %v4965 = vlaneseq
        %v4966 = vshrl.u32 %v4965, 7
        %v4967 = vsub.s32 0, %v4966
        %v4968 = vrot.slane %v4665, %v4967
        %v4969 = vlaneseq
        %v4970 = vshrl.u32 %v4969, 7
        %v4971 = vsub.s32 0, %v4970
        %v4972 = vrot.slane %v4667, %v4971
        %v4973 = vlaneseq
        %v4974 = vshrl.u32 %v4973, 7
        %v4975 = vsub.s32 0, %v4974
        %v4976 = vrot.slane %v4669, %v4975
        %v4977 = vlaneseq
        %v4978 = vshrl.u32 %v4977, 7
        %v4979 = vsub.s32 0, %v4978
        %v4980 = vrot.slane %v4693, %v4979
        %v4981 = vlaneseq
        %v4982 = vshrl.u32 %v4981, 7
        %v4983 = vsub.s32 0, %v4982
        %v4984 = vrot.slane %v4707, %v4983
        %v4985 = vlaneseq
        %v4986 = vshrl.u32 %v4985, 7
        %v4987 = vsub.s32 0, %v4986
        %v4988 = vrot.slane %v4715, %v4987
        %v4989 = vlaneseq
        %v4990 = vshrl.u32 %v4989, 7
        %v4991 = vsub.s32 0, %v4990
        %v4992 = vrot.slane %v4717, %v4991
        %v4993 = vlaneseq
        %v4994 = vshrl.u32 %v4993, 7
        %v4995 = vsub.s32 0, %v4994
        %v4996 = vrot.slane %v4700, %v4995
        %v4997 = vlaneseq
        %v4998 = vshrl.u32 %v4997, 7
        %v4999 = vsub.s32 0, %v4998
        %v5000 = vrot.slane %v4714, %v4999
        %v5001 = vlaneseq
        %v5002 = vshrl.u32 %v5001, 7
        %v5003 = vsub.s32 0, %v5002
        %v5004 = vrot.slane %v4716, %v5003
        %v5005 = vlaneseq
        %v5006 = vshrl.u32 %v5005, 7
        %v5007 = vsub.s32 0, %v5006
        %v5008 = vrot.slane %v4718, %v5007
        %v5009 = vlaneseq
        %v5010 = vshrl.u32 %v5009, 7
        %v5011 = vsub.s32 0, %v5010
        %v5012 = vrot.slane %v4742, %v5011
        %v5013 = vlaneseq
        %v5014 = vshrl.u32 %v5013, 7
        %v5015 = vsub.s32 0, %v5014
        %v5016 = vrot.slane %v4756, %v5015
        %v5017 = vlaneseq
        %v5018 = vshrl.u32 %v5017, 7
        %v5019 = vsub.s32 0, %v5018
        %v5020 = vrot.slane %v4764, %v5019
        %v5021 = vlaneseq
        %v5022 = vshrl.u32 %v5021, 7
        %v5023 = vsub.s32 0, %v5022
        %v5024 = vrot.slane %v4766, %v5023
        %v5025 = vlaneseq
        %v5026 = vshrl.u32 %v5025, 7
        %v5027 = vsub.s32 0, %v5026
        %v5028 = vrot.slane %v4749, %v5027
        %v5029 = vlaneseq
        %v5030 = vshrl.u32 %v5029, 7
        %v5031 = vsub.s32 0, %v5030
        %v5032 = vrot.slane %v4763, %v5031
        %v5033 = vlaneseq
        %v5034 = vshrl.u32 %v5033, 7
        %v5035 = vsub.s32 0, %v5034
        %v5036 = vrot.slane %v4765, %v5035
        %v5037 = vlaneseq
        %v5038 = vshrl.u32 %v5037, 7
        %v5039 = vsub.s32 0, %v5038
        %v5040 = vrot.slane %v4767, %v5039
        %v5041 = vlaneseq
        %v5042 = vshrl.u32 %v5041, 7
        %v5043 = vsub.s32 0, %v5042
        %v5044 = vrot.slane %v4791, %v5043
        %v5045 = vlaneseq
        %v5046 = vshrl.u32 %v5045, 7
        %v5047 = vsub.s32 0, %v5046
        %v5048 = vrot.slane %v4805, %v5047
        %v5049 = vlaneseq
        %v5050 = vshrl.u32 %v5049, 7
        %v5051 = vsub.s32 0, %v5050
        %v5052 = vrot.slane %v4813, %v5051
        %v5053 = vlaneseq
        %v5054 = vshrl.u32 %v5053, 7
        %v5055 = vsub.s32 0, %v5054
        %v5056 = vrot.slane %v4815, %v5055
        %v5057 = vlaneseq
        %v5058 = vshrl.u32 %v5057, 7
        %v5059 = vsub.s32 0, %v5058
        %v5060 = vrot.slane %v4798, %v5059
        %v5061 = vlaneseq
        %v5062 = vshrl.u32 %v5061, 7
        %v5063 = vsub.s32 0, %v5062
        %v5064 = vrot.slane %v4812, %v5063
        %v5065 = vlaneseq
        %v5066 = vshrl.u32 %v5065, 7
        %v5067 = vsub.s32 0, %v5066
        %v5068 = vrot.slane %v4814, %v5067
        %v5069 = vlaneseq
        %v5070 = vshrl.u32 %v5069, 7
        %v5071 = vsub.s32 0, %v5070
        %v5072 = vrot.slane %v4816, %v5071
        %v5137 = vadd.f32 %v135, %v4820
        %v5138 = vadd.f32 %v139, %v4820
        %v5139 = vadd.f32 %v143, %v4820
        %v5140 = vadd.f32 %v147, %v4820
        %v5141 = vadd.f32 %v151, %v4820
        %v5142 = vadd.f32 %v155, %v4820
        %v5143 = vadd.f32 %v159, %v4820
        %v5144 = vadd.f32 %v163, %v4820
        %v5145 = vadd.f32 %v167, %v4820
        %v5146 = vadd.f32 %v171, %v4820
        %v5147 = vadd.f32 %v175, %v4820
        %v5148 = vadd.f32 %v179, %v4820
        %v5149 = vadd.f32 %v183, %v4820
        %v5150 = vadd.f32 %v187, %v4820
        %v5151 = vadd.f32 %v191, %v4820
        %v5152 = vadd.f32 %v195, %v4820
        %v5153 = vadd.f32 %v202, %v4824
        %v5154 = vadd.f32 %v206, %v4824
        %v5155 = vadd.f32 %v210, %v4824
        %v5156 = vadd.f32 %v214, %v4824
        %v5157 = vadd.f32 %v218, %v4824
        %v5158 = vadd.f32 %v222, %v4824
        %v5159 = vadd.f32 %v226, %v4824
        %v5160 = vadd.f32 %v230, %v4824
        %v5161 = vadd.f32 %v234, %v4824
        %v5162 = vadd.f32 %v238, %v4824
        %v5163 = vadd.f32 %v242, %v4824
        %v5164 = vadd.f32 %v246, %v4824
        %v5165 = vadd.f32 %v250, %v4824
        %v5166 = vadd.f32 %v254, %v4824
        %v5167 = vadd.f32 %v258, %v4824
        %v5168 = vadd.f32 %v262, %v4824
        %v5169 = vadd.f32 %v269, %v4828
        %v5170 = vadd.f32 %v273, %v4828
        %v5171 = vadd.f32 %v277, %v4828
        %v5172 = vadd.f32 %v281, %v4828
        %v5173 = vadd.f32 %v285, %v4828
        %v5174 = vadd.f32 %v289, %v4828
        %v5175 = vadd.f32 %v293, %v4828
        %v5176 = vadd.f32 %v297, %v4828
        %v5177 = vadd.f32 %v301, %v4828
        %v5178 = vadd.f32 %v305, %v4828
        %v5179 = vadd.f32 %v309, %v4828
        %v5180 = vadd.f32 %v313, %v4828
        %v5181 = vadd.f32 %v317, %v4828
        %v5182 = vadd.f32 %v321, %v4828
        %v5183 = vadd.f32 %v325, %v4828
        %v5184 = vadd.f32 %v329, %v4828
        %v5185 = vadd.f32 %v336, %v4832
        %v5186 = vadd.f32 %v340, %v4832
        %v5187 = vadd.f32 %v344, %v4832
        %v5188 = vadd.f32 %v348, %v4832
        %v5189 = vadd.f32 %v352, %v4832
        %v5190 = vadd.f32 %v356, %v4832
        %v5191 = vadd.f32 %v360, %v4832
        %v5192 = vadd.f32 %v364, %v4832
        %v5193 = vadd.f32 %v368, %v4832
        %v5194 = vadd.f32 %v372, %v4832
        %v5195 = vadd.f32 %v376, %v4832
        %v5196 = vadd.f32 %v380, %v4832
        %v5197 = vadd.f32 %v384, %v4832
        %v5198 = vadd.f32 %v388, %v4832
        %v5199 = vadd.f32 %v392, %v4832
        %v5200 = vadd.f32 %v396, %v4832
        %v5201 = vadd.f32 %v403, %v4836
        %v5202 = vadd.f32 %v407, %v4836
        %v5203 = vadd.f32 %v411, %v4836
        %v5204 = vadd.f32 %v415, %v4836
        %v5205 = vadd.f32 %v419, %v4836
        %v5206 = vadd.f32 %v423, %v4836
        %v5207 = vadd.f32 %v427, %v4836
        %v5208 = vadd.f32 %v431, %v4836
        %v5209 = vadd.f32 %v435, %v4836
        %v5210 = vadd.f32 %v439, %v4836
        %v5211 = vadd.f32 %v443, %v4836
        %v5212 = vadd.f32 %v447, %v4836
        %v5213 = vadd.f32 %v451, %v4836
        %v5214 = vadd.f32 %v455, %v4836
        %v5215 = vadd.f32 %v459, %v4836
        %v5216 = vadd.f32 %v463, %v4836
        %v5217 = vadd.f32 %v470, %v4840
        %v5218 = vadd.f32 %v474, %v4840
        %v5219 = vadd.f32 %v478, %v4840
        %v5220 = vadd.f32 %v482, %v4840
        %v5221 = vadd.f32 %v486, %v4840
        %v5222 = vadd.f32 %v490, %v4840
        %v5223 = vadd.f32 %v494, %v4840
        %v5224 = vadd.f32 %v498, %v4840
        %v5225 = vadd.f32 %v502, %v4840
        %v5226 = vadd.f32 %v506, %v4840
        %v5227 = vadd.f32 %v510, %v4840
        %v5228 = vadd.f32 %v514, %v4840
        %v5229 = vadd.f32 %v518, %v4840
        %v5230 = vadd.f32 %v522, %v4840
        %v5231 = vadd.f32 %v526, %v4840
        %v5232 = vadd.f32 %v530, %v4840
        %v5233 = vadd.f32 %v537, %v4844
        %v5234 = vadd.f32 %v541, %v4844
        %v5235 = vadd.f32 %v545, %v4844
        %v5236 = vadd.f32 %v549, %v4844
        %v5237 = vadd.f32 %v553, %v4844
        %v5238 = vadd.f32 %v557, %v4844
        %v5239 = vadd.f32 %v561, %v4844
        %v5240 = vadd.f32 %v565, %v4844
        %v5241 = vadd.f32 %v569, %v4844
        %v5242 = vadd.f32 %v573, %v4844
        %v5243 = vadd.f32 %v577, %v4844
        %v5244 = vadd.f32 %v581, %v4844
        %v5245 = vadd.f32 %v585, %v4844
        %v5246 = vadd.f32 %v589, %v4844
        %v5247 = vadd.f32 %v593, %v4844
        %v5248 = vadd.f32 %v597, %v4844
        %v5249 = vadd.f32 %v604, %v4848
        %v5250 = vadd.f32 %v608, %v4848
        %v5251 = vadd.f32 %v612, %v4848
        %v5252 = vadd.f32 %v616, %v4848
        %v5253 = vadd.f32 %v620, %v4848
        %v5254 = vadd.f32 %v624, %v4848
        %v5255 = vadd.f32 %v628, %v4848
        %v5256 = vadd.f32 %v632, %v4848
        %v5257 = vadd.f32 %v636, %v4848
        %v5258 = vadd.f32 %v640, %v4848
        %v5259 = vadd.f32 %v644, %v4848
        %v5260 = vadd.f32 %v648, %v4848
        %v5261 = vadd.f32 %v652, %v4848
        %v5262 = vadd.f32 %v656, %v4848
        %v5263 = vadd.f32 %v660, %v4848
        %v5264 = vadd.f32 %v664, %v4848
        %v5265 = vadd.f32 %v671, %v4852
        %v5266 = vadd.f32 %v675, %v4852
        %v5267 = vadd.f32 %v679, %v4852
        %v5268 = vadd.f32 %v683, %v4852
        %v5269 = vadd.f32 %v687, %v4852
        %v5270 = vadd.f32 %v691, %v4852
        %v5271 = vadd.f32 %v695, %v4852
        %v5272 = vadd.f32 %v699, %v4852
        %v5273 = vadd.f32 %v703, %v4852
        %v5274 = vadd.f32 %v707, %v4852
        %v5275 = vadd.f32 %v711, %v4852
        %v5276 = vadd.f32 %v715, %v4852
        %v5277 = vadd.f32 %v719, %v4852
        %v5278 = vadd.f32 %v723, %v4852
        %v5279 = vadd.f32 %v727, %v4852
        %v5280 = vadd.f32 %v731, %v4852
        %v5281 = vadd.f32 %v738, %v4856
        %v5282 = vadd.f32 %v742, %v4856
        %v5283 = vadd.f32 %v746, %v4856
        %v5284 = vadd.f32 %v750, %v4856
        %v5285 = vadd.f32 %v754, %v4856
        %v5286 = vadd.f32 %v758, %v4856
        %v5287 = vadd.f32 %v762, %v4856
        %v5288 = vadd.f32 %v766, %v4856
        %v5289 = vadd.f32 %v770, %v4856
        %v5290 = vadd.f32 %v774, %v4856
        %v5291 = vadd.f32 %v778, %v4856
        %v5292 = vadd.f32 %v782, %v4856
        %v5293 = vadd.f32 %v786, %v4856
        %v5294 = vadd.f32 %v790, %v4856
        %v5295 = vadd.f32 %v794, %v4856
        %v5296 = vadd.f32 %v798, %v4856
        %v5297 = vadd.f32 %v805, %v4860
        %v5298 = vadd.f32 %v809, %v4860
        %v5299 = vadd.f32 %v813, %v4860
        %v5300 = vadd.f32 %v817, %v4860
        %v5301 = vadd.f32 %v821, %v4860
        %v5302 = vadd.f32 %v825, %v4860
        %v5303 = vadd.f32 %v829, %v4860
        %v5304 = vadd.f32 %v833, %v4860
        %v5305 = vadd.f32 %v837, %v4860
        %v5306 = vadd.f32 %v841, %v4860
        %v5307 = vadd.f32 %v845, %v4860
        %v5308 = vadd.f32 %v849, %v4860
        %v5309 = vadd.f32 %v853, %v4860
        %v5310 = vadd.f32 %v857, %v4860
        %v5311 = vadd.f32 %v861, %v4860
        %v5312 = vadd.f32 %v865, %v4860
        %v5313 = vadd.f32 %v872, %v4864
        %v5314 = vadd.f32 %v876, %v4864
        %v5315 = vadd.f32 %v880, %v4864
        %v5316 = vadd.f32 %v884, %v4864
        %v5317 = vadd.f32 %v888, %v4864
        %v5318 = vadd.f32 %v892, %v4864
        %v5319 = vadd.f32 %v896, %v4864
        %v5320 = vadd.f32 %v900, %v4864
        %v5321 = vadd.f32 %v904, %v4864
        %v5322 = vadd.f32 %v908, %v4864
        %v5323 = vadd.f32 %v912, %v4864
        %v5324 = vadd.f32 %v916, %v4864
        %v5325 = vadd.f32 %v920, %v4864
        %v5326 = vadd.f32 %v924, %v4864
        %v5327 = vadd.f32 %v928, %v4864
        %v5328 = vadd.f32 %v932, %v4864
        %v5329 = vadd.f32 %v939, %v4868
        %v5330 = vadd.f32 %v943, %v4868
        %v5331 = vadd.f32 %v947, %v4868
        %v5332 = vadd.f32 %v951, %v4868
        %v5333 = vadd.f32 %v955, %v4868
        %v5334 = vadd.f32 %v959, %v4868
        %v5335 = vadd.f32 %v963, %v4868
        %v5336 = vadd.f32 %v967, %v4868
        %v5337 = vadd.f32 %v971, %v4868
        %v5338 = vadd.f32 %v975, %v4868
        %v5339 = vadd.f32 %v979, %v4868
        %v5340 = vadd.f32 %v983, %v4868
        %v5341 = vadd.f32 %v987, %v4868
        %v5342 = vadd.f32 %v991, %v4868
        %v5343 = vadd.f32 %v995, %v4868
        %v5344 = vadd.f32 %v999, %v4868
        %v5345 = vadd.f32 %v1006, %v4872
        %v5346 = vadd.f32 %v1010, %v4872
        %v5347 = vadd.f32 %v1014, %v4872
        %v5348 = vadd.f32 %v1018, %v4872
        %v5349 = vadd.f32 %v1022, %v4872
        %v5350 = vadd.f32 %v1026, %v4872
        %v5351 = vadd.f32 %v1030, %v4872
        %v5352 = vadd.f32 %v1034, %v4872
        %v5353 = vadd.f32 %v1038, %v4872
        %v5354 = vadd.f32 %v1042, %v4872
        %v5355 = vadd.f32 %v1046, %v4872
        %v5356 = vadd.f32 %v1050, %v4872
        %v5357 = vadd.f32 %v1054, %v4872
        %v5358 = vadd.f32 %v1058, %v4872
        %v5359 = vadd.f32 %v1062, %v4872
        %v5360 = vadd.f32 %v1066, %v4872
        %v5361 = vadd.f32 %v1073, %v4876
        %v5362 = vadd.f32 %v1077, %v4876
        %v5363 = vadd.f32 %v1081, %v4876
        %v5364 = vadd.f32 %v1085, %v4876
        %v5365 = vadd.f32 %v1089, %v4876
        %v5366 = vadd.f32 %v1093, %v4876
        %v5367 = vadd.f32 %v1097, %v4876
        %v5368 = vadd.f32 %v1101, %v4876
        %v5369 = vadd.f32 %v1105, %v4876
        %v5370 = vadd.f32 %v1109, %v4876
        %v5371 = vadd.f32 %v1113, %v4876
        %v5372 = vadd.f32 %v1117, %v4876
        %v5373 = vadd.f32 %v1121, %v4876
        %v5374 = vadd.f32 %v1125, %v4876
        %v5375 = vadd.f32 %v1129, %v4876
        %v5376 = vadd.f32 %v1133, %v4876
        %v5377 = vadd.f32 %v1140, %v4880
        %v5378 = vadd.f32 %v1144, %v4880
        %v5379 = vadd.f32 %v1148, %v4880
        %v5380 = vadd.f32 %v1152, %v4880
        %v5381 = vadd.f32 %v1156, %v4880
        %v5382 = vadd.f32 %v1160, %v4880
        %v5383 = vadd.f32 %v1164, %v4880
        %v5384 = vadd.f32 %v1168, %v4880
        %v5385 = vadd.f32 %v1172, %v4880
        %v5386 = vadd.f32 %v1176, %v4880
        %v5387 = vadd.f32 %v1180, %v4880
        %v5388 = vadd.f32 %v1184, %v4880
        %v5389 = vadd.f32 %v1188, %v4880
        %v5390 = vadd.f32 %v1192, %v4880
        %v5391 = vadd.f32 %v1196, %v4880
        %v5392 = vadd.f32 %v1200, %v4880
        %v5393 = vadd.f32 %v1207, %v4884
        %v5394 = vadd.f32 %v1211, %v4884
        %v5395 = vadd.f32 %v1215, %v4884
        %v5396 = vadd.f32 %v1219, %v4884
        %v5397 = vadd.f32 %v1223, %v4884
        %v5398 = vadd.f32 %v1227, %v4884
        %v5399 = vadd.f32 %v1231, %v4884
        %v5400 = vadd.f32 %v1235, %v4884
        %v5401 = vadd.f32 %v1239, %v4884
        %v5402 = vadd.f32 %v1243, %v4884
        %v5403 = vadd.f32 %v1247, %v4884
        %v5404 = vadd.f32 %v1251, %v4884
        %v5405 = vadd.f32 %v1255, %v4884
        %v5406 = vadd.f32 %v1259, %v4884
        %v5407 = vadd.f32 %v1263, %v4884
        %v5408 = vadd.f32 %v1267, %v4884
        %v5409 = vadd.f32 %v1274, %v4888
        %v5410 = vadd.f32 %v1278, %v4888
        %v5411 = vadd.f32 %v1282, %v4888
        %v5412 = vadd.f32 %v1286, %v4888
        %v5413 = vadd.f32 %v1290, %v4888
        %v5414 = vadd.f32 %v1294, %v4888
        %v5415 = vadd.f32 %v1298, %v4888
        %v5416 = vadd.f32 %v1302, %v4888
        %v5417 = vadd.f32 %v1306, %v4888
        %v5418 = vadd.f32 %v1310, %v4888
        %v5419 = vadd.f32 %v1314, %v4888
        %v5420 = vadd.f32 %v1318, %v4888
        %v5421 = vadd.f32 %v1322, %v4888
        %v5422 = vadd.f32 %v1326, %v4888
        %v5423 = vadd.f32 %v1330, %v4888
        %v5424 = vadd.f32 %v1334, %v4888
        %v5425 = vadd.f32 %v1341, %v4892
        %v5426 = vadd.f32 %v1345, %v4892
        %v5427 = vadd.f32 %v1349, %v4892
        %v5428 = vadd.f32 %v1353, %v4892
        %v5429 = vadd.f32 %v1357, %v4892
        %v5430 = vadd.f32 %v1361, %v4892
        %v5431 = vadd.f32 %v1365, %v4892
        %v5432 = vadd.f32 %v1369, %v4892
        %v5433 = vadd.f32 %v1373, %v4892
        %v5434 = vadd.f32 %v1377, %v4892
        %v5435 = vadd.f32 %v1381, %v4892
        %v5436 = vadd.f32 %v1385, %v4892
        %v5437 = vadd.f32 %v1389, %v4892
        %v5438 = vadd.f32 %v1393, %v4892
        %v5439 = vadd.f32 %v1397, %v4892
        %v5440 = vadd.f32 %v1401, %v4892
        %v5441 = vadd.f32 %v1408, %v4896
        %v5442 = vadd.f32 %v1412, %v4896
        %v5443 = vadd.f32 %v1416, %v4896
        %v5444 = vadd.f32 %v1420, %v4896
        %v5445 = vadd.f32 %v1424, %v4896
        %v5446 = vadd.f32 %v1428, %v4896
        %v5447 = vadd.f32 %v1432, %v4896
        %v5448 = vadd.f32 %v1436, %v4896
        %v5449 = vadd.f32 %v1440, %v4896
        %v5450 = vadd.f32 %v1444, %v4896
        %v5451 = vadd.f32 %v1448, %v4896
        %v5452 = vadd.f32 %v1452, %v4896
        %v5453 = vadd.f32 %v1456, %v4896
        %v5454 = vadd.f32 %v1460, %v4896
        %v5455 = vadd.f32 %v1464, %v4896
        %v5456 = vadd.f32 %v1468, %v4896
        %v5457 = vadd.f32 %v1475, %v4900
        %v5458 = vadd.f32 %v1479, %v4900
        %v5459 = vadd.f32 %v1483, %v4900
        %v5460 = vadd.f32 %v1487, %v4900
        %v5461 = vadd.f32 %v1491, %v4900
        %v5462 = vadd.f32 %v1495, %v4900
        %v5463 = vadd.f32 %v1499, %v4900
        %v5464 = vadd.f32 %v1503, %v4900
        %v5465 = vadd.f32 %v1507, %v4900
        %v5466 = vadd.f32 %v1511, %v4900
        %v5467 = vadd.f32 %v1515, %v4900
        %v5468 = vadd.f32 %v1519, %v4900
        %v5469 = vadd.f32 %v1523, %v4900
        %v5470 = vadd.f32 %v1527, %v4900
        %v5471 = vadd.f32 %v1531, %v4900
        %v5472 = vadd.f32 %v1535, %v4900
        %v5473 = vadd.f32 %v1542, %v4904
        %v5474 = vadd.f32 %v1546, %v4904
        %v5475 = vadd.f32 %v1550, %v4904
        %v5476 = vadd.f32 %v1554, %v4904
        %v5477 = vadd.f32 %v1558, %v4904
        %v5478 = vadd.f32 %v1562, %v4904
        %v5479 = vadd.f32 %v1566, %v4904
        %v5480 = vadd.f32 %v1570, %v4904
        %v5481 = vadd.f32 %v1574, %v4904
        %v5482 = vadd.f32 %v1578, %v4904
        %v5483 = vadd.f32 %v1582, %v4904
        %v5484 = vadd.f32 %v1586, %v4904
        %v5485 = vadd.f32 %v1590, %v4904
        %v5486 = vadd.f32 %v1594, %v4904
        %v5487 = vadd.f32 %v1598, %v4904
        %v5488 = vadd.f32 %v1602, %v4904
        %v5489 = vadd.f32 %v1609, %v4908
        %v5490 = vadd.f32 %v1613, %v4908
        %v5491 = vadd.f32 %v1617, %v4908
        %v5492 = vadd.f32 %v1621, %v4908
        %v5493 = vadd.f32 %v1625, %v4908
        %v5494 = vadd.f32 %v1629, %v4908
        %v5495 = vadd.f32 %v1633, %v4908
        %v5496 = vadd.f32 %v1637, %v4908
        %v5497 = vadd.f32 %v1641, %v4908
        %v5498 = vadd.f32 %v1645, %v4908
        %v5499 = vadd.f32 %v1649, %v4908
        %v5500 = vadd.f32 %v1653, %v4908
        %v5501 = vadd.f32 %v1657, %v4908
        %v5502 = vadd.f32 %v1661, %v4908
        %v5503 = vadd.f32 %v1665, %v4908
        %v5504 = vadd.f32 %v1669, %v4908
        %v5505 = vadd.f32 %v1676, %v4912
        %v5506 = vadd.f32 %v1680, %v4912
        %v5507 = vadd.f32 %v1684, %v4912
        %v5508 = vadd.f32 %v1688, %v4912
        %v5509 = vadd.f32 %v1692, %v4912
        %v5510 = vadd.f32 %v1696, %v4912
        %v5511 = vadd.f32 %v1700, %v4912
        %v5512 = vadd.f32 %v1704, %v4912
        %v5513 = vadd.f32 %v1708, %v4912
        %v5514 = vadd.f32 %v1712, %v4912
        %v5515 = vadd.f32 %v1716, %v4912
        %v5516 = vadd.f32 %v1720, %v4912
        %v5517 = vadd.f32 %v1724, %v4912
        %v5518 = vadd.f32 %v1728, %v4912
        %v5519 = vadd.f32 %v1732, %v4912
        %v5520 = vadd.f32 %v1736, %v4912
        %v5521 = vadd.f32 %v1743, %v4916
        %v5522 = vadd.f32 %v1747, %v4916
        %v5523 = vadd.f32 %v1751, %v4916
        %v5524 = vadd.f32 %v1755, %v4916
        %v5525 = vadd.f32 %v1759, %v4916
        %v5526 = vadd.f32 %v1763, %v4916
        %v5527 = vadd.f32 %v1767, %v4916
        %v5528 = vadd.f32 %v1771, %v4916
        %v5529 = vadd.f32 %v1775, %v4916
        %v5530 = vadd.f32 %v1779, %v4916
        %v5531 = vadd.f32 %v1783, %v4916
        %v5532 = vadd.f32 %v1787, %v4916
        %v5533 = vadd.f32 %v1791, %v4916
        %v5534 = vadd.f32 %v1795, %v4916
        %v5535 = vadd.f32 %v1799, %v4916
        %v5536 = vadd.f32 %v1803, %v4916
        %v5537 = vadd.f32 %v1810, %v4920
        %v5538 = vadd.f32 %v1814, %v4920
        %v5539 = vadd.f32 %v1818, %v4920
        %v5540 = vadd.f32 %v1822, %v4920
        %v5541 = vadd.f32 %v1826, %v4920
        %v5542 = vadd.f32 %v1830, %v4920
        %v5543 = vadd.f32 %v1834, %v4920
        %v5544 = vadd.f32 %v1838, %v4920
        %v5545 = vadd.f32 %v1842, %v4920
        %v5546 = vadd.f32 %v1846, %v4920
        %v5547 = vadd.f32 %v1850, %v4920
        %v5548 = vadd.f32 %v1854, %v4920
        %v5549 = vadd.f32 %v1858, %v4920
        %v5550 = vadd.f32 %v1862, %v4920
        %v5551 = vadd.f32 %v1866, %v4920
        %v5552 = vadd.f32 %v1870, %v4920
        %v5553 = vadd.f32 %v1877, %v4924
        %v5554 = vadd.f32 %v1881, %v4924
        %v5555 = vadd.f32 %v1885, %v4924
        %v5556 = vadd.f32 %v1889, %v4924
        %v5557 = vadd.f32 %v1893, %v4924
        %v5558 = vadd.f32 %v1897, %v4924
        %v5559 = vadd.f32 %v1901, %v4924
        %v5560 = vadd.f32 %v1905, %v4924
        %v5561 = vadd.f32 %v1909, %v4924
        %v5562 = vadd.f32 %v1913, %v4924
        %v5563 = vadd.f32 %v1917, %v4924
        %v5564 = vadd.f32 %v1921, %v4924
        %v5565 = vadd.f32 %v1925, %v4924
        %v5566 = vadd.f32 %v1929, %v4924
        %v5567 = vadd.f32 %v1933, %v4924
        %v5568 = vadd.f32 %v1937, %v4924
        %v5569 = vadd.f32 %v1944, %v4928
        %v5570 = vadd.f32 %v1948, %v4928
        %v5571 = vadd.f32 %v1952, %v4928
        %v5572 = vadd.f32 %v1956, %v4928
        %v5573 = vadd.f32 %v1960, %v4928
        %v5574 = vadd.f32 %v1964, %v4928
        %v5575 = vadd.f32 %v1968, %v4928
        %v5576 = vadd.f32 %v1972, %v4928
        %v5577 = vadd.f32 %v1976, %v4928
        %v5578 = vadd.f32 %v1980, %v4928
        %v5579 = vadd.f32 %v1984, %v4928
        %v5580 = vadd.f32 %v1988, %v4928
        %v5581 = vadd.f32 %v1992, %v4928
        %v5582 = vadd.f32 %v1996, %v4928
        %v5583 = vadd.f32 %v2000, %v4928
        %v5584 = vadd.f32 %v2004, %v4928
        %v5585 = vadd.f32 %v2011, %v4932
        %v5586 = vadd.f32 %v2015, %v4932
        %v5587 = vadd.f32 %v2019, %v4932
        %v5588 = vadd.f32 %v2023, %v4932
        %v5589 = vadd.f32 %v2027, %v4932
        %v5590 = vadd.f32 %v2031, %v4932
        %v5591 = vadd.f32 %v2035, %v4932
        %v5592 = vadd.f32 %v2039, %v4932
        %v5593 = vadd.f32 %v2043, %v4932
        %v5594 = vadd.f32 %v2047, %v4932
        %v5595 = vadd.f32 %v2051, %v4932
        %v5596 = vadd.f32 %v2055, %v4932
        %v5597 = vadd.f32 %v2059, %v4932
        %v5598 = vadd.f32 %v2063, %v4932
        %v5599 = vadd.f32 %v2067, %v4932
        %v5600 = vadd.f32 %v2071, %v4932
        %v5601 = vadd.f32 %v2078, %v4936
        %v5602 = vadd.f32 %v2082, %v4936
        %v5603 = vadd.f32 %v2086, %v4936
        %v5604 = vadd.f32 %v2090, %v4936
        %v5605 = vadd.f32 %v2094, %v4936
        %v5606 = vadd.f32 %v2098, %v4936
        %v5607 = vadd.f32 %v2102, %v4936
        %v5608 = vadd.f32 %v2106, %v4936
        %v5609 = vadd.f32 %v2110, %v4936
        %v5610 = vadd.f32 %v2114, %v4936
        %v5611 = vadd.f32 %v2118, %v4936
        %v5612 = vadd.f32 %v2122, %v4936
        %v5613 = vadd.f32 %v2126, %v4936
        %v5614 = vadd.f32 %v2130, %v4936
        %v5615 = vadd.f32 %v2134, %v4936
        %v5616 = vadd.f32 %v2138, %v4936
        %v5617 = vadd.f32 %v2145, %v4940
        %v5618 = vadd.f32 %v2149, %v4940
        %v5619 = vadd.f32 %v2153, %v4940
        %v5620 = vadd.f32 %v2157, %v4940
        %v5621 = vadd.f32 %v2161, %v4940
        %v5622 = vadd.f32 %v2165, %v4940
        %v5623 = vadd.f32 %v2169, %v4940
        %v5624 = vadd.f32 %v2173, %v4940
        %v5625 = vadd.f32 %v2177, %v4940
        %v5626 = vadd.f32 %v2181, %v4940
        %v5627 = vadd.f32 %v2185, %v4940
        %v5628 = vadd.f32 %v2189, %v4940
        %v5629 = vadd.f32 %v2193, %v4940
        %v5630 = vadd.f32 %v2197, %v4940
        %v5631 = vadd.f32 %v2201, %v4940
        %v5632 = vadd.f32 %v2205, %v4940
        %v5633 = vadd.f32 %v2212, %v4944
        %v5634 = vadd.f32 %v2216, %v4944
        %v5635 = vadd.f32 %v2220, %v4944
        %v5636 = vadd.f32 %v2224, %v4944
        %v5637 = vadd.f32 %v2228, %v4944
        %v5638 = vadd.f32 %v2232, %v4944
        %v5639 = vadd.f32 %v2236, %v4944
        %v5640 = vadd.f32 %v2240, %v4944
        %v5641 = vadd.f32 %v2244, %v4944
        %v5642 = vadd.f32 %v2248, %v4944
        %v5643 = vadd.f32 %v2252, %v4944
        %v5644 = vadd.f32 %v2256, %v4944
        %v5645 = vadd.f32 %v2260, %v4944
        %v5646 = vadd.f32 %v2264, %v4944
        %v5647 = vadd.f32 %v2268, %v4944
        %v5648 = vadd.f32 %v2272, %v4944
        %v5649 = vadd.f32 %v2279, %v4948
        %v5650 = vadd.f32 %v2283, %v4948
        %v5651 = vadd.f32 %v2287, %v4948
        %v5652 = vadd.f32 %v2291, %v4948
        %v5653 = vadd.f32 %v2295, %v4948
        %v5654 = vadd.f32 %v2299, %v4948
        %v5655 = vadd.f32 %v2303, %v4948
        %v5656 = vadd.f32 %v2307, %v4948
        %v5657 = vadd.f32 %v2311, %v4948
        %v5658 = vadd.f32 %v2315, %v4948
        %v5659 = vadd.f32 %v2319, %v4948
        %v5660 = vadd.f32 %v2323, %v4948
        %v5661 = vadd.f32 %v2327, %v4948
        %v5662 = vadd.f32 %v2331, %v4948
        %v5663 = vadd.f32 %v2335, %v4948
        %v5664 = vadd.f32 %v2339, %v4948
        %v5665 = vadd.f32 %v2346, %v4952
        %v5666 = vadd.f32 %v2350, %v4952
        %v5667 = vadd.f32 %v2354, %v4952
        %v5668 = vadd.f32 %v2358, %v4952
        %v5669 = vadd.f32 %v2362, %v4952
        %v5670 = vadd.f32 %v2366, %v4952
        %v5671 = vadd.f32 %v2370, %v4952
        %v5672 = vadd.f32 %v2374, %v4952
        %v5673 = vadd.f32 %v2378, %v4952
        %v5674 = vadd.f32 %v2382, %v4952
        %v5675 = vadd.f32 %v2386, %v4952
        %v5676 = vadd.f32 %v2390, %v4952
        %v5677 = vadd.f32 %v2394, %v4952
        %v5678 = vadd.f32 %v2398, %v4952
        %v5679 = vadd.f32 %v2402, %v4952
        %v5680 = vadd.f32 %v2406, %v4952
        %v5681 = vadd.f32 %v2413, %v4956
        %v5682 = vadd.f32 %v2417, %v4956
        %v5683 = vadd.f32 %v2421, %v4956
        %v5684 = vadd.f32 %v2425, %v4956
        %v5685 = vadd.f32 %v2429, %v4956
        %v5686 = vadd.f32 %v2433, %v4956
        %v5687 = vadd.f32 %v2437, %v4956
        %v5688 = vadd.f32 %v2441, %v4956
        %v5689 = vadd.f32 %v2445, %v4956
        %v5690 = vadd.f32 %v2449, %v4956
        %v5691 = vadd.f32 %v2453, %v4956
        %v5692 = vadd.f32 %v2457, %v4956
        %v5693 = vadd.f32 %v2461, %v4956
        %v5694 = vadd.f32 %v2465, %v4956
        %v5695 = vadd.f32 %v2469, %v4956
        %v5696 = vadd.f32 %v2473, %v4956
        %v5697 = vadd.f32 %v2480, %v4960
        %v5698 = vadd.f32 %v2484, %v4960
        %v5699 = vadd.f32 %v2488, %v4960
        %v5700 = vadd.f32 %v2492, %v4960
        %v5701 = vadd.f32 %v2496, %v4960
        %v5702 = vadd.f32 %v2500, %v4960
        %v5703 = vadd.f32 %v2504, %v4960
        %v5704 = vadd.f32 %v2508, %v4960
        %v5705 = vadd.f32 %v2512, %v4960
        %v5706 = vadd.f32 %v2516, %v4960
        %v5707 = vadd.f32 %v2520, %v4960
        %v5708 = vadd.f32 %v2524, %v4960
        %v5709 = vadd.f32 %v2528, %v4960
        %v5710 = vadd.f32 %v2532, %v4960
        %v5711 = vadd.f32 %v2536, %v4960
        %v5712 = vadd.f32 %v2540, %v4960
        %v5713 = vadd.f32 %v2547, %v4964
        %v5714 = vadd.f32 %v2551, %v4964
        %v5715 = vadd.f32 %v2555, %v4964
        %v5716 = vadd.f32 %v2559, %v4964
        %v5717 = vadd.f32 %v2563, %v4964
        %v5718 = vadd.f32 %v2567, %v4964
        %v5719 = vadd.f32 %v2571, %v4964
        %v5720 = vadd.f32 %v2575, %v4964
        %v5721 = vadd.f32 %v2579, %v4964
        %v5722 = vadd.f32 %v2583, %v4964
        %v5723 = vadd.f32 %v2587, %v4964
        %v5724 = vadd.f32 %v2591, %v4964
        %v5725 = vadd.f32 %v2595, %v4964
        %v5726 = vadd.f32 %v2599, %v4964
        %v5727 = vadd.f32 %v2603, %v4964
        %v5728 = vadd.f32 %v2607, %v4964
        %v5729 = vadd.f32 %v2614, %v4968
        %v5730 = vadd.f32 %v2618, %v4968
        %v5731 = vadd.f32 %v2622, %v4968
        %v5732 = vadd.f32 %v2626, %v4968
        %v5733 = vadd.f32 %v2630, %v4968
        %v5734 = vadd.f32 %v2634, %v4968
        %v5735 = vadd.f32 %v2638, %v4968
        %v5736 = vadd.f32 %v2642, %v4968
        %v5737 = vadd.f32 %v2646, %v4968
        %v5738 = vadd.f32 %v2650, %v4968
        %v5739 = vadd.f32 %v2654, %v4968
        %v5740 = vadd.f32 %v2658, %v4968
        %v5741 = vadd.f32 %v2662, %v4968
        %v5742 = vadd.f32 %v2666, %v4968
        %v5743 = vadd.f32 %v2670, %v4968
        %v5744 = vadd.f32 %v2674, %v4968
        %v5745 = vadd.f32 %v2681, %v4972
        %v5746 = vadd.f32 %v2685, %v4972
        %v5747 = vadd.f32 %v2689, %v4972
        %v5748 = vadd.f32 %v2693, %v4972
        %v5749 = vadd.f32 %v2697, %v4972
        %v5750 = vadd.f32 %v2701, %v4972
        %v5751 = vadd.f32 %v2705, %v4972
        %v5752 = vadd.f32 %v2709, %v4972
        %v5753 = vadd.f32 %v2713, %v4972
        %v5754 = vadd.f32 %v2717, %v4972
        %v5755 = vadd.f32 %v2721, %v4972
        %v5756 = vadd.f32 %v2725, %v4972
        %v5757 = vadd.f32 %v2729, %v4972
        %v5758 = vadd.f32 %v2733, %v4972
        %v5759 = vadd.f32 %v2737, %v4972
        %v5760 = vadd.f32 %v2741, %v4972
        %v5761 = vadd.f32 %v2748, %v4976
        %v5762 = vadd.f32 %v2752, %v4976
        %v5763 = vadd.f32 %v2756, %v4976
        %v5764 = vadd.f32 %v2760, %v4976
        %v5765 = vadd.f32 %v2764, %v4976
        %v5766 = vadd.f32 %v2768, %v4976
        %v5767 = vadd.f32 %v2772, %v4976
        %v5768 = vadd.f32 %v2776, %v4976
        %v5769 = vadd.f32 %v2780, %v4976
        %v5770 = vadd.f32 %v2784, %v4976
        %v5771 = vadd.f32 %v2788, %v4976
        %v5772 = vadd.f32 %v2792, %v4976
        %v5773 = vadd.f32 %v2796, %v4976
        %v5774 = vadd.f32 %v2800, %v4976
        %v5775 = vadd.f32 %v2804, %v4976
        %v5776 = vadd.f32 %v2808, %v4976
        %v5777 = vadd.f32 %v2815, %v4980
        %v5778 = vadd.f32 %v2819, %v4980
        %v5779 = vadd.f32 %v2823, %v4980
        %v5780 = vadd.f32 %v2827, %v4980
        %v5781 = vadd.f32 %v2831, %v4980
        %v5782 = vadd.f32 %v2835, %v4980
        %v5783 = vadd.f32 %v2839, %v4980
        %v5784 = vadd.f32 %v2843, %v4980
        %v5785 = vadd.f32 %v2847, %v4980
        %v5786 = vadd.f32 %v2851, %v4980
        %v5787 = vadd.f32 %v2855, %v4980
        %v5788 = vadd.f32 %v2859, %v4980
        %v5789 = vadd.f32 %v2863, %v4980
        %v5790 = vadd.f32 %v2867, %v4980
        %v5791 = vadd.f32 %v2871, %v4980
        %v5792 = vadd.f32 %v2875, %v4980
        %v5793 = vadd.f32 %v2882, %v4984
        %v5794 = vadd.f32 %v2886, %v4984
        %v5795 = vadd.f32 %v2890, %v4984
        %v5796 = vadd.f32 %v2894, %v4984
        %v5797 = vadd.f32 %v2898, %v4984
        %v5798 = vadd.f32 %v2902, %v4984
        %v5799 = vadd.f32 %v2906, %v4984
        %v5800 = vadd.f32 %v2910, %v4984
        %v5801 = vadd.f32 %v2914, %v4984
        %v5802 = vadd.f32 %v2918, %v4984
        %v5803 = vadd.f32 %v2922, %v4984
        %v5804 = vadd.f32 %v2926, %v4984
        %v5805 = vadd.f32 %v2930, %v4984
        %v5806 = vadd.f32 %v2934, %v4984
        %v5807 = vadd.f32 %v2938, %v4984
        %v5808 = vadd.f32 %v2942, %v4984
        %v5809 = vadd.f32 %v2949, %v4988
        %v5810 = vadd.f32 %v2953, %v4988
        %v5811 = vadd.f32 %v2957, %v4988
        %v5812 = vadd.f32 %v2961, %v4988
        %v5813 = vadd.f32 %v2965, %v4988
        %v5814 = vadd.f32 %v2969, %v4988
        %v5815 = vadd.f32 %v2973, %v4988
        %v5816 = vadd.f32 %v2977, %v4988
        %v5817 = vadd.f32 %v2981, %v4988
        %v5818 = vadd.f32 %v2985, %v4988
        %v5819 = vadd.f32 %v2989, %v4988
        %v5820 = vadd.f32 %v2993, %v4988
        %v5821 = vadd.f32 %v2997, %v4988
        %v5822 = vadd.f32 %v3001, %v4988
        %v5823 = vadd.f32 %v3005, %v4988
        %v5824 = vadd.f32 %v3009, %v4988
        %v5825 = vadd.f32 %v3016, %v4992
        %v5826 = vadd.f32 %v3020, %v4992
        %v5827 = vadd.f32 %v3024, %v4992
        %v5828 = vadd.f32 %v3028, %v4992
        %v5829 = vadd.f32 %v3032, %v4992
        %v5830 = vadd.f32 %v3036, %v4992
        %v5831 = vadd.f32 %v3040, %v4992
        %v5832 = vadd.f32 %v3044, %v4992
        %v5833 = vadd.f32 %v3048, %v4992
        %v5834 = vadd.f32 %v3052, %v4992
        %v5835 = vadd.f32 %v3056, %v4992
        %v5836 = vadd.f32 %v3060, %v4992
        %v5837 = vadd.f32 %v3064, %v4992
        %v5838 = vadd.f32 %v3068, %v4992
        %v5839 = vadd.f32 %v3072, %v4992
        %v5840 = vadd.f32 %v3076, %v4992
        %v5841 = vadd.f32 %v3083, %v4996
        %v5842 = vadd.f32 %v3087, %v4996
        %v5843 = vadd.f32 %v3091, %v4996
        %v5844 = vadd.f32 %v3095, %v4996
        %v5845 = vadd.f32 %v3099, %v4996
        %v5846 = vadd.f32 %v3103, %v4996
        %v5847 = vadd.f32 %v3107, %v4996
        %v5848 = vadd.f32 %v3111, %v4996
        %v5849 = vadd.f32 %v3115, %v4996
        %v5850 = vadd.f32 %v3119, %v4996
        %v5851 = vadd.f32 %v3123, %v4996
        %v5852 = vadd.f32 %v3127, %v4996
        %v5853 = vadd.f32 %v3131, %v4996
        %v5854 = vadd.f32 %v3135, %v4996
        %v5855 = vadd.f32 %v3139, %v4996
        %v5856 = vadd.f32 %v3143, %v4996
        %v5857 = vadd.f32 %v3150, %v5000
        %v5858 = vadd.f32 %v3154, %v5000
        %v5859 = vadd.f32 %v3158, %v5000
        %v5860 = vadd.f32 %v3162, %v5000
        %v5861 = vadd.f32 %v3166, %v5000
        %v5862 = vadd.f32 %v3170, %v5000
        %v5863 = vadd.f32 %v3174, %v5000
        %v5864 = vadd.f32 %v3178, %v5000
        %v5865 = vadd.f32 %v3182, %v5000
        %v5866 = vadd.f32 %v3186, %v5000
        %v5867 = vadd.f32 %v3190, %v5000
        %v5868 = vadd.f32 %v3194, %v5000
        %v5869 = vadd.f32 %v3198, %v5000
        %v5870 = vadd.f32 %v3202, %v5000
        %v5871 = vadd.f32 %v3206, %v5000
        %v5872 = vadd.f32 %v3210, %v5000
        %v5873 = vadd.f32 %v3217, %v5004
        %v5874 = vadd.f32 %v3221, %v5004
        %v5875 = vadd.f32 %v3225, %v5004
        %v5876 = vadd.f32 %v3229, %v5004
        %v5877 = vadd.f32 %v3233, %v5004
        %v5878 = vadd.f32 %v3237, %v5004
        %v5879 = vadd.f32 %v3241, %v5004
        %v5880 = vadd.f32 %v3245, %v5004
        %v5881 = vadd.f32 %v3249, %v5004
        %v5882 = vadd.f32 %v3253, %v5004
        %v5883 = vadd.f32 %v3257, %v5004
        %v5884 = vadd.f32 %v3261, %v5004
        %v5885 = vadd.f32 %v3265, %v5004
        %v5886 = vadd.f32 %v3269, %v5004
        %v5887 = vadd.f32 %v3273, %v5004
        %v5888 = vadd.f32 %v3277, %v5004
        %v5889 = vadd.f32 %v3284, %v5008
        %v5890 = vadd.f32 %v3288, %v5008
        %v5891 = vadd.f32 %v3292, %v5008
        %v5892 = vadd.f32 %v3296, %v5008
        %v5893 = vadd.f32 %v3300, %v5008
        %v5894 = vadd.f32 %v3304, %v5008
        %v5895 = vadd.f32 %v3308, %v5008
        %v5896 = vadd.f32 %v3312, %v5008
        %v5897 = vadd.f32 %v3316, %v5008
        %v5898 = vadd.f32 %v3320, %v5008
        %v5899 = vadd.f32 %v3324, %v5008
        %v5900 = vadd.f32 %v3328, %v5008
        %v5901 = vadd.f32 %v3332, %v5008
        %v5902 = vadd.f32 %v3336, %v5008
        %v5903 = vadd.f32 %v3340, %v5008
        %v5904 = vadd.f32 %v3344, %v5008
        %v5905 = vadd.f32 %v3351, %v5012
        %v5906 = vadd.f32 %v3355, %v5012
        %v5907 = vadd.f32 %v3359, %v5012
        %v5908 = vadd.f32 %v3363, %v5012
        %v5909 = vadd.f32 %v3367, %v5012
        %v5910 = vadd.f32 %v3371, %v5012
        %v5911 = vadd.f32 %v3375, %v5012
        %v5912 = vadd.f32 %v3379, %v5012
        %v5913 = vadd.f32 %v3383, %v5012
        %v5914 = vadd.f32 %v3387, %v5012
        %v5915 = vadd.f32 %v3391, %v5012
        %v5916 = vadd.f32 %v3395, %v5012
        %v5917 = vadd.f32 %v3399, %v5012
        %v5918 = vadd.f32 %v3403, %v5012
        %v5919 = vadd.f32 %v3407, %v5012
        %v5920 = vadd.f32 %v3411, %v5012
        %v5921 = vadd.f32 %v3418, %v5016
        %v5922 = vadd.f32 %v3422, %v5016
        %v5923 = vadd.f32 %v3426, %v5016
        %v5924 = vadd.f32 %v3430, %v5016
        %v5925 = vadd.f32 %v3434, %v5016
        %v5926 = vadd.f32 %v3438, %v5016
        %v5927 = vadd.f32 %v3442, %v5016
        %v5928 = vadd.f32 %v3446, %v5016
        %v5929 = vadd.f32 %v3450, %v5016
        %v5930 = vadd.f32 %v3454, %v5016
        %v5931 = vadd.f32 %v3458, %v5016
        %v5932 = vadd.f32 %v3462, %v5016
        %v5933 = vadd.f32 %v3466, %v5016
        %v5934 = vadd.f32 %v3470, %v5016
        %v5935 = vadd.f32 %v3474, %v5016
        %v5936 = vadd.f32 %v3478, %v5016
        %v5937 = vadd.f32 %v3485, %v5020
        %v5938 = vadd.f32 %v3489, %v5020
        %v5939 = vadd.f32 %v3493, %v5020
        %v5940 = vadd.f32 %v3497, %v5020
        %v5941 = vadd.f32 %v3501, %v5020
        %v5942 = vadd.f32 %v3505, %v5020
        %v5943 = vadd.f32 %v3509, %v5020
        %v5944 = vadd.f32 %v3513, %v5020
        %v5945 = vadd.f32 %v3517, %v5020
        %v5946 = vadd.f32 %v3521, %v5020
        %v5947 = vadd.f32 %v3525, %v5020
        %v5948 = vadd.f32 %v3529, %v5020
        %v5949 = vadd.f32 %v3533, %v5020
        %v5950 = vadd.f32 %v3537, %v5020
        %v5951 = vadd.f32 %v3541, %v5020
        %v5952 = vadd.f32 %v3545, %v5020
        %v5953 = vadd.f32 %v3552, %v5024
        %v5954 = vadd.f32 %v3556, %v5024
        %v5955 = vadd.f32 %v3560, %v5024
        %v5956 = vadd.f32 %v3564, %v5024
        %v5957 = vadd.f32 %v3568, %v5024
        %v5958 = vadd.f32 %v3572, %v5024
        %v5959 = vadd.f32 %v3576, %v5024
        %v5960 = vadd.f32 %v3580, %v5024
        %v5961 = vadd.f32 %v3584, %v5024
        %v5962 = vadd.f32 %v3588, %v5024
        %v5963 = vadd.f32 %v3592, %v5024
        %v5964 = vadd.f32 %v3596, %v5024
        %v5965 = vadd.f32 %v3600, %v5024
        %v5966 = vadd.f32 %v3604, %v5024
        %v5967 = vadd.f32 %v3608, %v5024
        %v5968 = vadd.f32 %v3612, %v5024
        %v5969 = vadd.f32 %v3619, %v5028
        %v5970 = vadd.f32 %v3623, %v5028
        %v5971 = vadd.f32 %v3627, %v5028
        %v5972 = vadd.f32 %v3631, %v5028
        %v5973 = vadd.f32 %v3635, %v5028
        %v5974 = vadd.f32 %v3639, %v5028
        %v5975 = vadd.f32 %v3643, %v5028
        %v5976 = vadd.f32 %v3647, %v5028
        %v5977 = vadd.f32 %v3651, %v5028
        %v5978 = vadd.f32 %v3655, %v5028
        %v5979 = vadd.f32 %v3659, %v5028
        %v5980 = vadd.f32 %v3663, %v5028
        %v5981 = vadd.f32 %v3667, %v5028
        %v5982 = vadd.f32 %v3671, %v5028
        %v5983 = vadd.f32 %v3675, %v5028
        %v5984 = vadd.f32 %v3679, %v5028
        %v5985 = vadd.f32 %v3686, %v5032
        %v5986 = vadd.f32 %v3690, %v5032
        %v5987 = vadd.f32 %v3694, %v5032
        %v5988 = vadd.f32 %v3698, %v5032
        %v5989 = vadd.f32 %v3702, %v5032
        %v5990 = vadd.f32 %v3706, %v5032
        %v5991 = vadd.f32 %v3710, %v5032
        %v5992 = vadd.f32 %v3714, %v5032
        %v5993 = vadd.f32 %v3718, %v5032
        %v5994 = vadd.f32 %v3722, %v5032
        %v5995 = vadd.f32 %v3726, %v5032
        %v5996 = vadd.f32 %v3730, %v5032
        %v5997 = vadd.f32 %v3734, %v5032
        %v5998 = vadd.f32 %v3738, %v5032
        %v5999 = vadd.f32 %v3742, %v5032
        %v6000 = vadd.f32 %v3746, %v5032
        %v6001 = vadd.f32 %v3753, %v5036
        %v6002 = vadd.f32 %v3757, %v5036
        %v6003 = vadd.f32 %v3761, %v5036
        %v6004 = vadd.f32 %v3765, %v5036
        %v6005 = vadd.f32 %v3769, %v5036
        %v6006 = vadd.f32 %v3773, %v5036
        %v6007 = vadd.f32 %v3777, %v5036
        %v6008 = vadd.f32 %v3781, %v5036
        %v6009 = vadd.f32 %v3785, %v5036
        %v6010 = vadd.f32 %v3789, %v5036
        %v6011 = vadd.f32 %v3793, %v5036
        %v6012 = vadd.f32 %v3797, %v5036
        %v6013 = vadd.f32 %v3801, %v5036
        %v6014 = vadd.f32 %v3805, %v5036
        %v6015 = vadd.f32 %v3809, %v5036
        %v6016 = vadd.f32 %v3813, %v5036
        %v6017 = vadd.f32 %v3820, %v5040
        %v6018 = vadd.f32 %v3824, %v5040
        %v6019 = vadd.f32 %v3828, %v5040
        %v6020 = vadd.f32 %v3832, %v5040
        %v6021 = vadd.f32 %v3836, %v5040
        %v6022 = vadd.f32 %v3840, %v5040
        %v6023 = vadd.f32 %v3844, %v5040
        %v6024 = vadd.f32 %v3848, %v5040
        %v6025 = vadd.f32 %v3852, %v5040
        %v6026 = vadd.f32 %v3856, %v5040
        %v6027 = vadd.f32 %v3860, %v5040
        %v6028 = vadd.f32 %v3864, %v5040
        %v6029 = vadd.f32 %v3868, %v5040
        %v6030 = vadd.f32 %v3872, %v5040
        %v6031 = vadd.f32 %v3876, %v5040
        %v6032 = vadd.f32 %v3880, %v5040
        %v6033 = vadd.f32 %v3887, %v5044
        %v6034 = vadd.f32 %v3891, %v5044
        %v6035 = vadd.f32 %v3895, %v5044
        %v6036 = vadd.f32 %v3899, %v5044
        %v6037 = vadd.f32 %v3903, %v5044
        %v6038 = vadd.f32 %v3907, %v5044
        %v6039 = vadd.f32 %v3911, %v5044
        %v6040 = vadd.f32 %v3915, %v5044
        %v6041 = vadd.f32 %v3919, %v5044
        %v6042 = vadd.f32 %v3923, %v5044
        %v6043 = vadd.f32 %v3927, %v5044
        %v6044 = vadd.f32 %v3931, %v5044
        %v6045 = vadd.f32 %v3935, %v5044
        %v6046 = vadd.f32 %v3939, %v5044
        %v6047 = vadd.f32 %v3943, %v5044
        %v6048 = vadd.f32 %v3947, %v5044
        %v6049 = vadd.f32 %v3954, %v5048
        %v6050 = vadd.f32 %v3958, %v5048
        %v6051 = vadd.f32 %v3962, %v5048
        %v6052 = vadd.f32 %v3966, %v5048
        %v6053 = vadd.f32 %v3970, %v5048
        %v6054 = vadd.f32 %v3974, %v5048
        %v6055 = vadd.f32 %v3978, %v5048
        %v6056 = vadd.f32 %v3982, %v5048
        %v6057 = vadd.f32 %v3986, %v5048
        %v6058 = vadd.f32 %v3990, %v5048
        %v6059 = vadd.f32 %v3994, %v5048
        %v6060 = vadd.f32 %v3998, %v5048
        %v6061 = vadd.f32 %v4002, %v5048
        %v6062 = vadd.f32 %v4006, %v5048
        %v6063 = vadd.f32 %v4010, %v5048
        %v6064 = vadd.f32 %v4014, %v5048
        %v6065 = vadd.f32 %v4021, %v5052
        %v6066 = vadd.f32 %v4025, %v5052
        %v6067 = vadd.f32 %v4029, %v5052
        %v6068 = vadd.f32 %v4033, %v5052
        %v6069 = vadd.f32 %v4037, %v5052
        %v6070 = vadd.f32 %v4041, %v5052
        %v6071 = vadd.f32 %v4045, %v5052
        %v6072 = vadd.f32 %v4049, %v5052
        %v6073 = vadd.f32 %v4053, %v5052
        %v6074 = vadd.f32 %v4057, %v5052
        %v6075 = vadd.f32 %v4061, %v5052
        %v6076 = vadd.f32 %v4065, %v5052
        %v6077 = vadd.f32 %v4069, %v5052
        %v6078 = vadd.f32 %v4073, %v5052
        %v6079 = vadd.f32 %v4077, %v5052
        %v6080 = vadd.f32 %v4081, %v5052
        %v6081 = vadd.f32 %v4088, %v5056
        %v6082 = vadd.f32 %v4092, %v5056
        %v6083 = vadd.f32 %v4096, %v5056
        %v6084 = vadd.f32 %v4100, %v5056
        %v6085 = vadd.f32 %v4104, %v5056
        %v6086 = vadd.f32 %v4108, %v5056
        %v6087 = vadd.f32 %v4112, %v5056
        %v6088 = vadd.f32 %v4116, %v5056
        %v6089 = vadd.f32 %v4120, %v5056
        %v6090 = vadd.f32 %v4124, %v5056
        %v6091 = vadd.f32 %v4128, %v5056
        %v6092 = vadd.f32 %v4132, %v5056
        %v6093 = vadd.f32 %v4136, %v5056
        %v6094 = vadd.f32 %v4140, %v5056
        %v6095 = vadd.f32 %v4144, %v5056
        %v6096 = vadd.f32 %v4148, %v5056
        %v6097 = vadd.f32 %v4155, %v5060
        %v6098 = vadd.f32 %v4159, %v5060
        %v6099 = vadd.f32 %v4163, %v5060
        %v6100 = vadd.f32 %v4167, %v5060
        %v6101 = vadd.f32 %v4171, %v5060
        %v6102 = vadd.f32 %v4175, %v5060
        %v6103 = vadd.f32 %v4179, %v5060
        %v6104 = vadd.f32 %v4183, %v5060
        %v6105 = vadd.f32 %v4187, %v5060
        %v6106 = vadd.f32 %v4191, %v5060
        %v6107 = vadd.f32 %v4195, %v5060
        %v6108 = vadd.f32 %v4199, %v5060
        %v6109 = vadd.f32 %v4203, %v5060
        %v6110 = vadd.f32 %v4207, %v5060
        %v6111 = vadd.f32 %v4211, %v5060
        %v6112 = vadd.f32 %v4215, %v5060
        %v6113 = vadd.f32 %v4222, %v5064
        %v6114 = vadd.f32 %v4226, %v5064
        %v6115 = vadd.f32 %v4230, %v5064
        %v6116 = vadd.f32 %v4234, %v5064
        %v6117 = vadd.f32 %v4238, %v5064
        %v6118 = vadd.f32 %v4242, %v5064
        %v6119 = vadd.f32 %v4246, %v5064
        %v6120 = vadd.f32 %v4250, %v5064
        %v6121 = vadd.f32 %v4254, %v5064
        %v6122 = vadd.f32 %v4258, %v5064
        %v6123 = vadd.f32 %v4262, %v5064
        %v6124 = vadd.f32 %v4266, %v5064
        %v6125 = vadd.f32 %v4270, %v5064
        %v6126 = vadd.f32 %v4274, %v5064
        %v6127 = vadd.f32 %v4278, %v5064
        %v6128 = vadd.f32 %v4282, %v5064
        %v6129 = vadd.f32 %v4289, %v5068
        %v6130 = vadd.f32 %v4293, %v5068
        %v6131 = vadd.f32 %v4297, %v5068
        %v6132 = vadd.f32 %v4301, %v5068
        %v6133 = vadd.f32 %v4305, %v5068
        %v6134 = vadd.f32 %v4309, %v5068
        %v6135 = vadd.f32 %v4313, %v5068
        %v6136 = vadd.f32 %v4317, %v5068
        %v6137 = vadd.f32 %v4321, %v5068
        %v6138 = vadd.f32 %v4325, %v5068
        %v6139 = vadd.f32 %v4329, %v5068
        %v6140 = vadd.f32 %v4333, %v5068
        %v6141 = vadd.f32 %v4337, %v5068
        %v6142 = vadd.f32 %v4341, %v5068
        %v6143 = vadd.f32 %v4345, %v5068
        %v6144 = vadd.f32 %v4349, %v5068
        %v6145 = vadd.f32 %v4356, %v5072
        %v6146 = vadd.f32 %v4360, %v5072
        %v6147 = vadd.f32 %v4364, %v5072
        %v6148 = vadd.f32 %v4368, %v5072
        %v6149 = vadd.f32 %v4372, %v5072
        %v6150 = vadd.f32 %v4376, %v5072
        %v6151 = vadd.f32 %v4380, %v5072
        %v6152 = vadd.f32 %v4384, %v5072
        %v6153 = vadd.f32 %v4388, %v5072
        %v6154 = vadd.f32 %v4392, %v5072
        %v6155 = vadd.f32 %v4396, %v5072
        %v6156 = vadd.f32 %v4400, %v5072
        %v6157 = vadd.f32 %v4404, %v5072
        %v6158 = vadd.f32 %v4408, %v5072
        %v6159 = vadd.f32 %v4412, %v5072
        %v6160 = vadd.f32 %v4416, %v5072
        %6161 = vst [vmem:[%s109] sm:$0xff] %v5137
        %6162 = vst [vmem:[%s109 + $0x8] sm:$0xff] %v5138
        %6163 = vst [vmem:[%s109 + $0x10] sm:$0xff] %v5139
        %6164 = vst [vmem:[%s109 + $0x18] sm:$0xff] %v5140
        %6165 = vst [vmem:[%s109 + $0x20] sm:$0xff] %v5141
        %6166 = vst [vmem:[%s109 + $0x28] sm:$0xff] %v5142
        %6167 = vst [vmem:[%s109 + $0x30] sm:$0xff] %v5143
        %6168 = vst [vmem:[%s109 + $0x38] sm:$0xff] %v5144
        %6169 = vst [vmem:[%s109 + $0x40] sm:$0xff] %v5145
        %6170 = vst [vmem:[%s109 + $0x48] sm:$0xff] %v5146
        %6171 = vst [vmem:[%s109 + $0x50] sm:$0xff] %v5147
        %6172 = vst [vmem:[%s109 + $0x58] sm:$0xff] %v5148
        %6173 = vst [vmem:[%s109 + $0x60] sm:$0xff] %v5149
        %6174 = vst [vmem:[%s109 + $0x68] sm:$0xff] %v5150
        %6175 = vst [vmem:[%s109 + $0x70] sm:$0xff] %v5151
        %6176 = vst [vmem:[%s109 + $0x78] sm:$0xff] %v5152
        %6177 = vst [vmem:[%s109 + $0x80] sm:$0xff] %v5153
        %6178 = vst [vmem:[%s109 + $0x88] sm:$0xff] %v5154
        %6179 = vst [vmem:[%s109 + $0x90] sm:$0xff] %v5155
        %6180 = vst [vmem:[%s109 + $0x98] sm:$0xff] %v5156
        %6181 = vst [vmem:[%s109 + $0xa0] sm:$0xff] %v5157
        %6182 = vst [vmem:[%s109 + $0xa8] sm:$0xff] %v5158
        %6183 = vst [vmem:[%s109 + $0xb0] sm:$0xff] %v5159
        %6184 = vst [vmem:[%s109 + $0xb8] sm:$0xff] %v5160
        %6185 = vst [vmem:[%s109 + $0xc0] sm:$0xff] %v5161
        %6186 = vst [vmem:[%s109 + $0xc8] sm:$0xff] %v5162
        %6187 = vst [vmem:[%s109 + $0xd0] sm:$0xff] %v5163
        %6188 = vst [vmem:[%s109 + $0xd8] sm:$0xff] %v5164
        %6189 = vst [vmem:[%s109 + $0xe0] sm:$0xff] %v5165
        %6190 = vst [vmem:[%s109 + $0xe8] sm:$0xff] %v5166
        %6191 = vst [vmem:[%s109 + $0xf0] sm:$0xff] %v5167
        %6192 = vst [vmem:[%s109 + $0xf8] sm:$0xff] %v5168
        %6193 = vst [vmem:[%s109 + $0x100] sm:$0xff] %v5169
        %6194 = vst [vmem:[%s109 + $0x108] sm:$0xff] %v5170
        %6195 = vst [vmem:[%s109 + $0x110] sm:$0xff] %v5171
        %6196 = vst [vmem:[%s109 + $0x118] sm:$0xff] %v5172
        %6197 = vst [vmem:[%s109 + $0x120] sm:$0xff] %v5173
        %6198 = vst [vmem:[%s109 + $0x128] sm:$0xff] %v5174
        %6199 = vst [vmem:[%s109 + $0x130] sm:$0xff] %v5175
        %6200 = vst [vmem:[%s109 + $0x138] sm:$0xff] %v5176
        %6201 = vst [vmem:[%s109 + $0x140] sm:$0xff] %v5177
        %6202 = vst [vmem:[%s109 + $0x148] sm:$0xff] %v5178
        %6203 = vst [vmem:[%s109 + $0x150] sm:$0xff] %v5179
        %6204 = vst [vmem:[%s109 + $0x158] sm:$0xff] %v5180
        %6205 = vst [vmem:[%s109 + $0x160] sm:$0xff] %v5181
        %6206 = vst [vmem:[%s109 + $0x168] sm:$0xff] %v5182
        %6207 = vst [vmem:[%s109 + $0x170] sm:$0xff] %v5183
        %6208 = vst [vmem:[%s109 + $0x178] sm:$0xff] %v5184
        %6209 = vst [vmem:[%s109 + $0x180] sm:$0xff] %v5185
        %6210 = vst [vmem:[%s109 + $0x188] sm:$0xff] %v5186
        %6211 = vst [vmem:[%s109 + $0x190] sm:$0xff] %v5187
        %6212 = vst [vmem:[%s109 + $0x198] sm:$0xff] %v5188
        %6213 = vst [vmem:[%s109 + $0x1a0] sm:$0xff] %v5189
        %6214 = vst [vmem:[%s109 + $0x1a8] sm:$0xff] %v5190
        %6215 = vst [vmem:[%s109 + $0x1b0] sm:$0xff] %v5191
        %6216 = vst [vmem:[%s109 + $0x1b8] sm:$0xff] %v5192
        %6217 = vst [vmem:[%s109 + $0x1c0] sm:$0xff] %v5193
        %6218 = vst [vmem:[%s109 + $0x1c8] sm:$0xff] %v5194
        %6219 = vst [vmem:[%s109 + $0x1d0] sm:$0xff] %v5195
        %6220 = vst [vmem:[%s109 + $0x1d8] sm:$0xff] %v5196
        %6221 = vst [vmem:[%s109 + $0x1e0] sm:$0xff] %v5197
        %6222 = vst [vmem:[%s109 + $0x1e8] sm:$0xff] %v5198
        %6223 = vst [vmem:[%s109 + $0x1f0] sm:$0xff] %v5199
        %6224 = vst [vmem:[%s109 + $0x1f8] sm:$0xff] %v5200
        %6225 = vst [vmem:[%s109 + $0x200] sm:$0xff] %v5201
        %6226 = vst [vmem:[%s109 + $0x208] sm:$0xff] %v5202
        %6227 = vst [vmem:[%s109 + $0x210] sm:$0xff] %v5203
        %6228 = vst [vmem:[%s109 + $0x218] sm:$0xff] %v5204
        %6229 = vst [vmem:[%s109 + $0x220] sm:$0xff] %v5205
        %6230 = vst [vmem:[%s109 + $0x228] sm:$0xff] %v5206
        %6231 = vst [vmem:[%s109 + $0x230] sm:$0xff] %v5207
        %6232 = vst [vmem:[%s109 + $0x238] sm:$0xff] %v5208
        %6233 = vst [vmem:[%s109 + $0x240] sm:$0xff] %v5209
        %6234 = vst [vmem:[%s109 + $0x248] sm:$0xff] %v5210
        %6235 = vst [vmem:[%s109 + $0x250] sm:$0xff] %v5211
        %6236 = vst [vmem:[%s109 + $0x258] sm:$0xff] %v5212
        %6237 = vst [vmem:[%s109 + $0x260] sm:$0xff] %v5213
        %6238 = vst [vmem:[%s109 + $0x268] sm:$0xff] %v5214
        %6239 = vst [vmem:[%s109 + $0x270] sm:$0xff] %v5215
        %6240 = vst [vmem:[%s109 + $0x278] sm:$0xff] %v5216
        %6241 = vst [vmem:[%s109 + $0x280] sm:$0xff] %v5217
        %6242 = vst [vmem:[%s109 + $0x288] sm:$0xff] %v5218
        %6243 = vst [vmem:[%s109 + $0x290] sm:$0xff] %v5219
        %6244 = vst [vmem:[%s109 + $0x298] sm:$0xff] %v5220
        %6245 = vst [vmem:[%s109 + $0x2a0] sm:$0xff] %v5221
        %6246 = vst [vmem:[%s109 + $0x2a8] sm:$0xff] %v5222
        %6247 = vst [vmem:[%s109 + $0x2b0] sm:$0xff] %v5223
        %6248 = vst [vmem:[%s109 + $0x2b8] sm:$0xff] %v5224
        %6249 = vst [vmem:[%s109 + $0x2c0] sm:$0xff] %v5225
        %6250 = vst [vmem:[%s109 + $0x2c8] sm:$0xff] %v5226
        %6251 = vst [vmem:[%s109 + $0x2d0] sm:$0xff] %v5227
        %6252 = vst [vmem:[%s109 + $0x2d8] sm:$0xff] %v5228
        %6253 = vst [vmem:[%s109 + $0x2e0] sm:$0xff] %v5229
        %6254 = vst [vmem:[%s109 + $0x2e8] sm:$0xff] %v5230
        %6255 = vst [vmem:[%s109 + $0x2f0] sm:$0xff] %v5231
        %6256 = vst [vmem:[%s109 + $0x2f8] sm:$0xff] %v5232
        %6257 = vst [vmem:[%s109 + $0x300] sm:$0xff] %v5233
        %6258 = vst [vmem:[%s109 + $0x308] sm:$0xff] %v5234
        %6259 = vst [vmem:[%s109 + $0x310] sm:$0xff] %v5235
        %6260 = vst [vmem:[%s109 + $0x318] sm:$0xff] %v5236
        %6261 = vst [vmem:[%s109 + $0x320] sm:$0xff] %v5237
        %6262 = vst [vmem:[%s109 + $0x328] sm:$0xff] %v5238
        %6263 = vst [vmem:[%s109 + $0x330] sm:$0xff] %v5239
        %6264 = vst [vmem:[%s109 + $0x338] sm:$0xff] %v5240
        %6265 = vst [vmem:[%s109 + $0x340] sm:$0xff] %v5241
        %6266 = vst [vmem:[%s109 + $0x348] sm:$0xff] %v5242
        %6267 = vst [vmem:[%s109 + $0x350] sm:$0xff] %v5243
        %6268 = vst [vmem:[%s109 + $0x358] sm:$0xff] %v5244
        %6269 = vst [vmem:[%s109 + $0x360] sm:$0xff] %v5245
        %6270 = vst [vmem:[%s109 + $0x368] sm:$0xff] %v5246
        %6271 = vst [vmem:[%s109 + $0x370] sm:$0xff] %v5247
        %6272 = vst [vmem:[%s109 + $0x378] sm:$0xff] %v5248
        %6273 = vst [vmem:[%s109 + $0x380] sm:$0xff] %v5249
        %6274 = vst [vmem:[%s109 + $0x388] sm:$0xff] %v5250
        %6275 = vst [vmem:[%s109 + $0x390] sm:$0xff] %v5251
        %6276 = vst [vmem:[%s109 + $0x398] sm:$0xff] %v5252
        %6277 = vst [vmem:[%s109 + $0x3a0] sm:$0xff] %v5253
        %6278 = vst [vmem:[%s109 + $0x3a8] sm:$0xff] %v5254
        %6279 = vst [vmem:[%s109 + $0x3b0] sm:$0xff] %v5255
        %6280 = vst [vmem:[%s109 + $0x3b8] sm:$0xff] %v5256
        %6281 = vst [vmem:[%s109 + $0x3c0] sm:$0xff] %v5257
        %6282 = vst [vmem:[%s109 + $0x3c8] sm:$0xff] %v5258
        %6283 = vst [vmem:[%s109 + $0x3d0] sm:$0xff] %v5259
        %6284 = vst [vmem:[%s109 + $0x3d8] sm:$0xff] %v5260
        %6285 = vst [vmem:[%s109 + $0x3e0] sm:$0xff] %v5261
        %6286 = vst [vmem:[%s109 + $0x3e8] sm:$0xff] %v5262
        %6287 = vst [vmem:[%s109 + $0x3f0] sm:$0xff] %v5263
        %6288 = vst [vmem:[%s109 + $0x3f8] sm:$0xff] %v5264
        %6289 = vst [vmem:[%s109 + $0x400] sm:$0xff] %v5265
        %6290 = vst [vmem:[%s109 + $0x408] sm:$0xff] %v5266
        %6291 = vst [vmem:[%s109 + $0x410] sm:$0xff] %v5267
        %6292 = vst [vmem:[%s109 + $0x418] sm:$0xff] %v5268
        %6293 = vst [vmem:[%s109 + $0x420] sm:$0xff] %v5269
        %6294 = vst [vmem:[%s109 + $0x428] sm:$0xff] %v5270
        %6295 = vst [vmem:[%s109 + $0x430] sm:$0xff] %v5271
        %6296 = vst [vmem:[%s109 + $0x438] sm:$0xff] %v5272
        %6297 = vst [vmem:[%s109 + $0x440] sm:$0xff] %v5273
        %6298 = vst [vmem:[%s109 + $0x448] sm:$0xff] %v5274
        %6299 = vst [vmem:[%s109 + $0x450] sm:$0xff] %v5275
        %6300 = vst [vmem:[%s109 + $0x458] sm:$0xff] %v5276
        %6301 = vst [vmem:[%s109 + $0x460] sm:$0xff] %v5277
        %6302 = vst [vmem:[%s109 + $0x468] sm:$0xff] %v5278
        %6303 = vst [vmem:[%s109 + $0x470] sm:$0xff] %v5279
        %6304 = vst [vmem:[%s109 + $0x478] sm:$0xff] %v5280
        %6305 = vst [vmem:[%s109 + $0x480] sm:$0xff] %v5281
        %6306 = vst [vmem:[%s109 + $0x488] sm:$0xff] %v5282
        %6307 = vst [vmem:[%s109 + $0x490] sm:$0xff] %v5283
        %6308 = vst [vmem:[%s109 + $0x498] sm:$0xff] %v5284
        %6309 = vst [vmem:[%s109 + $0x4a0] sm:$0xff] %v5285
        %6310 = vst [vmem:[%s109 + $0x4a8] sm:$0xff] %v5286
        %6311 = vst [vmem:[%s109 + $0x4b0] sm:$0xff] %v5287
        %6312 = vst [vmem:[%s109 + $0x4b8] sm:$0xff] %v5288
        %6313 = vst [vmem:[%s109 + $0x4c0] sm:$0xff] %v5289
        %6314 = vst [vmem:[%s109 + $0x4c8] sm:$0xff] %v5290
        %6315 = vst [vmem:[%s109 + $0x4d0] sm:$0xff] %v5291
        %6316 = vst [vmem:[%s109 + $0x4d8] sm:$0xff] %v5292
        %6317 = vst [vmem:[%s109 + $0x4e0] sm:$0xff] %v5293
        %6318 = vst [vmem:[%s109 + $0x4e8] sm:$0xff] %v5294
        %6319 = vst [vmem:[%s109 + $0x4f0] sm:$0xff] %v5295
        %6320 = vst [vmem:[%s109 + $0x4f8] sm:$0xff] %v5296
        %6321 = vst [vmem:[%s109 + $0x500] sm:$0xff] %v5297
        %6322 = vst [vmem:[%s109 + $0x508] sm:$0xff] %v5298
        %6323 = vst [vmem:[%s109 + $0x510] sm:$0xff] %v5299
        %6324 = vst [vmem:[%s109 + $0x518] sm:$0xff] %v5300
        %6325 = vst [vmem:[%s109 + $0x520] sm:$0xff] %v5301
        %6326 = vst [vmem:[%s109 + $0x528] sm:$0xff] %v5302
        %6327 = vst [vmem:[%s109 + $0x530] sm:$0xff] %v5303
        %6328 = vst [vmem:[%s109 + $0x538] sm:$0xff] %v5304
        %6329 = vst [vmem:[%s109 + $0x540] sm:$0xff] %v5305
        %6330 = vst [vmem:[%s109 + $0x548] sm:$0xff] %v5306
        %6331 = vst [vmem:[%s109 + $0x550] sm:$0xff] %v5307
        %6332 = vst [vmem:[%s109 + $0x558] sm:$0xff] %v5308
        %6333 = vst [vmem:[%s109 + $0x560] sm:$0xff] %v5309
        %6334 = vst [vmem:[%s109 + $0x568] sm:$0xff] %v5310
        %6335 = vst [vmem:[%s109 + $0x570] sm:$0xff] %v5311
        %6336 = vst [vmem:[%s109 + $0x578] sm:$0xff] %v5312
        %6337 = vst [vmem:[%s109 + $0x580] sm:$0xff] %v5313
        %6338 = vst [vmem:[%s109 + $0x588] sm:$0xff] %v5314
        %6339 = vst [vmem:[%s109 + $0x590] sm:$0xff] %v5315
        %6340 = vst [vmem:[%s109 + $0x598] sm:$0xff] %v5316
        %6341 = vst [vmem:[%s109 + $0x5a0] sm:$0xff] %v5317
        %6342 = vst [vmem:[%s109 + $0x5a8] sm:$0xff] %v5318
        %6343 = vst [vmem:[%s109 + $0x5b0] sm:$0xff] %v5319
        %6344 = vst [vmem:[%s109 + $0x5b8] sm:$0xff] %v5320
        %6345 = vst [vmem:[%s109 + $0x5c0] sm:$0xff] %v5321
        %6346 = vst [vmem:[%s109 + $0x5c8] sm:$0xff] %v5322
        %6347 = vst [vmem:[%s109 + $0x5d0] sm:$0xff] %v5323
        %6348 = vst [vmem:[%s109 + $0x5d8] sm:$0xff] %v5324
        %6349 = vst [vmem:[%s109 + $0x5e0] sm:$0xff] %v5325
        %6350 = vst [vmem:[%s109 + $0x5e8] sm:$0xff] %v5326
        %6351 = vst [vmem:[%s109 + $0x5f0] sm:$0xff] %v5327
        %6352 = vst [vmem:[%s109 + $0x5f8] sm:$0xff] %v5328
        %6353 = vst [vmem:[%s109 + $0x600] sm:$0xff] %v5329
        %6354 = vst [vmem:[%s109 + $0x608] sm:$0xff] %v5330
        %6355 = vst [vmem:[%s109 + $0x610] sm:$0xff] %v5331
        %6356 = vst [vmem:[%s109 + $0x618] sm:$0xff] %v5332
        %6357 = vst [vmem:[%s109 + $0x620] sm:$0xff] %v5333
        %6358 = vst [vmem:[%s109 + $0x628] sm:$0xff] %v5334
        %6359 = vst [vmem:[%s109 + $0x630] sm:$0xff] %v5335
        %6360 = vst [vmem:[%s109 + $0x638] sm:$0xff] %v5336
        %6361 = vst [vmem:[%s109 + $0x640] sm:$0xff] %v5337
        %6362 = vst [vmem:[%s109 + $0x648] sm:$0xff] %v5338
        %6363 = vst [vmem:[%s109 + $0x650] sm:$0xff] %v5339
        %6364 = vst [vmem:[%s109 + $0x658] sm:$0xff] %v5340
        %6365 = vst [vmem:[%s109 + $0x660] sm:$0xff] %v5341
        %6366 = vst [vmem:[%s109 + $0x668] sm:$0xff] %v5342
        %6367 = vst [vmem:[%s109 + $0x670] sm:$0xff] %v5343
        %6368 = vst [vmem:[%s109 + $0x678] sm:$0xff] %v5344
        %6369 = vst [vmem:[%s109 + $0x680] sm:$0xff] %v5345
        %6370 = vst [vmem:[%s109 + $0x688] sm:$0xff] %v5346
        %6371 = vst [vmem:[%s109 + $0x690] sm:$0xff] %v5347
        %6372 = vst [vmem:[%s109 + $0x698] sm:$0xff] %v5348
        %6373 = vst [vmem:[%s109 + $0x6a0] sm:$0xff] %v5349
        %6374 = vst [vmem:[%s109 + $0x6a8] sm:$0xff] %v5350
        %6375 = vst [vmem:[%s109 + $0x6b0] sm:$0xff] %v5351
        %6376 = vst [vmem:[%s109 + $0x6b8] sm:$0xff] %v5352
        %6377 = vst [vmem:[%s109 + $0x6c0] sm:$0xff] %v5353
        %6378 = vst [vmem:[%s109 + $0x6c8] sm:$0xff] %v5354
        %6379 = vst [vmem:[%s109 + $0x6d0] sm:$0xff] %v5355
        %6380 = vst [vmem:[%s109 + $0x6d8] sm:$0xff] %v5356
        %6381 = vst [vmem:[%s109 + $0x6e0] sm:$0xff] %v5357
        %6382 = vst [vmem:[%s109 + $0x6e8] sm:$0xff] %v5358
        %6383 = vst [vmem:[%s109 + $0x6f0] sm:$0xff] %v5359
        %6384 = vst [vmem:[%s109 + $0x6f8] sm:$0xff] %v5360
        %6385 = vst [vmem:[%s109 + $0x700] sm:$0xff] %v5361
        %6386 = vst [vmem:[%s109 + $0x708] sm:$0xff] %v5362
        %6387 = vst [vmem:[%s109 + $0x710] sm:$0xff] %v5363
        %6388 = vst [vmem:[%s109 + $0x718] sm:$0xff] %v5364
        %6389 = vst [vmem:[%s109 + $0x720] sm:$0xff] %v5365
        %6390 = vst [vmem:[%s109 + $0x728] sm:$0xff] %v5366
        %6391 = vst [vmem:[%s109 + $0x730] sm:$0xff] %v5367
        %6392 = vst [vmem:[%s109 + $0x738] sm:$0xff] %v5368
        %6393 = vst [vmem:[%s109 + $0x740] sm:$0xff] %v5369
        %6394 = vst [vmem:[%s109 + $0x748] sm:$0xff] %v5370
        %6395 = vst [vmem:[%s109 + $0x750] sm:$0xff] %v5371
        %6396 = vst [vmem:[%s109 + $0x758] sm:$0xff] %v5372
        %6397 = vst [vmem:[%s109 + $0x760] sm:$0xff] %v5373
        %6398 = vst [vmem:[%s109 + $0x768] sm:$0xff] %v5374
        %6399 = vst [vmem:[%s109 + $0x770] sm:$0xff] %v5375
        %6400 = vst [vmem:[%s109 + $0x778] sm:$0xff] %v5376
        %6401 = vst [vmem:[%s109 + $0x780] sm:$0xff] %v5377
        %6402 = vst [vmem:[%s109 + $0x788] sm:$0xff] %v5378
        %6403 = vst [vmem:[%s109 + $0x790] sm:$0xff] %v5379
        %6404 = vst [vmem:[%s109 + $0x798] sm:$0xff] %v5380
        %6405 = vst [vmem:[%s109 + $0x7a0] sm:$0xff] %v5381
        %6406 = vst [vmem:[%s109 + $0x7a8] sm:$0xff] %v5382
        %6407 = vst [vmem:[%s109 + $0x7b0] sm:$0xff] %v5383
        %6408 = vst [vmem:[%s109 + $0x7b8] sm:$0xff] %v5384
        %6409 = vst [vmem:[%s109 + $0x7c0] sm:$0xff] %v5385
        %6410 = vst [vmem:[%s109 + $0x7c8] sm:$0xff] %v5386
        %6411 = vst [vmem:[%s109 + $0x7d0] sm:$0xff] %v5387
        %6412 = vst [vmem:[%s109 + $0x7d8] sm:$0xff] %v5388
        %6413 = vst [vmem:[%s109 + $0x7e0] sm:$0xff] %v5389
        %6414 = vst [vmem:[%s109 + $0x7e8] sm:$0xff] %v5390
        %6415 = vst [vmem:[%s109 + $0x7f0] sm:$0xff] %v5391
        %6416 = vst [vmem:[%s109 + $0x7f8] sm:$0xff] %v5392
        %6417 = vst [vmem:[%s109 + $0x800] sm:$0xff] %v5393
        %6418 = vst [vmem:[%s109 + $0x808] sm:$0xff] %v5394
        %6419 = vst [vmem:[%s109 + $0x810] sm:$0xff] %v5395
        %6420 = vst [vmem:[%s109 + $0x818] sm:$0xff] %v5396
        %6421 = vst [vmem:[%s109 + $0x820] sm:$0xff] %v5397
        %6422 = vst [vmem:[%s109 + $0x828] sm:$0xff] %v5398
        %6423 = vst [vmem:[%s109 + $0x830] sm:$0xff] %v5399
        %6424 = vst [vmem:[%s109 + $0x838] sm:$0xff] %v5400
        %6425 = vst [vmem:[%s109 + $0x840] sm:$0xff] %v5401
        %6426 = vst [vmem:[%s109 + $0x848] sm:$0xff] %v5402
        %6427 = vst [vmem:[%s109 + $0x850] sm:$0xff] %v5403
        %6428 = vst [vmem:[%s109 + $0x858] sm:$0xff] %v5404
        %6429 = vst [vmem:[%s109 + $0x860] sm:$0xff] %v5405
        %6430 = vst [vmem:[%s109 + $0x868] sm:$0xff] %v5406
        %6431 = vst [vmem:[%s109 + $0x870] sm:$0xff] %v5407
        %6432 = vst [vmem:[%s109 + $0x878] sm:$0xff] %v5408
        %6433 = vst [vmem:[%s109 + $0x880] sm:$0xff] %v5409
        %6434 = vst [vmem:[%s109 + $0x888] sm:$0xff] %v5410
        %6435 = vst [vmem:[%s109 + $0x890] sm:$0xff] %v5411
        %6436 = vst [vmem:[%s109 + $0x898] sm:$0xff] %v5412
        %6437 = vst [vmem:[%s109 + $0x8a0] sm:$0xff] %v5413
        %6438 = vst [vmem:[%s109 + $0x8a8] sm:$0xff] %v5414
        %6439 = vst [vmem:[%s109 + $0x8b0] sm:$0xff] %v5415
        %6440 = vst [vmem:[%s109 + $0x8b8] sm:$0xff] %v5416
        %6441 = vst [vmem:[%s109 + $0x8c0] sm:$0xff] %v5417
        %6442 = vst [vmem:[%s109 + $0x8c8] sm:$0xff] %v5418
        %6443 = vst [vmem:[%s109 + $0x8d0] sm:$0xff] %v5419
        %6444 = vst [vmem:[%s109 + $0x8d8] sm:$0xff] %v5420
        %6445 = vst [vmem:[%s109 + $0x8e0] sm:$0xff] %v5421
        %6446 = vst [vmem:[%s109 + $0x8e8] sm:$0xff] %v5422
        %6447 = vst [vmem:[%s109 + $0x8f0] sm:$0xff] %v5423
        %6448 = vst [vmem:[%s109 + $0x8f8] sm:$0xff] %v5424
        %6449 = vst [vmem:[%s109 + $0x900] sm:$0xff] %v5425
        %6450 = vst [vmem:[%s109 + $0x908] sm:$0xff] %v5426
        %6451 = vst [vmem:[%s109 + $0x910] sm:$0xff] %v5427
        %6452 = vst [vmem:[%s109 + $0x918] sm:$0xff] %v5428
        %6453 = vst [vmem:[%s109 + $0x920] sm:$0xff] %v5429
        %6454 = vst [vmem:[%s109 + $0x928] sm:$0xff] %v5430
        %6455 = vst [vmem:[%s109 + $0x930] sm:$0xff] %v5431
        %6456 = vst [vmem:[%s109 + $0x938] sm:$0xff] %v5432
        %6457 = vst [vmem:[%s109 + $0x940] sm:$0xff] %v5433
        %6458 = vst [vmem:[%s109 + $0x948] sm:$0xff] %v5434
        %6459 = vst [vmem:[%s109 + $0x950] sm:$0xff] %v5435
        %6460 = vst [vmem:[%s109 + $0x958] sm:$0xff] %v5436
        %6461 = vst [vmem:[%s109 + $0x960] sm:$0xff] %v5437
        %6462 = vst [vmem:[%s109 + $0x968] sm:$0xff] %v5438
        %6463 = vst [vmem:[%s109 + $0x970] sm:$0xff] %v5439
        %6464 = vst [vmem:[%s109 + $0x978] sm:$0xff] %v5440
        %6465 = vst [vmem:[%s109 + $0x980] sm:$0xff] %v5441
        %6466 = vst [vmem:[%s109 + $0x988] sm:$0xff] %v5442
        %6467 = vst [vmem:[%s109 + $0x990] sm:$0xff] %v5443
        %6468 = vst [vmem:[%s109 + $0x998] sm:$0xff] %v5444
        %6469 = vst [vmem:[%s109 + $0x9a0] sm:$0xff] %v5445
        %6470 = vst [vmem:[%s109 + $0x9a8] sm:$0xff] %v5446
        %6471 = vst [vmem:[%s109 + $0x9b0] sm:$0xff] %v5447
        %6472 = vst [vmem:[%s109 + $0x9b8] sm:$0xff] %v5448
        %6473 = vst [vmem:[%s109 + $0x9c0] sm:$0xff] %v5449
        %6474 = vst [vmem:[%s109 + $0x9c8] sm:$0xff] %v5450
        %6475 = vst [vmem:[%s109 + $0x9d0] sm:$0xff] %v5451
        %6476 = vst [vmem:[%s109 + $0x9d8] sm:$0xff] %v5452
        %6477 = vst [vmem:[%s109 + $0x9e0] sm:$0xff] %v5453
        %6478 = vst [vmem:[%s109 + $0x9e8] sm:$0xff] %v5454
        %6479 = vst [vmem:[%s109 + $0x9f0] sm:$0xff] %v5455
        %6480 = vst [vmem:[%s109 + $0x9f8] sm:$0xff] %v5456
        %6481 = vst [vmem:[%s109 + $0xa00] sm:$0xff] %v5457
        %6482 = vst [vmem:[%s109 + $0xa08] sm:$0xff] %v5458
        %6483 = vst [vmem:[%s109 + $0xa10] sm:$0xff] %v5459
        %6484 = vst [vmem:[%s109 + $0xa18] sm:$0xff] %v5460
        %6485 = vst [vmem:[%s109 + $0xa20] sm:$0xff] %v5461
        %6486 = vst [vmem:[%s109 + $0xa28] sm:$0xff] %v5462
        %6487 = vst [vmem:[%s109 + $0xa30] sm:$0xff] %v5463
        %6488 = vst [vmem:[%s109 + $0xa38] sm:$0xff] %v5464
        %6489 = vst [vmem:[%s109 + $0xa40] sm:$0xff] %v5465
        %6490 = vst [vmem:[%s109 + $0xa48] sm:$0xff] %v5466
        %6491 = vst [vmem:[%s109 + $0xa50] sm:$0xff] %v5467
        %6492 = vst [vmem:[%s109 + $0xa58] sm:$0xff] %v5468
        %6493 = vst [vmem:[%s109 + $0xa60] sm:$0xff] %v5469
        %6494 = vst [vmem:[%s109 + $0xa68] sm:$0xff] %v5470
        %6495 = vst [vmem:[%s109 + $0xa70] sm:$0xff] %v5471
        %6496 = vst [vmem:[%s109 + $0xa78] sm:$0xff] %v5472
        %6497 = vst [vmem:[%s109 + $0xa80] sm:$0xff] %v5473
        %6498 = vst [vmem:[%s109 + $0xa88] sm:$0xff] %v5474
        %6499 = vst [vmem:[%s109 + $0xa90] sm:$0xff] %v5475
        %6500 = vst [vmem:[%s109 + $0xa98] sm:$0xff] %v5476
        %6501 = vst [vmem:[%s109 + $0xaa0] sm:$0xff] %v5477
        %6502 = vst [vmem:[%s109 + $0xaa8] sm:$0xff] %v5478
        %6503 = vst [vmem:[%s109 + $0xab0] sm:$0xff] %v5479
        %6504 = vst [vmem:[%s109 + $0xab8] sm:$0xff] %v5480
        %6505 = vst [vmem:[%s109 + $0xac0] sm:$0xff] %v5481
        %6506 = vst [vmem:[%s109 + $0xac8] sm:$0xff] %v5482
        %6507 = vst [vmem:[%s109 + $0xad0] sm:$0xff] %v5483
        %6508 = vst [vmem:[%s109 + $0xad8] sm:$0xff] %v5484
        %6509 = vst [vmem:[%s109 + $0xae0] sm:$0xff] %v5485
        %6510 = vst [vmem:[%s109 + $0xae8] sm:$0xff] %v5486
        %6511 = vst [vmem:[%s109 + $0xaf0] sm:$0xff] %v5487
        %6512 = vst [vmem:[%s109 + $0xaf8] sm:$0xff] %v5488
        %6513 = vst [vmem:[%s109 + $0xb00] sm:$0xff] %v5489
        %6514 = vst [vmem:[%s109 + $0xb08] sm:$0xff] %v5490
        %6515 = vst [vmem:[%s109 + $0xb10] sm:$0xff] %v5491
        %6516 = vst [vmem:[%s109 + $0xb18] sm:$0xff] %v5492
        %6517 = vst [vmem:[%s109 + $0xb20] sm:$0xff] %v5493
        %6518 = vst [vmem:[%s109 + $0xb28] sm:$0xff] %v5494
        %6519 = vst [vmem:[%s109 + $0xb30] sm:$0xff] %v5495
        %6520 = vst [vmem:[%s109 + $0xb38] sm:$0xff] %v5496
        %6521 = vst [vmem:[%s109 + $0xb40] sm:$0xff] %v5497
        %6522 = vst [vmem:[%s109 + $0xb48] sm:$0xff] %v5498
        %6523 = vst [vmem:[%s109 + $0xb50] sm:$0xff] %v5499
        %6524 = vst [vmem:[%s109 + $0xb58] sm:$0xff] %v5500
        %6525 = vst [vmem:[%s109 + $0xb60] sm:$0xff] %v5501
        %6526 = vst [vmem:[%s109 + $0xb68] sm:$0xff] %v5502
        %6527 = vst [vmem:[%s109 + $0xb70] sm:$0xff] %v5503
        %6528 = vst [vmem:[%s109 + $0xb78] sm:$0xff] %v5504
        %6529 = vst [vmem:[%s109 + $0xb80] sm:$0xff] %v5505
        %6530 = vst [vmem:[%s109 + $0xb88] sm:$0xff] %v5506
        %6531 = vst [vmem:[%s109 + $0xb90] sm:$0xff] %v5507
        %6532 = vst [vmem:[%s109 + $0xb98] sm:$0xff] %v5508
        %6533 = vst [vmem:[%s109 + $0xba0] sm:$0xff] %v5509
        %6534 = vst [vmem:[%s109 + $0xba8] sm:$0xff] %v5510
        %6535 = vst [vmem:[%s109 + $0xbb0] sm:$0xff] %v5511
        %6536 = vst [vmem:[%s109 + $0xbb8] sm:$0xff] %v5512
        %6537 = vst [vmem:[%s109 + $0xbc0] sm:$0xff] %v5513
        %6538 = vst [vmem:[%s109 + $0xbc8] sm:$0xff] %v5514
        %6539 = vst [vmem:[%s109 + $0xbd0] sm:$0xff] %v5515
        %6540 = vst [vmem:[%s109 + $0xbd8] sm:$0xff] %v5516
        %6541 = vst [vmem:[%s109 + $0xbe0] sm:$0xff] %v5517
        %6542 = vst [vmem:[%s109 + $0xbe8] sm:$0xff] %v5518
        %6543 = vst [vmem:[%s109 + $0xbf0] sm:$0xff] %v5519
        %6544 = vst [vmem:[%s109 + $0xbf8] sm:$0xff] %v5520
        %6545 = vst [vmem:[%s109 + $0xc00] sm:$0xff] %v5521
        %6546 = vst [vmem:[%s109 + $0xc08] sm:$0xff] %v5522
        %6547 = vst [vmem:[%s109 + $0xc10] sm:$0xff] %v5523
        %6548 = vst [vmem:[%s109 + $0xc18] sm:$0xff] %v5524
        %6549 = vst [vmem:[%s109 + $0xc20] sm:$0xff] %v5525
        %6550 = vst [vmem:[%s109 + $0xc28] sm:$0xff] %v5526
        %6551 = vst [vmem:[%s109 + $0xc30] sm:$0xff] %v5527
        %6552 = vst [vmem:[%s109 + $0xc38] sm:$0xff] %v5528
        %6553 = vst [vmem:[%s109 + $0xc40] sm:$0xff] %v5529
        %6554 = vst [vmem:[%s109 + $0xc48] sm:$0xff] %v5530
        %6555 = vst [vmem:[%s109 + $0xc50] sm:$0xff] %v5531
        %6556 = vst [vmem:[%s109 + $0xc58] sm:$0xff] %v5532
        %6557 = vst [vmem:[%s109 + $0xc60] sm:$0xff] %v5533
        %6558 = vst [vmem:[%s109 + $0xc68] sm:$0xff] %v5534
        %6559 = vst [vmem:[%s109 + $0xc70] sm:$0xff] %v5535
        %6560 = vst [vmem:[%s109 + $0xc78] sm:$0xff] %v5536
        %6561 = vst [vmem:[%s109 + $0xc80] sm:$0xff] %v5537
        %6562 = vst [vmem:[%s109 + $0xc88] sm:$0xff] %v5538
        %6563 = vst [vmem:[%s109 + $0xc90] sm:$0xff] %v5539
        %6564 = vst [vmem:[%s109 + $0xc98] sm:$0xff] %v5540
        %6565 = vst [vmem:[%s109 + $0xca0] sm:$0xff] %v5541
        %6566 = vst [vmem:[%s109 + $0xca8] sm:$0xff] %v5542
        %6567 = vst [vmem:[%s109 + $0xcb0] sm:$0xff] %v5543
        %6568 = vst [vmem:[%s109 + $0xcb8] sm:$0xff] %v5544
        %6569 = vst [vmem:[%s109 + $0xcc0] sm:$0xff] %v5545
        %6570 = vst [vmem:[%s109 + $0xcc8] sm:$0xff] %v5546
        %6571 = vst [vmem:[%s109 + $0xcd0] sm:$0xff] %v5547
        %6572 = vst [vmem:[%s109 + $0xcd8] sm:$0xff] %v5548
        %6573 = vst [vmem:[%s109 + $0xce0] sm:$0xff] %v5549
        %6574 = vst [vmem:[%s109 + $0xce8] sm:$0xff] %v5550
        %6575 = vst [vmem:[%s109 + $0xcf0] sm:$0xff] %v5551
        %6576 = vst [vmem:[%s109 + $0xcf8] sm:$0xff] %v5552
        %6577 = vst [vmem:[%s109 + $0xd00] sm:$0xff] %v5553
        %6578 = vst [vmem:[%s109 + $0xd08] sm:$0xff] %v5554
        %6579 = vst [vmem:[%s109 + $0xd10] sm:$0xff] %v5555
        %6580 = vst [vmem:[%s109 + $0xd18] sm:$0xff] %v5556
        %6581 = vst [vmem:[%s109 + $0xd20] sm:$0xff] %v5557
        %6582 = vst [vmem:[%s109 + $0xd28] sm:$0xff] %v5558
        %6583 = vst [vmem:[%s109 + $0xd30] sm:$0xff] %v5559
        %6584 = vst [vmem:[%s109 + $0xd38] sm:$0xff] %v5560
        %6585 = vst [vmem:[%s109 + $0xd40] sm:$0xff] %v5561
        %6586 = vst [vmem:[%s109 + $0xd48] sm:$0xff] %v5562
        %6587 = vst [vmem:[%s109 + $0xd50] sm:$0xff] %v5563
        %6588 = vst [vmem:[%s109 + $0xd58] sm:$0xff] %v5564
        %6589 = vst [vmem:[%s109 + $0xd60] sm:$0xff] %v5565
        %6590 = vst [vmem:[%s109 + $0xd68] sm:$0xff] %v5566
        %6591 = vst [vmem:[%s109 + $0xd70] sm:$0xff] %v5567
        %6592 = vst [vmem:[%s109 + $0xd78] sm:$0xff] %v5568
        %6593 = vst [vmem:[%s109 + $0xd80] sm:$0xff] %v5569
        %6594 = vst [vmem:[%s109 + $0xd88] sm:$0xff] %v5570
        %6595 = vst [vmem:[%s109 + $0xd90] sm:$0xff] %v5571
        %6596 = vst [vmem:[%s109 + $0xd98] sm:$0xff] %v5572
        %6597 = vst [vmem:[%s109 + $0xda0] sm:$0xff] %v5573
        %6598 = vst [vmem:[%s109 + $0xda8] sm:$0xff] %v5574
        %6599 = vst [vmem:[%s109 + $0xdb0] sm:$0xff] %v5575
        %6600 = vst [vmem:[%s109 + $0xdb8] sm:$0xff] %v5576
        %6601 = vst [vmem:[%s109 + $0xdc0] sm:$0xff] %v5577
        %6602 = vst [vmem:[%s109 + $0xdc8] sm:$0xff] %v5578
        %6603 = vst [vmem:[%s109 + $0xdd0] sm:$0xff] %v5579
        %6604 = vst [vmem:[%s109 + $0xdd8] sm:$0xff] %v5580
        %6605 = vst [vmem:[%s109 + $0xde0] sm:$0xff] %v5581
        %6606 = vst [vmem:[%s109 + $0xde8] sm:$0xff] %v5582
        %6607 = vst [vmem:[%s109 + $0xdf0] sm:$0xff] %v5583
        %6608 = vst [vmem:[%s109 + $0xdf8] sm:$0xff] %v5584
        %6609 = vst [vmem:[%s109 + $0xe00] sm:$0xff] %v5585
        %6610 = vst [vmem:[%s109 + $0xe08] sm:$0xff] %v5586
        %6611 = vst [vmem:[%s109 + $0xe10] sm:$0xff] %v5587
        %6612 = vst [vmem:[%s109 + $0xe18] sm:$0xff] %v5588
        %6613 = vst [vmem:[%s109 + $0xe20] sm:$0xff] %v5589
        %6614 = vst [vmem:[%s109 + $0xe28] sm:$0xff] %v5590
        %6615 = vst [vmem:[%s109 + $0xe30] sm:$0xff] %v5591
        %6616 = vst [vmem:[%s109 + $0xe38] sm:$0xff] %v5592
        %6617 = vst [vmem:[%s109 + $0xe40] sm:$0xff] %v5593
        %6618 = vst [vmem:[%s109 + $0xe48] sm:$0xff] %v5594
        %6619 = vst [vmem:[%s109 + $0xe50] sm:$0xff] %v5595
        %6620 = vst [vmem:[%s109 + $0xe58] sm:$0xff] %v5596
        %6621 = vst [vmem:[%s109 + $0xe60] sm:$0xff] %v5597
        %6622 = vst [vmem:[%s109 + $0xe68] sm:$0xff] %v5598
        %6623 = vst [vmem:[%s109 + $0xe70] sm:$0xff] %v5599
        %6624 = vst [vmem:[%s109 + $0xe78] sm:$0xff] %v5600
        %6625 = vst [vmem:[%s109 + $0xe80] sm:$0xff] %v5601
        %6626 = vst [vmem:[%s109 + $0xe88] sm:$0xff] %v5602
        %6627 = vst [vmem:[%s109 + $0xe90] sm:$0xff] %v5603
        %6628 = vst [vmem:[%s109 + $0xe98] sm:$0xff] %v5604
        %6629 = vst [vmem:[%s109 + $0xea0] sm:$0xff] %v5605
        %6630 = vst [vmem:[%s109 + $0xea8] sm:$0xff] %v5606
        %6631 = vst [vmem:[%s109 + $0xeb0] sm:$0xff] %v5607
        %6632 = vst [vmem:[%s109 + $0xeb8] sm:$0xff] %v5608
        %6633 = vst [vmem:[%s109 + $0xec0] sm:$0xff] %v5609
        %6634 = vst [vmem:[%s109 + $0xec8] sm:$0xff] %v5610
        %6635 = vst [vmem:[%s109 + $0xed0] sm:$0xff] %v5611
        %6636 = vst [vmem:[%s109 + $0xed8] sm:$0xff] %v5612
        %6637 = vst [vmem:[%s109 + $0xee0] sm:$0xff] %v5613
        %6638 = vst [vmem:[%s109 + $0xee8] sm:$0xff] %v5614
        %6639 = vst [vmem:[%s109 + $0xef0] sm:$0xff] %v5615
        %6640 = vst [vmem:[%s109 + $0xef8] sm:$0xff] %v5616
        %6641 = vst [vmem:[%s109 + $0xf00] sm:$0xff] %v5617
        %6642 = vst [vmem:[%s109 + $0xf08] sm:$0xff] %v5618
        %6643 = vst [vmem:[%s109 + $0xf10] sm:$0xff] %v5619
        %6644 = vst [vmem:[%s109 + $0xf18] sm:$0xff] %v5620
        %6645 = vst [vmem:[%s109 + $0xf20] sm:$0xff] %v5621
        %6646 = vst [vmem:[%s109 + $0xf28] sm:$0xff] %v5622
        %6647 = vst [vmem:[%s109 + $0xf30] sm:$0xff] %v5623
        %6648 = vst [vmem:[%s109 + $0xf38] sm:$0xff] %v5624
        %6649 = vst [vmem:[%s109 + $0xf40] sm:$0xff] %v5625
        %6650 = vst [vmem:[%s109 + $0xf48] sm:$0xff] %v5626
        %6651 = vst [vmem:[%s109 + $0xf50] sm:$0xff] %v5627
        %6652 = vst [vmem:[%s109 + $0xf58] sm:$0xff] %v5628
        %6653 = vst [vmem:[%s109 + $0xf60] sm:$0xff] %v5629
        %6654 = vst [vmem:[%s109 + $0xf68] sm:$0xff] %v5630
        %6655 = vst [vmem:[%s109 + $0xf70] sm:$0xff] %v5631
        %6656 = vst [vmem:[%s109 + $0xf78] sm:$0xff] %v5632
        %6657 = vst [vmem:[%s109 + $0xf80] sm:$0xff] %v5633
        %6658 = vst [vmem:[%s109 + $0xf88] sm:$0xff] %v5634
        %6659 = vst [vmem:[%s109 + $0xf90] sm:$0xff] %v5635
        %6660 = vst [vmem:[%s109 + $0xf98] sm:$0xff] %v5636
        %6661 = vst [vmem:[%s109 + $0xfa0] sm:$0xff] %v5637
        %6662 = vst [vmem:[%s109 + $0xfa8] sm:$0xff] %v5638
        %6663 = vst [vmem:[%s109 + $0xfb0] sm:$0xff] %v5639
        %6664 = vst [vmem:[%s109 + $0xfb8] sm:$0xff] %v5640
        %6665 = vst [vmem:[%s109 + $0xfc0] sm:$0xff] %v5641
        %6666 = vst [vmem:[%s109 + $0xfc8] sm:$0xff] %v5642
        %6667 = vst [vmem:[%s109 + $0xfd0] sm:$0xff] %v5643
        %6668 = vst [vmem:[%s109 + $0xfd8] sm:$0xff] %v5644
        %6669 = vst [vmem:[%s109 + $0xfe0] sm:$0xff] %v5645
        %6670 = vst [vmem:[%s109 + $0xfe8] sm:$0xff] %v5646
        %6671 = vst [vmem:[%s109 + $0xff0] sm:$0xff] %v5647
        %6672 = vst [vmem:[%s109 + $0xff8] sm:$0xff] %v5648
        %6673 = vst [vmem:[%s109 + $0x1000] sm:$0xff] %v5649
        %6674 = vst [vmem:[%s109 + $0x1008] sm:$0xff] %v5650
        %6675 = vst [vmem:[%s109 + $0x1010] sm:$0xff] %v5651
        %6676 = vst [vmem:[%s109 + $0x1018] sm:$0xff] %v5652
        %6677 = vst [vmem:[%s109 + $0x1020] sm:$0xff] %v5653
        %6678 = vst [vmem:[%s109 + $0x1028] sm:$0xff] %v5654
        %6679 = vst [vmem:[%s109 + $0x1030] sm:$0xff] %v5655
        %6680 = vst [vmem:[%s109 + $0x1038] sm:$0xff] %v5656
        %6681 = vst [vmem:[%s109 + $0x1040] sm:$0xff] %v5657
        %6682 = vst [vmem:[%s109 + $0x1048] sm:$0xff] %v5658
        %6683 = vst [vmem:[%s109 + $0x1050] sm:$0xff] %v5659
        %6684 = vst [vmem:[%s109 + $0x1058] sm:$0xff] %v5660
        %6685 = vst [vmem:[%s109 + $0x1060] sm:$0xff] %v5661
        %6686 = vst [vmem:[%s109 + $0x1068] sm:$0xff] %v5662
        %6687 = vst [vmem:[%s109 + $0x1070] sm:$0xff] %v5663
        %6688 = vst [vmem:[%s109 + $0x1078] sm:$0xff] %v5664
        %6689 = vst [vmem:[%s109 + $0x1080] sm:$0xff] %v5665
        %6690 = vst [vmem:[%s109 + $0x1088] sm:$0xff] %v5666
        %6691 = vst [vmem:[%s109 + $0x1090] sm:$0xff] %v5667
        %6692 = vst [vmem:[%s109 + $0x1098] sm:$0xff] %v5668
        %6693 = vst [vmem:[%s109 + $0x10a0] sm:$0xff] %v5669
        %6694 = vst [vmem:[%s109 + $0x10a8] sm:$0xff] %v5670
        %6695 = vst [vmem:[%s109 + $0x10b0] sm:$0xff] %v5671
        %6696 = vst [vmem:[%s109 + $0x10b8] sm:$0xff] %v5672
        %6697 = vst [vmem:[%s109 + $0x10c0] sm:$0xff] %v5673
        %6698 = vst [vmem:[%s109 + $0x10c8] sm:$0xff] %v5674
        %6699 = vst [vmem:[%s109 + $0x10d0] sm:$0xff] %v5675
        %6700 = vst [vmem:[%s109 + $0x10d8] sm:$0xff] %v5676
        %6701 = vst [vmem:[%s109 + $0x10e0] sm:$0xff] %v5677
        %6702 = vst [vmem:[%s109 + $0x10e8] sm:$0xff] %v5678
        %6703 = vst [vmem:[%s109 + $0x10f0] sm:$0xff] %v5679
        %6704 = vst [vmem:[%s109 + $0x10f8] sm:$0xff] %v5680
        %6705 = vst [vmem:[%s109 + $0x1100] sm:$0xff] %v5681
        %6706 = vst [vmem:[%s109 + $0x1108] sm:$0xff] %v5682
        %6707 = vst [vmem:[%s109 + $0x1110] sm:$0xff] %v5683
        %6708 = vst [vmem:[%s109 + $0x1118] sm:$0xff] %v5684
        %6709 = vst [vmem:[%s109 + $0x1120] sm:$0xff] %v5685
        %6710 = vst [vmem:[%s109 + $0x1128] sm:$0xff] %v5686
        %6711 = vst [vmem:[%s109 + $0x1130] sm:$0xff] %v5687
        %6712 = vst [vmem:[%s109 + $0x1138] sm:$0xff] %v5688
        %6713 = vst [vmem:[%s109 + $0x1140] sm:$0xff] %v5689
        %6714 = vst [vmem:[%s109 + $0x1148] sm:$0xff] %v5690
        %6715 = vst [vmem:[%s109 + $0x1150] sm:$0xff] %v5691
        %6716 = vst [vmem:[%s109 + $0x1158] sm:$0xff] %v5692
        %6717 = vst [vmem:[%s109 + $0x1160] sm:$0xff] %v5693
        %6718 = vst [vmem:[%s109 + $0x1168] sm:$0xff] %v5694
        %6719 = vst [vmem:[%s109 + $0x1170] sm:$0xff] %v5695
        %6720 = vst [vmem:[%s109 + $0x1178] sm:$0xff] %v5696
        %6721 = vst [vmem:[%s109 + $0x1180] sm:$0xff] %v5697
        %6722 = vst [vmem:[%s109 + $0x1188] sm:$0xff] %v5698
        %6723 = vst [vmem:[%s109 + $0x1190] sm:$0xff] %v5699
        %6724 = vst [vmem:[%s109 + $0x1198] sm:$0xff] %v5700
        %6725 = vst [vmem:[%s109 + $0x11a0] sm:$0xff] %v5701
        %6726 = vst [vmem:[%s109 + $0x11a8] sm:$0xff] %v5702
        %6727 = vst [vmem:[%s109 + $0x11b0] sm:$0xff] %v5703
        %6728 = vst [vmem:[%s109 + $0x11b8] sm:$0xff] %v5704
        %6729 = vst [vmem:[%s109 + $0x11c0] sm:$0xff] %v5705
        %6730 = vst [vmem:[%s109 + $0x11c8] sm:$0xff] %v5706
        %6731 = vst [vmem:[%s109 + $0x11d0] sm:$0xff] %v5707
        %6732 = vst [vmem:[%s109 + $0x11d8] sm:$0xff] %v5708
        %6733 = vst [vmem:[%s109 + $0x11e0] sm:$0xff] %v5709
        %6734 = vst [vmem:[%s109 + $0x11e8] sm:$0xff] %v5710
        %6735 = vst [vmem:[%s109 + $0x11f0] sm:$0xff] %v5711
        %6736 = vst [vmem:[%s109 + $0x11f8] sm:$0xff] %v5712
        %6737 = vst [vmem:[%s109 + $0x1200] sm:$0xff] %v5713
        %6738 = vst [vmem:[%s109 + $0x1208] sm:$0xff] %v5714
        %6739 = vst [vmem:[%s109 + $0x1210] sm:$0xff] %v5715
        %6740 = vst [vmem:[%s109 + $0x1218] sm:$0xff] %v5716
        %6741 = vst [vmem:[%s109 + $0x1220] sm:$0xff] %v5717
        %6742 = vst [vmem:[%s109 + $0x1228] sm:$0xff] %v5718
        %6743 = vst [vmem:[%s109 + $0x1230] sm:$0xff] %v5719
        %6744 = vst [vmem:[%s109 + $0x1238] sm:$0xff] %v5720
        %6745 = vst [vmem:[%s109 + $0x1240] sm:$0xff] %v5721
        %6746 = vst [vmem:[%s109 + $0x1248] sm:$0xff] %v5722
        %6747 = vst [vmem:[%s109 + $0x1250] sm:$0xff] %v5723
        %6748 = vst [vmem:[%s109 + $0x1258] sm:$0xff] %v5724
        %6749 = vst [vmem:[%s109 + $0x1260] sm:$0xff] %v5725
        %6750 = vst [vmem:[%s109 + $0x1268] sm:$0xff] %v5726
        %6751 = vst [vmem:[%s109 + $0x1270] sm:$0xff] %v5727
        %6752 = vst [vmem:[%s109 + $0x1278] sm:$0xff] %v5728
        %6753 = vst [vmem:[%s109 + $0x1280] sm:$0xff] %v5729
        %6754 = vst [vmem:[%s109 + $0x1288] sm:$0xff] %v5730
        %6755 = vst [vmem:[%s109 + $0x1290] sm:$0xff] %v5731
        %6756 = vst [vmem:[%s109 + $0x1298] sm:$0xff] %v5732
        %6757 = vst [vmem:[%s109 + $0x12a0] sm:$0xff] %v5733
        %6758 = vst [vmem:[%s109 + $0x12a8] sm:$0xff] %v5734
        %6759 = vst [vmem:[%s109 + $0x12b0] sm:$0xff] %v5735
        %6760 = vst [vmem:[%s109 + $0x12b8] sm:$0xff] %v5736
        %6761 = vst [vmem:[%s109 + $0x12c0] sm:$0xff] %v5737
        %6762 = vst [vmem:[%s109 + $0x12c8] sm:$0xff] %v5738
        %6763 = vst [vmem:[%s109 + $0x12d0] sm:$0xff] %v5739
        %6764 = vst [vmem:[%s109 + $0x12d8] sm:$0xff] %v5740
        %6765 = vst [vmem:[%s109 + $0x12e0] sm:$0xff] %v5741
        %6766 = vst [vmem:[%s109 + $0x12e8] sm:$0xff] %v5742
        %6767 = vst [vmem:[%s109 + $0x12f0] sm:$0xff] %v5743
        %6768 = vst [vmem:[%s109 + $0x12f8] sm:$0xff] %v5744
        %6769 = vst [vmem:[%s109 + $0x1300] sm:$0xff] %v5745
        %6770 = vst [vmem:[%s109 + $0x1308] sm:$0xff] %v5746
        %6771 = vst [vmem:[%s109 + $0x1310] sm:$0xff] %v5747
        %6772 = vst [vmem:[%s109 + $0x1318] sm:$0xff] %v5748
        %6773 = vst [vmem:[%s109 + $0x1320] sm:$0xff] %v5749
        %6774 = vst [vmem:[%s109 + $0x1328] sm:$0xff] %v5750
        %6775 = vst [vmem:[%s109 + $0x1330] sm:$0xff] %v5751
        %6776 = vst [vmem:[%s109 + $0x1338] sm:$0xff] %v5752
        %6777 = vst [vmem:[%s109 + $0x1340] sm:$0xff] %v5753
        %6778 = vst [vmem:[%s109 + $0x1348] sm:$0xff] %v5754
        %6779 = vst [vmem:[%s109 + $0x1350] sm:$0xff] %v5755
        %6780 = vst [vmem:[%s109 + $0x1358] sm:$0xff] %v5756
        %6781 = vst [vmem:[%s109 + $0x1360] sm:$0xff] %v5757
        %6782 = vst [vmem:[%s109 + $0x1368] sm:$0xff] %v5758
        %6783 = vst [vmem:[%s109 + $0x1370] sm:$0xff] %v5759
        %6784 = vst [vmem:[%s109 + $0x1378] sm:$0xff] %v5760
        %6785 = vst [vmem:[%s109 + $0x1380] sm:$0xff] %v5761
        %6786 = vst [vmem:[%s109 + $0x1388] sm:$0xff] %v5762
        %6787 = vst [vmem:[%s109 + $0x1390] sm:$0xff] %v5763
        %6788 = vst [vmem:[%s109 + $0x1398] sm:$0xff] %v5764
        %6789 = vst [vmem:[%s109 + $0x13a0] sm:$0xff] %v5765
        %6790 = vst [vmem:[%s109 + $0x13a8] sm:$0xff] %v5766
        %6791 = vst [vmem:[%s109 + $0x13b0] sm:$0xff] %v5767
        %6792 = vst [vmem:[%s109 + $0x13b8] sm:$0xff] %v5768
        %6793 = vst [vmem:[%s109 + $0x13c0] sm:$0xff] %v5769
        %6794 = vst [vmem:[%s109 + $0x13c8] sm:$0xff] %v5770
        %6795 = vst [vmem:[%s109 + $0x13d0] sm:$0xff] %v5771
        %6796 = vst [vmem:[%s109 + $0x13d8] sm:$0xff] %v5772
        %6797 = vst [vmem:[%s109 + $0x13e0] sm:$0xff] %v5773
        %6798 = vst [vmem:[%s109 + $0x13e8] sm:$0xff] %v5774
        %6799 = vst [vmem:[%s109 + $0x13f0] sm:$0xff] %v5775
        %6800 = vst [vmem:[%s109 + $0x13f8] sm:$0xff] %v5776
        %6801 = vst [vmem:[%s109 + $0x1400] sm:$0xff] %v5777
        %6802 = vst [vmem:[%s109 + $0x1408] sm:$0xff] %v5778
        %6803 = vst [vmem:[%s109 + $0x1410] sm:$0xff] %v5779
        %6804 = vst [vmem:[%s109 + $0x1418] sm:$0xff] %v5780
        %6805 = vst [vmem:[%s109 + $0x1420] sm:$0xff] %v5781
        %6806 = vst [vmem:[%s109 + $0x1428] sm:$0xff] %v5782
        %6807 = vst [vmem:[%s109 + $0x1430] sm:$0xff] %v5783
        %6808 = vst [vmem:[%s109 + $0x1438] sm:$0xff] %v5784
        %6809 = vst [vmem:[%s109 + $0x1440] sm:$0xff] %v5785
        %6810 = vst [vmem:[%s109 + $0x1448] sm:$0xff] %v5786
        %6811 = vst [vmem:[%s109 + $0x1450] sm:$0xff] %v5787
        %6812 = vst [vmem:[%s109 + $0x1458] sm:$0xff] %v5788
        %6813 = vst [vmem:[%s109 + $0x1460] sm:$0xff] %v5789
        %6814 = vst [vmem:[%s109 + $0x1468] sm:$0xff] %v5790
        %6815 = vst [vmem:[%s109 + $0x1470] sm:$0xff] %v5791
        %6816 = vst [vmem:[%s109 + $0x1478] sm:$0xff] %v5792
        %6817 = vst [vmem:[%s109 + $0x1480] sm:$0xff] %v5793
        %6818 = vst [vmem:[%s109 + $0x1488] sm:$0xff] %v5794
        %6819 = vst [vmem:[%s109 + $0x1490] sm:$0xff] %v5795
        %6820 = vst [vmem:[%s109 + $0x1498] sm:$0xff] %v5796
        %6821 = vst [vmem:[%s109 + $0x14a0] sm:$0xff] %v5797
        %6822 = vst [vmem:[%s109 + $0x14a8] sm:$0xff] %v5798
        %6823 = vst [vmem:[%s109 + $0x14b0] sm:$0xff] %v5799
        %6824 = vst [vmem:[%s109 + $0x14b8] sm:$0xff] %v5800
        %6825 = vst [vmem:[%s109 + $0x14c0] sm:$0xff] %v5801
        %6826 = vst [vmem:[%s109 + $0x14c8] sm:$0xff] %v5802
        %6827 = vst [vmem:[%s109 + $0x14d0] sm:$0xff] %v5803
        %6828 = vst [vmem:[%s109 + $0x14d8] sm:$0xff] %v5804
        %6829 = vst [vmem:[%s109 + $0x14e0] sm:$0xff] %v5805
        %6830 = vst [vmem:[%s109 + $0x14e8] sm:$0xff] %v5806
        %6831 = vst [vmem:[%s109 + $0x14f0] sm:$0xff] %v5807
        %6832 = vst [vmem:[%s109 + $0x14f8] sm:$0xff] %v5808
        %6833 = vst [vmem:[%s109 + $0x1500] sm:$0xff] %v5809
        %6834 = vst [vmem:[%s109 + $0x1508] sm:$0xff] %v5810
        %6835 = vst [vmem:[%s109 + $0x1510] sm:$0xff] %v5811
        %6836 = vst [vmem:[%s109 + $0x1518] sm:$0xff] %v5812
        %6837 = vst [vmem:[%s109 + $0x1520] sm:$0xff] %v5813
        %6838 = vst [vmem:[%s109 + $0x1528] sm:$0xff] %v5814
        %6839 = vst [vmem:[%s109 + $0x1530] sm:$0xff] %v5815
        %6840 = vst [vmem:[%s109 + $0x1538] sm:$0xff] %v5816
        %6841 = vst [vmem:[%s109 + $0x1540] sm:$0xff] %v5817
        %6842 = vst [vmem:[%s109 + $0x1548] sm:$0xff] %v5818
        %6843 = vst [vmem:[%s109 + $0x1550] sm:$0xff] %v5819
        %6844 = vst [vmem:[%s109 + $0x1558] sm:$0xff] %v5820
        %6845 = vst [vmem:[%s109 + $0x1560] sm:$0xff] %v5821
        %6846 = vst [vmem:[%s109 + $0x1568] sm:$0xff] %v5822
        %6847 = vst [vmem:[%s109 + $0x1570] sm:$0xff] %v5823
        %6848 = vst [vmem:[%s109 + $0x1578] sm:$0xff] %v5824
        %6849 = vst [vmem:[%s109 + $0x1580] sm:$0xff] %v5825
        %6850 = vst [vmem:[%s109 + $0x1588] sm:$0xff] %v5826
        %6851 = vst [vmem:[%s109 + $0x1590] sm:$0xff] %v5827
        %6852 = vst [vmem:[%s109 + $0x1598] sm:$0xff] %v5828
        %6853 = vst [vmem:[%s109 + $0x15a0] sm:$0xff] %v5829
        %6854 = vst [vmem:[%s109 + $0x15a8] sm:$0xff] %v5830
        %6855 = vst [vmem:[%s109 + $0x15b0] sm:$0xff] %v5831
        %6856 = vst [vmem:[%s109 + $0x15b8] sm:$0xff] %v5832
        %6857 = vst [vmem:[%s109 + $0x15c0] sm:$0xff] %v5833
        %6858 = vst [vmem:[%s109 + $0x15c8] sm:$0xff] %v5834
        %6859 = vst [vmem:[%s109 + $0x15d0] sm:$0xff] %v5835
        %6860 = vst [vmem:[%s109 + $0x15d8] sm:$0xff] %v5836
        %6861 = vst [vmem:[%s109 + $0x15e0] sm:$0xff] %v5837
        %6862 = vst [vmem:[%s109 + $0x15e8] sm:$0xff] %v5838
        %6863 = vst [vmem:[%s109 + $0x15f0] sm:$0xff] %v5839
        %6864 = vst [vmem:[%s109 + $0x15f8] sm:$0xff] %v5840
        %6865 = vst [vmem:[%s109 + $0x1600] sm:$0xff] %v5841
        %6866 = vst [vmem:[%s109 + $0x1608] sm:$0xff] %v5842
        %6867 = vst [vmem:[%s109 + $0x1610] sm:$0xff] %v5843
        %6868 = vst [vmem:[%s109 + $0x1618] sm:$0xff] %v5844
        %6869 = vst [vmem:[%s109 + $0x1620] sm:$0xff] %v5845
        %6870 = vst [vmem:[%s109 + $0x1628] sm:$0xff] %v5846
        %6871 = vst [vmem:[%s109 + $0x1630] sm:$0xff] %v5847
        %6872 = vst [vmem:[%s109 + $0x1638] sm:$0xff] %v5848
        %6873 = vst [vmem:[%s109 + $0x1640] sm:$0xff] %v5849
        %6874 = vst [vmem:[%s109 + $0x1648] sm:$0xff] %v5850
        %6875 = vst [vmem:[%s109 + $0x1650] sm:$0xff] %v5851
        %6876 = vst [vmem:[%s109 + $0x1658] sm:$0xff] %v5852
        %6877 = vst [vmem:[%s109 + $0x1660] sm:$0xff] %v5853
        %6878 = vst [vmem:[%s109 + $0x1668] sm:$0xff] %v5854
        %6879 = vst [vmem:[%s109 + $0x1670] sm:$0xff] %v5855
        %6880 = vst [vmem:[%s109 + $0x1678] sm:$0xff] %v5856
        %6881 = vst [vmem:[%s109 + $0x1680] sm:$0xff] %v5857
        %6882 = vst [vmem:[%s109 + $0x1688] sm:$0xff] %v5858
        %6883 = vst [vmem:[%s109 + $0x1690] sm:$0xff] %v5859
        %6884 = vst [vmem:[%s109 + $0x1698] sm:$0xff] %v5860
        %6885 = vst [vmem:[%s109 + $0x16a0] sm:$0xff] %v5861
        %6886 = vst [vmem:[%s109 + $0x16a8] sm:$0xff] %v5862
        %6887 = vst [vmem:[%s109 + $0x16b0] sm:$0xff] %v5863
        %6888 = vst [vmem:[%s109 + $0x16b8] sm:$0xff] %v5864
        %6889 = vst [vmem:[%s109 + $0x16c0] sm:$0xff] %v5865
        %6890 = vst [vmem:[%s109 + $0x16c8] sm:$0xff] %v5866
        %6891 = vst [vmem:[%s109 + $0x16d0] sm:$0xff] %v5867
        %6892 = vst [vmem:[%s109 + $0x16d8] sm:$0xff] %v5868
        %6893 = vst [vmem:[%s109 + $0x16e0] sm:$0xff] %v5869
        %6894 = vst [vmem:[%s109 + $0x16e8] sm:$0xff] %v5870
        %6895 = vst [vmem:[%s109 + $0x16f0] sm:$0xff] %v5871
        %6896 = vst [vmem:[%s109 + $0x16f8] sm:$0xff] %v5872
        %6897 = vst [vmem:[%s109 + $0x1700] sm:$0xff] %v5873
        %6898 = vst [vmem:[%s109 + $0x1708] sm:$0xff] %v5874
        %6899 = vst [vmem:[%s109 + $0x1710] sm:$0xff] %v5875
        %6900 = vst [vmem:[%s109 + $0x1718] sm:$0xff] %v5876
        %6901 = vst [vmem:[%s109 + $0x1720] sm:$0xff] %v5877
        %6902 = vst [vmem:[%s109 + $0x1728] sm:$0xff] %v5878
        %6903 = vst [vmem:[%s109 + $0x1730] sm:$0xff] %v5879
        %6904 = vst [vmem:[%s109 + $0x1738] sm:$0xff] %v5880
        %6905 = vst [vmem:[%s109 + $0x1740] sm:$0xff] %v5881
        %6906 = vst [vmem:[%s109 + $0x1748] sm:$0xff] %v5882
        %6907 = vst [vmem:[%s109 + $0x1750] sm:$0xff] %v5883
        %6908 = vst [vmem:[%s109 + $0x1758] sm:$0xff] %v5884
        %6909 = vst [vmem:[%s109 + $0x1760] sm:$0xff] %v5885
        %6910 = vst [vmem:[%s109 + $0x1768] sm:$0xff] %v5886
        %6911 = vst [vmem:[%s109 + $0x1770] sm:$0xff] %v5887
        %6912 = vst [vmem:[%s109 + $0x1778] sm:$0xff] %v5888
        %6913 = vst [vmem:[%s109 + $0x1780] sm:$0xff] %v5889
        %6914 = vst [vmem:[%s109 + $0x1788] sm:$0xff] %v5890
        %6915 = vst [vmem:[%s109 + $0x1790] sm:$0xff] %v5891
        %6916 = vst [vmem:[%s109 + $0x1798] sm:$0xff] %v5892
        %6917 = vst [vmem:[%s109 + $0x17a0] sm:$0xff] %v5893
        %6918 = vst [vmem:[%s109 + $0x17a8] sm:$0xff] %v5894
        %6919 = vst [vmem:[%s109 + $0x17b0] sm:$0xff] %v5895
        %6920 = vst [vmem:[%s109 + $0x17b8] sm:$0xff] %v5896
        %6921 = vst [vmem:[%s109 + $0x17c0] sm:$0xff] %v5897
        %6922 = vst [vmem:[%s109 + $0x17c8] sm:$0xff] %v5898
        %6923 = vst [vmem:[%s109 + $0x17d0] sm:$0xff] %v5899
        %6924 = vst [vmem:[%s109 + $0x17d8] sm:$0xff] %v5900
        %6925 = vst [vmem:[%s109 + $0x17e0] sm:$0xff] %v5901
        %6926 = vst [vmem:[%s109 + $0x17e8] sm:$0xff] %v5902
        %6927 = vst [vmem:[%s109 + $0x17f0] sm:$0xff] %v5903
        %6928 = vst [vmem:[%s109 + $0x17f8] sm:$0xff] %v5904
        %6929 = vst [vmem:[%s109 + $0x1800] sm:$0xff] %v5905
        %6930 = vst [vmem:[%s109 + $0x1808] sm:$0xff] %v5906
        %6931 = vst [vmem:[%s109 + $0x1810] sm:$0xff] %v5907
        %6932 = vst [vmem:[%s109 + $0x1818] sm:$0xff] %v5908
        %6933 = vst [vmem:[%s109 + $0x1820] sm:$0xff] %v5909
        %6934 = vst [vmem:[%s109 + $0x1828] sm:$0xff] %v5910
        %6935 = vst [vmem:[%s109 + $0x1830] sm:$0xff] %v5911
        %6936 = vst [vmem:[%s109 + $0x1838] sm:$0xff] %v5912
        %6937 = vst [vmem:[%s109 + $0x1840] sm:$0xff] %v5913
        %6938 = vst [vmem:[%s109 + $0x1848] sm:$0xff] %v5914
        %6939 = vst [vmem:[%s109 + $0x1850] sm:$0xff] %v5915
        %6940 = vst [vmem:[%s109 + $0x1858] sm:$0xff] %v5916
        %6941 = vst [vmem:[%s109 + $0x1860] sm:$0xff] %v5917
        %6942 = vst [vmem:[%s109 + $0x1868] sm:$0xff] %v5918
        %6943 = vst [vmem:[%s109 + $0x1870] sm:$0xff] %v5919
        %6944 = vst [vmem:[%s109 + $0x1878] sm:$0xff] %v5920
        %6945 = vst [vmem:[%s109 + $0x1880] sm:$0xff] %v5921
        %6946 = vst [vmem:[%s109 + $0x1888] sm:$0xff] %v5922
        %6947 = vst [vmem:[%s109 + $0x1890] sm:$0xff] %v5923
        %6948 = vst [vmem:[%s109 + $0x1898] sm:$0xff] %v5924
        %6949 = vst [vmem:[%s109 + $0x18a0] sm:$0xff] %v5925
        %6950 = vst [vmem:[%s109 + $0x18a8] sm:$0xff] %v5926
        %6951 = vst [vmem:[%s109 + $0x18b0] sm:$0xff] %v5927
        %6952 = vst [vmem:[%s109 + $0x18b8] sm:$0xff] %v5928
        %6953 = vst [vmem:[%s109 + $0x18c0] sm:$0xff] %v5929
        %6954 = vst [vmem:[%s109 + $0x18c8] sm:$0xff] %v5930
        %6955 = vst [vmem:[%s109 + $0x18d0] sm:$0xff] %v5931
        %6956 = vst [vmem:[%s109 + $0x18d8] sm:$0xff] %v5932
        %6957 = vst [vmem:[%s109 + $0x18e0] sm:$0xff] %v5933
        %6958 = vst [vmem:[%s109 + $0x18e8] sm:$0xff] %v5934
        %6959 = vst [vmem:[%s109 + $0x18f0] sm:$0xff] %v5935
        %6960 = vst [vmem:[%s109 + $0x18f8] sm:$0xff] %v5936
        %6961 = vst [vmem:[%s109 + $0x1900] sm:$0xff] %v5937
        %6962 = vst [vmem:[%s109 + $0x1908] sm:$0xff] %v5938
        %6963 = vst [vmem:[%s109 + $0x1910] sm:$0xff] %v5939
        %6964 = vst [vmem:[%s109 + $0x1918] sm:$0xff] %v5940
        %6965 = vst [vmem:[%s109 + $0x1920] sm:$0xff] %v5941
        %6966 = vst [vmem:[%s109 + $0x1928] sm:$0xff] %v5942
        %6967 = vst [vmem:[%s109 + $0x1930] sm:$0xff] %v5943
        %6968 = vst [vmem:[%s109 + $0x1938] sm:$0xff] %v5944
        %6969 = vst [vmem:[%s109 + $0x1940] sm:$0xff] %v5945
        %6970 = vst [vmem:[%s109 + $0x1948] sm:$0xff] %v5946
        %6971 = vst [vmem:[%s109 + $0x1950] sm:$0xff] %v5947
        %6972 = vst [vmem:[%s109 + $0x1958] sm:$0xff] %v5948
        %6973 = vst [vmem:[%s109 + $0x1960] sm:$0xff] %v5949
        %6974 = vst [vmem:[%s109 + $0x1968] sm:$0xff] %v5950
        %6975 = vst [vmem:[%s109 + $0x1970] sm:$0xff] %v5951
        %6976 = vst [vmem:[%s109 + $0x1978] sm:$0xff] %v5952
        %6977 = vst [vmem:[%s109 + $0x1980] sm:$0xff] %v5953
        %6978 = vst [vmem:[%s109 + $0x1988] sm:$0xff] %v5954
        %6979 = vst [vmem:[%s109 + $0x1990] sm:$0xff] %v5955
        %6980 = vst [vmem:[%s109 + $0x1998] sm:$0xff] %v5956
        %6981 = vst [vmem:[%s109 + $0x19a0] sm:$0xff] %v5957
        %6982 = vst [vmem:[%s109 + $0x19a8] sm:$0xff] %v5958
        %6983 = vst [vmem:[%s109 + $0x19b0] sm:$0xff] %v5959
        %6984 = vst [vmem:[%s109 + $0x19b8] sm:$0xff] %v5960
        %6985 = vst [vmem:[%s109 + $0x19c0] sm:$0xff] %v5961
        %6986 = vst [vmem:[%s109 + $0x19c8] sm:$0xff] %v5962
        %6987 = vst [vmem:[%s109 + $0x19d0] sm:$0xff] %v5963
        %6988 = vst [vmem:[%s109 + $0x19d8] sm:$0xff] %v5964
        %6989 = vst [vmem:[%s109 + $0x19e0] sm:$0xff] %v5965
        %6990 = vst [vmem:[%s109 + $0x19e8] sm:$0xff] %v5966
        %6991 = vst [vmem:[%s109 + $0x19f0] sm:$0xff] %v5967
        %6992 = vst [vmem:[%s109 + $0x19f8] sm:$0xff] %v5968
        %6993 = vst [vmem:[%s109 + $0x1a00] sm:$0xff] %v5969
        %6994 = vst [vmem:[%s109 + $0x1a08] sm:$0xff] %v5970
        %6995 = vst [vmem:[%s109 + $0x1a10] sm:$0xff] %v5971
        %6996 = vst [vmem:[%s109 + $0x1a18] sm:$0xff] %v5972
        %6997 = vst [vmem:[%s109 + $0x1a20] sm:$0xff] %v5973
        %6998 = vst [vmem:[%s109 + $0x1a28] sm:$0xff] %v5974
        %6999 = vst [vmem:[%s109 + $0x1a30] sm:$0xff] %v5975
        %7000 = vst [vmem:[%s109 + $0x1a38] sm:$0xff] %v5976
        %7001 = vst [vmem:[%s109 + $0x1a40] sm:$0xff] %v5977
        %7002 = vst [vmem:[%s109 + $0x1a48] sm:$0xff] %v5978
        %7003 = vst [vmem:[%s109 + $0x1a50] sm:$0xff] %v5979
        %7004 = vst [vmem:[%s109 + $0x1a58] sm:$0xff] %v5980
        %7005 = vst [vmem:[%s109 + $0x1a60] sm:$0xff] %v5981
        %7006 = vst [vmem:[%s109 + $0x1a68] sm:$0xff] %v5982
        %7007 = vst [vmem:[%s109 + $0x1a70] sm:$0xff] %v5983
        %7008 = vst [vmem:[%s109 + $0x1a78] sm:$0xff] %v5984
        %7009 = vst [vmem:[%s109 + $0x1a80] sm:$0xff] %v5985
        %7010 = vst [vmem:[%s109 + $0x1a88] sm:$0xff] %v5986
        %7011 = vst [vmem:[%s109 + $0x1a90] sm:$0xff] %v5987
        %7012 = vst [vmem:[%s109 + $0x1a98] sm:$0xff] %v5988
        %7013 = vst [vmem:[%s109 + $0x1aa0] sm:$0xff] %v5989
        %7014 = vst [vmem:[%s109 + $0x1aa8] sm:$0xff] %v5990
        %7015 = vst [vmem:[%s109 + $0x1ab0] sm:$0xff] %v5991
        %7016 = vst [vmem:[%s109 + $0x1ab8] sm:$0xff] %v5992
        %7017 = vst [vmem:[%s109 + $0x1ac0] sm:$0xff] %v5993
        %7018 = vst [vmem:[%s109 + $0x1ac8] sm:$0xff] %v5994
        %7019 = vst [vmem:[%s109 + $0x1ad0] sm:$0xff] %v5995
        %7020 = vst [vmem:[%s109 + $0x1ad8] sm:$0xff] %v5996
        %7021 = vst [vmem:[%s109 + $0x1ae0] sm:$0xff] %v5997
        %7022 = vst [vmem:[%s109 + $0x1ae8] sm:$0xff] %v5998
        %7023 = vst [vmem:[%s109 + $0x1af0] sm:$0xff] %v5999
        %7024 = vst [vmem:[%s109 + $0x1af8] sm:$0xff] %v6000
        %7025 = vst [vmem:[%s109 + $0x1b00] sm:$0xff] %v6001
        %7026 = vst [vmem:[%s109 + $0x1b08] sm:$0xff] %v6002
        %7027 = vst [vmem:[%s109 + $0x1b10] sm:$0xff] %v6003
        %7028 = vst [vmem:[%s109 + $0x1b18] sm:$0xff] %v6004
        %7029 = vst [vmem:[%s109 + $0x1b20] sm:$0xff] %v6005
        %7030 = vst [vmem:[%s109 + $0x1b28] sm:$0xff] %v6006
        %7031 = vst [vmem:[%s109 + $0x1b30] sm:$0xff] %v6007
        %7032 = vst [vmem:[%s109 + $0x1b38] sm:$0xff] %v6008
        %7033 = vst [vmem:[%s109 + $0x1b40] sm:$0xff] %v6009
        %7034 = vst [vmem:[%s109 + $0x1b48] sm:$0xff] %v6010
        %7035 = vst [vmem:[%s109 + $0x1b50] sm:$0xff] %v6011
        %7036 = vst [vmem:[%s109 + $0x1b58] sm:$0xff] %v6012
        %7037 = vst [vmem:[%s109 + $0x1b60] sm:$0xff] %v6013
        %7038 = vst [vmem:[%s109 + $0x1b68] sm:$0xff] %v6014
        %7039 = vst [vmem:[%s109 + $0x1b70] sm:$0xff] %v6015
        %7040 = vst [vmem:[%s109 + $0x1b78] sm:$0xff] %v6016
        %7041 = vst [vmem:[%s109 + $0x1b80] sm:$0xff] %v6017
        %7042 = vst [vmem:[%s109 + $0x1b88] sm:$0xff] %v6018
        %7043 = vst [vmem:[%s109 + $0x1b90] sm:$0xff] %v6019
        %7044 = vst [vmem:[%s109 + $0x1b98] sm:$0xff] %v6020
        %7045 = vst [vmem:[%s109 + $0x1ba0] sm:$0xff] %v6021
        %7046 = vst [vmem:[%s109 + $0x1ba8] sm:$0xff] %v6022
        %7047 = vst [vmem:[%s109 + $0x1bb0] sm:$0xff] %v6023
        %7048 = vst [vmem:[%s109 + $0x1bb8] sm:$0xff] %v6024
        %7049 = vst [vmem:[%s109 + $0x1bc0] sm:$0xff] %v6025
        %7050 = vst [vmem:[%s109 + $0x1bc8] sm:$0xff] %v6026
        %7051 = vst [vmem:[%s109 + $0x1bd0] sm:$0xff] %v6027
        %7052 = vst [vmem:[%s109 + $0x1bd8] sm:$0xff] %v6028
        %7053 = vst [vmem:[%s109 + $0x1be0] sm:$0xff] %v6029
        %7054 = vst [vmem:[%s109 + $0x1be8] sm:$0xff] %v6030
        %7055 = vst [vmem:[%s109 + $0x1bf0] sm:$0xff] %v6031
        %7056 = vst [vmem:[%s109 + $0x1bf8] sm:$0xff] %v6032
        %7057 = vst [vmem:[%s109 + $0x1c00] sm:$0xff] %v6033
        %7058 = vst [vmem:[%s109 + $0x1c08] sm:$0xff] %v6034
        %7059 = vst [vmem:[%s109 + $0x1c10] sm:$0xff] %v6035
        %7060 = vst [vmem:[%s109 + $0x1c18] sm:$0xff] %v6036
        %7061 = vst [vmem:[%s109 + $0x1c20] sm:$0xff] %v6037
        %7062 = vst [vmem:[%s109 + $0x1c28] sm:$0xff] %v6038
        %7063 = vst [vmem:[%s109 + $0x1c30] sm:$0xff] %v6039
        %7064 = vst [vmem:[%s109 + $0x1c38] sm:$0xff] %v6040
        %7065 = vst [vmem:[%s109 + $0x1c40] sm:$0xff] %v6041
        %7066 = vst [vmem:[%s109 + $0x1c48] sm:$0xff] %v6042
        %7067 = vst [vmem:[%s109 + $0x1c50] sm:$0xff] %v6043
        %7068 = vst [vmem:[%s109 + $0x1c58] sm:$0xff] %v6044
        %7069 = vst [vmem:[%s109 + $0x1c60] sm:$0xff] %v6045
        %7070 = vst [vmem:[%s109 + $0x1c68] sm:$0xff] %v6046
        %7071 = vst [vmem:[%s109 + $0x1c70] sm:$0xff] %v6047
        %7072 = vst [vmem:[%s109 + $0x1c78] sm:$0xff] %v6048
        %7073 = vst [vmem:[%s109 + $0x1c80] sm:$0xff] %v6049
        %7074 = vst [vmem:[%s109 + $0x1c88] sm:$0xff] %v6050
        %7075 = vst [vmem:[%s109 + $0x1c90] sm:$0xff] %v6051
        %7076 = vst [vmem:[%s109 + $0x1c98] sm:$0xff] %v6052
        %7077 = vst [vmem:[%s109 + $0x1ca0] sm:$0xff] %v6053
        %7078 = vst [vmem:[%s109 + $0x1ca8] sm:$0xff] %v6054
        %7079 = vst [vmem:[%s109 + $0x1cb0] sm:$0xff] %v6055
        %7080 = vst [vmem:[%s109 + $0x1cb8] sm:$0xff] %v6056
        %7081 = vst [vmem:[%s109 + $0x1cc0] sm:$0xff] %v6057
        %7082 = vst [vmem:[%s109 + $0x1cc8] sm:$0xff] %v6058
        %7083 = vst [vmem:[%s109 + $0x1cd0] sm:$0xff] %v6059
        %7084 = vst [vmem:[%s109 + $0x1cd8] sm:$0xff] %v6060
        %7085 = vst [vmem:[%s109 + $0x1ce0] sm:$0xff] %v6061
        %7086 = vst [vmem:[%s109 + $0x1ce8] sm:$0xff] %v6062
        %7087 = vst [vmem:[%s109 + $0x1cf0] sm:$0xff] %v6063
        %7088 = vst [vmem:[%s109 + $0x1cf8] sm:$0xff] %v6064
        %7089 = vst [vmem:[%s109 + $0x1d00] sm:$0xff] %v6065
        %7090 = vst [vmem:[%s109 + $0x1d08] sm:$0xff] %v6066
        %7091 = vst [vmem:[%s109 + $0x1d10] sm:$0xff] %v6067
        %7092 = vst [vmem:[%s109 + $0x1d18] sm:$0xff] %v6068
        %7093 = vst [vmem:[%s109 + $0x1d20] sm:$0xff] %v6069
        %7094 = vst [vmem:[%s109 + $0x1d28] sm:$0xff] %v6070
        %7095 = vst [vmem:[%s109 + $0x1d30] sm:$0xff] %v6071
        %7096 = vst [vmem:[%s109 + $0x1d38] sm:$0xff] %v6072
        %7097 = vst [vmem:[%s109 + $0x1d40] sm:$0xff] %v6073
        %7098 = vst [vmem:[%s109 + $0x1d48] sm:$0xff] %v6074
        %7099 = vst [vmem:[%s109 + $0x1d50] sm:$0xff] %v6075
        %7100 = vst [vmem:[%s109 + $0x1d58] sm:$0xff] %v6076
        %7101 = vst [vmem:[%s109 + $0x1d60] sm:$0xff] %v6077
        %7102 = vst [vmem:[%s109 + $0x1d68] sm:$0xff] %v6078
        %7103 = vst [vmem:[%s109 + $0x1d70] sm:$0xff] %v6079
        %7104 = vst [vmem:[%s109 + $0x1d78] sm:$0xff] %v6080
        %7105 = vst [vmem:[%s109 + $0x1d80] sm:$0xff] %v6081
        %7106 = vst [vmem:[%s109 + $0x1d88] sm:$0xff] %v6082
        %7107 = vst [vmem:[%s109 + $0x1d90] sm:$0xff] %v6083
        %7108 = vst [vmem:[%s109 + $0x1d98] sm:$0xff] %v6084
        %7109 = vst [vmem:[%s109 + $0x1da0] sm:$0xff] %v6085
        %7110 = vst [vmem:[%s109 + $0x1da8] sm:$0xff] %v6086
        %7111 = vst [vmem:[%s109 + $0x1db0] sm:$0xff] %v6087
        %7112 = vst [vmem:[%s109 + $0x1db8] sm:$0xff] %v6088
        %7113 = vst [vmem:[%s109 + $0x1dc0] sm:$0xff] %v6089
        %7114 = vst [vmem:[%s109 + $0x1dc8] sm:$0xff] %v6090
        %7115 = vst [vmem:[%s109 + $0x1dd0] sm:$0xff] %v6091
        %7116 = vst [vmem:[%s109 + $0x1dd8] sm:$0xff] %v6092
        %7117 = vst [vmem:[%s109 + $0x1de0] sm:$0xff] %v6093
        %7118 = vst [vmem:[%s109 + $0x1de8] sm:$0xff] %v6094
        %7119 = vst [vmem:[%s109 + $0x1df0] sm:$0xff] %v6095
        %7120 = vst [vmem:[%s109 + $0x1df8] sm:$0xff] %v6096
        %7121 = vst [vmem:[%s109 + $0x1e00] sm:$0xff] %v6097
        %7122 = vst [vmem:[%s109 + $0x1e08] sm:$0xff] %v6098
        %7123 = vst [vmem:[%s109 + $0x1e10] sm:$0xff] %v6099
        %7124 = vst [vmem:[%s109 + $0x1e18] sm:$0xff] %v6100
        %7125 = vst [vmem:[%s109 + $0x1e20] sm:$0xff] %v6101
        %7126 = vst [vmem:[%s109 + $0x1e28] sm:$0xff] %v6102
        %7127 = vst [vmem:[%s109 + $0x1e30] sm:$0xff] %v6103
        %7128 = vst [vmem:[%s109 + $0x1e38] sm:$0xff] %v6104
        %7129 = vst [vmem:[%s109 + $0x1e40] sm:$0xff] %v6105
        %7130 = vst [vmem:[%s109 + $0x1e48] sm:$0xff] %v6106
        %7131 = vst [vmem:[%s109 + $0x1e50] sm:$0xff] %v6107
        %7132 = vst [vmem:[%s109 + $0x1e58] sm:$0xff] %v6108
        %7133 = vst [vmem:[%s109 + $0x1e60] sm:$0xff] %v6109
        %7134 = vst [vmem:[%s109 + $0x1e68] sm:$0xff] %v6110
        %7135 = vst [vmem:[%s109 + $0x1e70] sm:$0xff] %v6111
        %7136 = vst [vmem:[%s109 + $0x1e78] sm:$0xff] %v6112
        %7137 = vst [vmem:[%s109 + $0x1e80] sm:$0xff] %v6113
        %7138 = vst [vmem:[%s109 + $0x1e88] sm:$0xff] %v6114
        %7139 = vst [vmem:[%s109 + $0x1e90] sm:$0xff] %v6115
        %7140 = vst [vmem:[%s109 + $0x1e98] sm:$0xff] %v6116
        %7141 = vst [vmem:[%s109 + $0x1ea0] sm:$0xff] %v6117
        %7142 = vst [vmem:[%s109 + $0x1ea8] sm:$0xff] %v6118
        %7143 = vst [vmem:[%s109 + $0x1eb0] sm:$0xff] %v6119
        %7144 = vst [vmem:[%s109 + $0x1eb8] sm:$0xff] %v6120
        %7145 = vst [vmem:[%s109 + $0x1ec0] sm:$0xff] %v6121
        %7146 = vst [vmem:[%s109 + $0x1ec8] sm:$0xff] %v6122
        %7147 = vst [vmem:[%s109 + $0x1ed0] sm:$0xff] %v6123
        %7148 = vst [vmem:[%s109 + $0x1ed8] sm:$0xff] %v6124
        %7149 = vst [vmem:[%s109 + $0x1ee0] sm:$0xff] %v6125
        %7150 = vst [vmem:[%s109 + $0x1ee8] sm:$0xff] %v6126
        %7151 = vst [vmem:[%s109 + $0x1ef0] sm:$0xff] %v6127
        %7152 = vst [vmem:[%s109 + $0x1ef8] sm:$0xff] %v6128
        %7153 = vst [vmem:[%s109 + $0x1f00] sm:$0xff] %v6129
        %7154 = vst [vmem:[%s109 + $0x1f08] sm:$0xff] %v6130
        %7155 = vst [vmem:[%s109 + $0x1f10] sm:$0xff] %v6131
        %7156 = vst [vmem:[%s109 + $0x1f18] sm:$0xff] %v6132
        %7157 = vst [vmem:[%s109 + $0x1f20] sm:$0xff] %v6133
        %7158 = vst [vmem:[%s109 + $0x1f28] sm:$0xff] %v6134
        %7159 = vst [vmem:[%s109 + $0x1f30] sm:$0xff] %v6135
        %7160 = vst [vmem:[%s109 + $0x1f38] sm:$0xff] %v6136
        %7161 = vst [vmem:[%s109 + $0x1f40] sm:$0xff] %v6137
        %7162 = vst [vmem:[%s109 + $0x1f48] sm:$0xff] %v6138
        %7163 = vst [vmem:[%s109 + $0x1f50] sm:$0xff] %v6139
        %7164 = vst [vmem:[%s109 + $0x1f58] sm:$0xff] %v6140
        %7165 = vst [vmem:[%s109 + $0x1f60] sm:$0xff] %v6141
        %7166 = vst [vmem:[%s109 + $0x1f68] sm:$0xff] %v6142
        %7167 = vst [vmem:[%s109 + $0x1f70] sm:$0xff] %v6143
        %7168 = vst [vmem:[%s109 + $0x1f78] sm:$0xff] %v6144
        %7169 = vst [vmem:[%s109 + $0x1f80] sm:$0xff] %v6145
        %7170 = vst [vmem:[%s109 + $0x1f88] sm:$0xff] %v6146
        %7171 = vst [vmem:[%s109 + $0x1f90] sm:$0xff] %v6147
        %7172 = vst [vmem:[%s109 + $0x1f98] sm:$0xff] %v6148
        %7173 = vst [vmem:[%s109 + $0x1fa0] sm:$0xff] %v6149
        %7174 = vst [vmem:[%s109 + $0x1fa8] sm:$0xff] %v6150
        %7175 = vst [vmem:[%s109 + $0x1fb0] sm:$0xff] %v6151
        %7176 = vst [vmem:[%s109 + $0x1fb8] sm:$0xff] %v6152
        %7177 = vst [vmem:[%s109 + $0x1fc0] sm:$0xff] %v6153
        %7178 = vst [vmem:[%s109 + $0x1fc8] sm:$0xff] %v6154
        %7179 = vst [vmem:[%s109 + $0x1fd0] sm:$0xff] %v6155
        %7180 = vst [vmem:[%s109 + $0x1fd8] sm:$0xff] %v6156
        %7181 = vst [vmem:[%s109 + $0x1fe0] sm:$0xff] %v6157
        %7182 = vst [vmem:[%s109 + $0x1fe8] sm:$0xff] %v6158
        %7183 = vst [vmem:[%s109 + $0x1ff0] sm:$0xff] %v6159
        %7184 = vst [vmem:[%s109 + $0x1ff8] sm:$0xff] %v6160
        %s7185 = sand.u32 %s45, 1
        %s7186 = scalar_lea.sflag [#allocation4], %s7185
        %s7187 = sand.u32 %s45, 1
        %s7188 = smul.addr %s7187, 8192
        %s7189 = scalar_lea.vmem [#allocation5], %s7188
        // Predicated region
        $region29: #{tpu_custom_call.1} parent=23 // pred_check
          %p7190 = pneg %p55
        $region30: #{tpu_custom_call.1} parent=23 // pred_check_branch
          %7192 = sbr.rel (%p7190) target = $region32
        $region31: #{tpu_custom_call.1} parent=23 // pred_region
          %s7193 = smul.u32 64, %s16
          %s7195 = ssub.s32 131072, 131072
          %7196 = vsyncadd %s7186, %s7195
          %s7197 = smul.addr %s7193, 16
          %s7198 = smul.addr %s7197, 128
          %s7199 = scalar_lea.hbm %s1, %s7198
          %s7200 = sshll.u32 %s7189, 4
          %s7201 = int_to_ptr.vmem [resolvable:$true] %s7200
          %7206 = dma.vmem_to_hbm [thread:$0]  %s7201, 131072, %s7199, %s7186, 128, 128, 8
        $region32: #{tpu_custom_call.1} parent=23 // pred_fallthru
          _
      $region24: #{tpu_custom_call.1} parent=5 // pred_fallthru
        _
      %p7207 = scmp.le.s32.totalorder 2, %s11
      // Predicated region
      $region33: #{tpu_custom_call.1} parent=5 // pred_check
        %p7208 = pneg %p7207
      $region34: #{tpu_custom_call.1} parent=5 // pred_check_branch
        %7210 = sbr.rel (%p7208) target = $region36
      $region35: #{tpu_custom_call.1} parent=5 // pred_region
        %s7211 = ssub.s32 %s11, 2
        // Predicated region
        $region37: #{tpu_custom_call.1} parent=35 // pred_check
          %p7212 = pneg %p61
        $region38: #{tpu_custom_call.1} parent=35 // pred_check_branch
          %7214 = sbr.rel (%p7212) target = $region40
        $region39: #{tpu_custom_call.1} parent=35 // pred_region
          %s7215 = sand.u32 %s46, 1
          %s7216 = scalar_lea.sflag [#allocation4], %s7215
          %s7217 = sand.u32 %s46, 1
          %s7218 = smul.addr %s7217, 8192
          %s7219 = scalar_lea.vmem [#allocation5], %s7218
          %7220 = dma.done %s7216, 131072
        $region40: #{tpu_custom_call.1} parent=35 // pred_fallthru
          _
      $region36: #{tpu_custom_call.1} parent=5 // pred_fallthru
        _
    $region6: #{tpu_custom_call.1} parent=1 // loop_footer
      %s15 = sadd.s32 1, %s11
    $region7: #{tpu_custom_call.1} parent=1 // loop_footer_branch
      %10 = sbr.rel target = $region3
    $region8: #{tpu_custom_call.1} parent=1 // loop_exit
      _
    %7221 = vsyncpa [#allocation3], 1
    %s7222 = scalar_lea.sflag [#allocation3], 1
    %7223 = vsyncpa %s7222, 1
    %7224 = vsyncpa [#allocation4], 1
    %s7225 = scalar_lea.sflag [#allocation4], 1
    %7226 = vsyncpa %s7225, 1

</llo_original>
